<compile_context>
chip_gen: v5e
topology: v5e:2x2
jax: 0.10.0
libtpu: 0.0.40
codegen_flags: <defaults>
</compile_context>

<pallas_src>
import functools
import math

import jax
import jax.numpy as jnp
import numpy as np
from jax.experimental import pallas as pl
from jax.experimental.pallas import tpu as pltpu


# --------------------------- VMEM budgeting helpers ---------------------------
def _round_up(x, m):
    return ((x + m - 1) // m) * m


def _vmem_capacity_bytes():
    try:
        return int(pltpu.get_tpu_info().vmem_capacity_bytes)
    except Exception:
        return 64 << 20          # conservative fallback (v7x physical VMEM)


def _usable_vmem_bytes():
    """Generation-aware usable scoped-VMEM budget with explicit headroom."""
    cap = _vmem_capacity_bytes()
    headroom = max(12 << 20, cap // 8)     # >=12 MiB; 16 MiB on 128 MiB parts
    return cap - headroom                  # ~112 MiB v5e/v6e, ~52 MiB v7x


def _fused_vmem_bytes(n, f, depth, adj_itemsize, x_itemsize, f_tiles):
    """Conservative fused-path footprint (counts double buffering when gridded
    and the unrolled trace's live f32 temporaries)."""
    tf = f // f_tiles
    bufs = 2 if f_tiles > 1 else 1
    b = bufs * adj_itemsize * n * n                     # resident adjacency
    b += bufs * x_itemsize * n * tf                     # x block
    b += bufs * x_itemsize * n * (depth + 1) * tf       # output block
    b += 4 * 6 * n * tf                                 # live f32 temps (xp/xpp/ax/xl + slack)
    return b + (2 << 20)                                # compiler scratch headroom


def _tiled_vmem_bytes(tile_m, tile_k, f, adj_itemsize, x_itemsize, adj_buffers):
    b = adj_buffers * tile_m * tile_k * adj_itemsize    # pipelined adj tiles
    b += 2 * tile_k * f * x_itemsize                    # streamed x_{L-1} (matmul operand)
    b += 2 * tile_m * f * x_itemsize                    # row-resident x_{L-1} (c2 term)
    b += 2 * tile_m * f * x_itemsize                    # row-resident x_{L-2} (c3 term)
    b += 2 * tile_m * f * x_itemsize                    # output block
    b += tile_m * f * 4                                 # f32 accumulator scratch
    return b + (2 << 20)


def _shrink_tiles(tile_m, tile_k, f, adj_itemsize, x_itemsize, adj_buffers, usable):
    """Pick the largest requested tiles that fit the generation's VMEM budget."""
    while (_tiled_vmem_bytes(tile_m, tile_k, f, adj_itemsize, x_itemsize,
                             adj_buffers) > usable and max(tile_m, tile_k) > 128):
        if tile_k >= tile_m and tile_k > 128:
            tile_k //= 2
        elif tile_m > 128:
            tile_m //= 2
        else:
            break
    return tile_m, tile_k


# ------------------------------ fused kernel ---------------------------------
def _poly_fused_kernel(adj_ref, x_ref, out_ref, *, coeffs):
    """All polynomial orders in one program; adj and every x_L stay in VMEM.

    out_ref is an (N, depth+1, F_tile) block: out_ref[:, L, :] = x_L, i.e. the
    final (N, depth+1, F) layout is produced directly (sublane-strided stores,
    but no post-kernel transpose / extra HBM round trip of the whole output).
    """
    x0 = x_ref[...]
    out_ref[:, 0, :] = x0
    xp = x0.astype(jnp.float32)          # x_{L-1}
    xpp = xp                             # x_{L-2}
    for L, (c1, c2, c3) in enumerate(coeffs, start=1):
        ax = jnp.dot(adj_ref[...], xp.astype(adj_ref.dtype),
                     preferred_element_type=jnp.float32)
        xl = c1 * ax + c2 * xp
        if c3 != 0.0:                    # L == 1 has no x_{L-2} term
            xl = xl + c3 * xpp
        out_ref[:, L, :] = xl.astype(out_ref.dtype)
        xpp, xp = xp, xl


def poly_conv_fused(adj, x, coeffs, *, f_tiles=1, vmem_limit_bytes):
    n, f = x.shape
    depth = len(coeffs)
    kernel = functools.partial(_poly_fused_kernel, coeffs=tuple(coeffs))
    out_shape = jax.ShapeDtypeStruct((n, depth + 1, f), x.dtype)

    if f_tiles <= 1:
        # Whole problem as one un-gridded program (single TensorCore).
        return pl.pallas_call(
            kernel, out_shape=out_shape,
            compiler_params=pltpu.CompilerParams(
                vmem_limit_bytes=int(vmem_limit_bytes)),
        )(adj, x)

    # Feature-axis grid: the recurrence is independent per feature column, so
    # each TensorCore (v7x megacore) runs all orders on its own feature slab.
    # adj's block index is constant along the grid, so it is fetched once per core.
    tf = f // f_tiles
    return pl.pallas_call(
        kernel, out_shape=out_shape,
        grid_spec=pltpu.PrefetchScalarGridSpec(
            num_scalar_prefetch=0,
            grid=(f_tiles,),
            in_specs=[pl.BlockSpec((n, n), lambda j: (0, 0)),
                      pl.BlockSpec((n, tf), lambda j: (0, j))],
            out_specs=pl.BlockSpec((n, depth + 1, tf), lambda j: (0, 0, j)),
        ),
        compiler_params=pltpu.CompilerParams(
            dimension_semantics=("parallel",),
            vmem_limit_bytes=int(vmem_limit_bytes)),
    )(adj, x)


# ------------------------------ tiled kernels ---------------------------------
def _poly_step_kernel(adj_ref, xk_ref, xrow_ref, xpp_ref, out_ref, acc_ref,
                      *, c1, c2, c3):
    """Row tile i of x_L = c1*(adj @ x_{L-1}) + c2*x_{L-1} + c3*x_{L-2}.

    Grid = (row tiles, reduction tiles).  One MXU dot and one accumulate into
    the f32 VMEM scratch per step; the elementwise c2/c3 terms are folded into
    the k == 0 initialisation; the (tile_m, F) result is cast and stored to the
    output block exactly once, at the last reduction step.  x_{L-1} is streamed
    (tile_k, F) for the matmul AND kept row-resident (tile_m, F) for the c2
    term, so tile_m and tile_k are independent (no square-tile constraint).
    """
    k = pl.program_id(1)
    part = c1 * jnp.dot(adj_ref[...], xk_ref[...].astype(adj_ref.dtype),
                        preferred_element_type=jnp.float32)

    @pl.when(k == 0)
    def _init():
        acc_ref[...] = (part + c2 * xrow_ref[...].astype(jnp.float32)
                        + c3 * xpp_ref[...].astype(jnp.float32))

    @pl.when(k != 0)
    def _accumulate():
        acc_ref[...] += part

    @pl.when(k == pl.num_programs(1) - 1)
    def _store():
        out_ref[...] = acc_ref[...].astype(out_ref.dtype)


def _poly_step_kernel_l1(adj_ref, xk_ref, xrow_ref, out_ref, acc_ref, *, c1, c2):
    """L == 1 specialisation: no x_{L-2} operand at all."""
    k = pl.program_id(1)
    part = c1 * jnp.dot(adj_ref[...], xk_ref[...].astype(adj_ref.dtype),
                        preferred_element_type=jnp.float32)

    @pl.when(k == 0)
    def _init():
        acc_ref[...] = part + c2 * xrow_ref[...].astype(jnp.float32)

    @pl.when(k != 0)
    def _accumulate():
        acc_ref[...] += part

    @pl.when(k == pl.num_programs(1) - 1)
    def _store():
        out_ref[...] = acc_ref[...].astype(out_ref.dtype)


def poly_step(adj, x_prev, x_prev2, c1, c2, c3, *,
              tile_m, tile_k, adj_buffers=2, vmem_limit_bytes):
    """One polynomial order, tiled over (row, reduction); for graphs whose
    adjacency does not fit in VMEM."""
    n, f = x_prev.shape
    assert n % tile_m == 0 and n % tile_k == 0, "caller pads N to tile multiples"
    grid = (n // tile_m, n // tile_k)

    if adj_buffers != 2:
        # Deeper pipelining for the dominant adjacency stream; sweep 2 vs 3 when
        # profiling shows the adj DMA exposed at the chosen tile size.
        adj_spec = pl.BlockSpec((tile_m, tile_k), lambda i, k: (i, k),
                                pipeline_mode=pl.Buffered(adj_buffers))
    else:
        adj_spec = pl.BlockSpec((tile_m, tile_k), lambda i, k: (i, k))
    xk_spec = pl.BlockSpec((tile_k, f), lambda i, k: (k, 0))   # streamed matmul operand
    row_spec = pl.BlockSpec((tile_m, f), lambda i, k: (i, 0))  # row-resident c2/c3 operands
    out_spec = pl.BlockSpec((tile_m, f), lambda i, k: (i, 0))

    if x_prev2 is None:                  # L == 1
        kernel = functools.partial(_poly_step_kernel_l1,
                                   c1=float(c1), c2=float(c2))
        in_specs = [adj_spec, xk_spec, row_spec]
        args = (adj, x_prev, x_prev)
    else:
        kernel = functools.partial(_poly_step_kernel,
                                   c1=float(c1), c2=float(c2), c3=float(c3))
        in_specs = [adj_spec, xk_spec, row_spec, row_spec]
        args = (adj, x_prev, x_prev, x_prev2)

    return pl.pallas_call(
        kernel,
        out_shape=jax.ShapeDtypeStruct((n, f), x_prev.dtype),
        grid_spec=pltpu.PrefetchScalarGridSpec(
            num_scalar_prefetch=0,
            grid=grid,
            in_specs=in_specs,
            out_specs=out_spec,
            scratch_shapes=[pltpu.VMEM((tile_m, f), jnp.float32)],
        ),
        compiler_params=pltpu.CompilerParams(
            # Row axis "parallel" (shards across v7x TensorCores; no-op on
            # single-TC v5e/v6e), reduction axis last and "arbitrary".
            dimension_semantics=("parallel", "arbitrary"),
            vmem_limit_bytes=int(vmem_limit_bytes)),
    )(*args)


# --------------------------- Jacobi coefficients ------------------------------
def jacobi_coeffs(L, alphas, a=1.0, b=1.0, l=-1.0, r=1.0):
    """(c1, c2, c3) with x_L = c1*(adj @ x_{L-1}) + c2*x_{L-1} + c3*x_{L-2}.
    Mirrors JacobiConv from the reference repo exactly."""
    if L == 1:
        coef1 = (a - b) / 2 - (a + b + 2) / 2 * (l + r) / (r - l)
        coef1 *= alphas[0]
        coef2 = (a + b + 2) / (r - l)
        coef2 *= alphas[0]
        return coef2, coef1, 0.0
    coef_l = 2 * L * (L + a + b) * (2 * L - 2 + a + b)
    coef_lm1_1 = (2 * L + a + b - 1) * (2 * L + a + b) * (2 * L + a + b - 2)
    coef_lm1_2 = (2 * L + a + b - 1) * (a ** 2 - b ** 2)
    coef_lm2 = 2 * (L - 1 + a) * (L - 1 + b) * (2 * L + a + b)
    tmp1 = alphas[L - 1] * (coef_lm1_1 / coef_l)
    tmp2 = alphas[L - 1] * (coef_lm1_2 / coef_l)
    tmp3 = alphas[L - 1] * alphas[L - 2] * (coef_lm2 / coef_l)
    tmp1_2 = tmp1 * (2 / (r - l))
    tmp2_2 = tmp1 * ((r + l) / (r - l)) + tmp2
    return tmp1_2, -tmp2_2, -tmp3


def _jacobi_coeff_list(depth, alpha):
    """Deterministic init mirroring the module: every alpha parameter equals
    min(1/alpha, 1); alphas = basealpha * tanh(param)."""
    alpha_params = [min(1.0 / alpha, 1.0)] * (depth + 1)
    alphas = [alpha * math.tanh(p) for p in alpha_params]
    return [jacobi_coeffs(L, alphas) for L in range(1, depth + 1)]


# ------------------------- buildAdj ('gcn' branch) ----------------------------
def build_adj_gcn(A_dense, beta=0.0):
    """Dense spectral adjacency: beta*A_sym + (1-beta) * U diag(linspace(-1,1)) U^T."""
    deg = A_dense.sum(-1)
    dinv = jnp.where(deg > 0, deg ** -0.5, 0.0)          # isinf -> 0
    A_sym = (dinv[:, None] * A_dense) * dinv[None, :]
    # TODO(synk): eigendecomposition has no Pallas equivalent; stays in XLA.
    _, U = jnp.linalg.eigh(A_sym)
    n = A_dense.shape[0]
    uniform_e = jnp.linspace(-1.0, 1.0, n).astype(A_dense.dtype)
    U_new = (U * uniform_e[None, :]) @ U.T
    return beta * A_sym + (1.0 - beta) * U_new


# --------------------------- PolyConvFrame forward ----------------------------
def poly_conv_frame_forward(x, adj, depth=3, alpha=1.0, *,
                            force_tiled=False,
                            tile_m=None, tile_k=None,
                            adj_dtype_fused=None,
                            adj_dtype_tiled=jnp.bfloat16,
                            adj_buffers=2):
    """PolyConvFrame.forward with conv_fn = JacobiConv.

    adj_dtype_tiled: HBM/MXU dtype of the adjacency on the tiled path (default
      bf16: that path is HBM-bound on the N^2 adjacency stream repeated depth
      times; products accumulate in f32).  On v7x, jnp.float8_e4m3fn quarters
      the stream.  Pass None to keep the input dtype.
    adj_dtype_fused: same for the fused path (default None = keep input dtype:
      the adjacency is streamed from HBM exactly once there).
    """
    coeffs = _jacobi_coeff_list(depth, alpha)
    n, f = x.shape
    usable = _usable_vmem_bytes()

    # ---- fused fast path: adj + all intermediates resident in VMEM ----
    adj_f = adj if adj_dtype_fused is None else adj.astype(adj_dtype_fused)
    f_tiles = 2 if (f >= 256 and (f // 2) % 128 == 0) else 1
    fused_bytes = _fused_vmem_bytes(n, f, depth, adj_f.dtype.itemsize,
                                    x.dtype.itemsize, f_tiles)
    if not force_tiled and fused_bytes <= usable:
        return poly_conv_fused(adj_f, x, coeffs, f_tiles=f_tiles,
                               vmem_limit_bytes=usable)

    # ---- tiled fallback: adjacency streamed in (tile_m, tile_k) blocks ----
    adj_t = adj if adj_dtype_tiled is None else adj.astype(adj_dtype_tiled)
    tm = tile_m if tile_m is not None else 512
    tk = tile_k if tile_k is not None else 512
    tm = min(tm, _round_up(n, 128))
    tk = min(tk, _round_up(n, 128))
    tm, tk = _shrink_tiles(tm, tk, f, adj_t.dtype.itemsize, x.dtype.itemsize,
                           adj_buffers, usable)
    vmem_limit = min(usable,
                     _tiled_vmem_bytes(tm, tk, f, adj_t.dtype.itemsize,
                                       x.dtype.itemsize, adj_buffers) + (16 << 20))

    # Pad N so the blocks cover adj exactly; padded rows/cols are zero and do
    # not contaminate valid outputs.
    n_pad = _round_up(n, math.lcm(tm, tk))
    if n_pad != n:
        adj_t = jnp.pad(adj_t, ((0, n_pad - n), (0, n_pad - n)))
        x_p = jnp.pad(x, ((0, n_pad - n), (0, 0)))
    else:
        x_p = x

    xs = [x_p]
    for L, (c1, c2, c3) in enumerate(coeffs, start=1):
        x_prev2 = xs[-2] if L >= 2 else None
        xs.append(poly_step(adj_t, xs[-1], x_prev2, c1, c2, c3,
                            tile_m=tm, tile_k=tk, adj_buffers=adj_buffers,
                            vmem_limit_bytes=vmem_limit))
    # TODO(synk): write each order directly into a preallocated (N, depth+1, F)
    # slab via per-L out_specs + input_output_aliases to save this final stack
    # pass (modest relative to the adjacency streams).
    out = jnp.stack(xs, axis=1)          # (n_pad, depth+1, F)
    return out[:n]


# --------------------------------- references ---------------------------------
def reference_forward(x, adj, coeffs):
    xs = [x]
    for L, (c1, c2, c3) in enumerate(coeffs, start=1):
        nx = c1 * (adj @ xs[-1]) + c2 * xs[-1]
        if L >= 2:
            nx = nx + c3 * xs[-2]
        xs.append(nx)
    return jnp.stack(xs, axis=1)


def reference_forward_quant(x, adj_q, coeffs):
    """Mirrors the tiled kernel's MXU path: matmul operands quantised to
    adj_q.dtype (e.g. bf16), products/accumulation in f32, elementwise c2/c3
    terms in f32."""
    adj32 = adj_q.astype(jnp.float32)
    xs = [x]
    for L, (c1, c2, c3) in enumerate(coeffs, start=1):
        xq = xs[-1].astype(adj_q.dtype).astype(jnp.float32)
        nx = c1 * (adj32 @ xq) + c2 * xs[-1]
        if L >= 2:
            nx = nx + c3 * xs[-2]
        xs.append(nx)
    return jnp.stack(xs, axis=1)


# ----------------------------------- main -------------------------------------
if __name__ == "__main__":
    N, F, depth = 256, 256, 3
    key = jax.random.PRNGKey(0)
    k_a, k_x = jax.random.split(key)

    # Synthetic undirected graph: random symmetric 0/1 adjacency, no self-loops
    # (equivalent to passing the corresponding edge_index to buildAdj 'gcn').
    upper = (jax.random.uniform(k_a, (N, N)) < 0.05).astype(jnp.float32)
    A = jnp.triu(upper, 1)
    A = A + A.T

    x = jax.random.normal(k_x, (N, F), dtype=jnp.float32)
    adj = build_adj_gcn(A, beta=0.0)

    coeffs = _jacobi_coeff_list(depth, alpha=1.0)
    ref = jax.block_until_ready(reference_forward(x, adj, coeffs))

    # 1) fused single-call path (default for this size).  F=256 also exercises
    #    the feature-split grid (megacore on v7x, harmless elsewhere).
    out_fused = jax.block_until_ready(poly_conv_frame_forward(x, adj, depth=depth))
    assert out_fused.shape == (N, depth + 1, F)
    np.testing.assert_allclose(np.asarray(out_fused), np.asarray(ref),
                               rtol=2e-3, atol=2e-3)

    # 2) tiled fallback (forced, small tiles so a real (2, 2) row x reduction
    #    grid runs) with the default bf16 adjacency; compare against a
    #    matching bf16-quantised reference.
    out_tiled = jax.block_until_ready(
        poly_conv_frame_forward(x, adj, depth=depth, force_tiled=True,
                                tile_m=128, tile_k=128))
    assert out_tiled.shape == (N, depth + 1, F)
    ref_q = reference_forward_quant(x, adj.astype(jnp.bfloat16), coeffs)
    np.testing.assert_allclose(np.asarray(out_tiled), np.asarray(ref_q),
                               rtol=1e-2, atol=1e-2)

    print("KERNEL_OK")
</pallas_src>

<mosaic_0001>
module attributes {stable_mosaic.version = 11 : i64} {
  func.func @_poly_fused_kernel(%arg0: i32, %arg1: memref<256x256xf32, #tpu.memory_space<vmem>>, %arg2: memref<256x128xf32, #tpu.memory_space<vmem>>, %arg3: memref<256x4x128xf32, #tpu.memory_space<vmem>>) attributes {dimension_semantics = [#tpu.dimension_semantics<parallel>], iteration_bounds = array<i64: 2>, scalar_prefetch = 0 : i64, scratch_operands = 0 : i64, tpu.core_type = #tpu.core_type<tc>, window_params = [{pipeline_mode = #tpu.pipeline_mode<synchronous>, transform_indices = @transform_0, window_bounds = array<i64: 256, 256>}, {transform_indices = @transform_1, window_bounds = array<i64: 256, 128>}, {transform_indices = @transform_2, window_bounds = array<i64: 256, 4, 128>}]} {
    %c0 = arith.constant 0 : index
    %c0_0 = arith.constant 0 : index
    %0 = vector.load %arg2[%c0, %c0_0] : memref<256x128xf32, #tpu.memory_space<vmem>>, vector<256x128xf32>
    %c0_1 = arith.constant 0 : index
    %c0_2 = arith.constant 0 : index
    %c0_3 = arith.constant 0 : index
    %1 = vector.load %arg3[%c0_1, %c0_2, %c0_3] : memref<256x4x128xf32, #tpu.memory_space<vmem>>, vector<256x1x128xf32>
    %2 = vector.shape_cast %1 : vector<256x1x128xf32> to vector<256x128xf32>
    %3 = vector.shape_cast %0 : vector<256x128xf32> to vector<256x1x128xf32>
    tpu.vector_store %arg3[%c0_1, %c0_2, %c0_3], %3 {strides = array<i32>} : memref<256x4x128xf32, #tpu.memory_space<vmem>>, vector<256x1x128xf32>,
    %c0_4 = arith.constant 0 : index
    %c0_5 = arith.constant 0 : index
    %4 = vector.load %arg1[%c0_4, %c0_5] : memref<256x256xf32, #tpu.memory_space<vmem>>, vector<256x256xf32>
    %cst = arith.constant dense<0.000000e+00> : vector<256x128xf32>
    %5 = tpu.matmul %4, %0, %cst {dimension_numbers = #tpu.dot_dimension_numbers<[1], [0], [0], [1], [0, 0, 1, 1], [], []>} : vector<256x256xf32>, vector<256x128xf32>, vector<256x128xf32> -> vector<256x128xf32>
    %cst_6 = arith.constant 1.52318835 : f32
    %6 = vector.broadcast %cst_6 : f32 to vector<256x128xf32>
    %7 = arith.mulf %6, %5 : vector<256x128xf32>
    %cst_7 = arith.constant 0.000000e+00 : f32
    %8 = vector.broadcast %cst_7 : f32 to vector<256x128xf32>
    %9 = arith.mulf %8, %0 : vector<256x128xf32>
    %10 = arith.addf %7, %9 : vector<256x128xf32>
    %c0_8 = arith.constant 0 : index
    %c1 = arith.constant 1 : index
    %c0_9 = arith.constant 0 : index
    %11 = vector.load %arg3[%c0_8, %c1, %c0_9] : memref<256x4x128xf32, #tpu.memory_space<vmem>>, vector<256x1x128xf32>
    %12 = vector.shape_cast %11 : vector<256x1x128xf32> to vector<256x128xf32>
    %13 = vector.shape_cast %10 : vector<256x128xf32> to vector<256x1x128xf32>
    tpu.vector_store %arg3[%c0_8, %c1, %c0_9], %13 {strides = array<i32>} : memref<256x4x128xf32, #tpu.memory_space<vmem>>, vector<256x1x128xf32>,
    %c0_10 = arith.constant 0 : index
    %c0_11 = arith.constant 0 : index
    %14 = vector.load %arg1[%c0_10, %c0_11] : memref<256x256xf32, #tpu.memory_space<vmem>>, vector<256x256xf32>
    %cst_12 = arith.constant dense<0.000000e+00> : vector<256x128xf32>
    %15 = tpu.matmul %14, %10, %cst_12 {dimension_numbers = #tpu.dot_dimension_numbers<[1], [0], [0], [1], [0, 0, 1, 1], [], []>} : vector<256x256xf32>, vector<256x128xf32>, vector<256x128xf32> -> vector<256x128xf32>
    %cst_13 = arith.constant 1.42798901 : f32
    %16 = vector.broadcast %cst_13 : f32 to vector<256x128xf32>
    %17 = arith.mulf %16, %15 : vector<256x128xf32>
    %cst_14 = arith.constant -0.000000e+00 : f32
    %18 = vector.broadcast %cst_14 : f32 to vector<256x128xf32>
    %19 = arith.mulf %18, %10 : vector<256x128xf32>
    %20 = arith.addf %17, %19 : vector<256x128xf32>
    %cst_15 = arith.constant -0.435019255 : f32
    %21 = vector.broadcast %cst_15 : f32 to vector<256x128xf32>
    %22 = arith.mulf %21, %0 : vector<256x128xf32>
    %23 = arith.addf %20, %22 : vector<256x128xf32>
    %c0_16 = arith.constant 0 : index
    %c2 = arith.constant 2 : index
    %c0_17 = arith.constant 0 : index
    %24 = vector.load %arg3[%c0_16, %c2, %c0_17] : memref<256x4x128xf32, #tpu.memory_space<vmem>>, vector<256x1x128xf32>
    %25 = vector.shape_cast %24 : vector<256x1x128xf32> to vector<256x128xf32>
    %26 = vector.shape_cast %23 : vector<256x128xf32> to vector<256x1x128xf32>
    tpu.vector_store %arg3[%c0_16, %c2, %c0_17], %26 {strides = array<i32>} : memref<256x4x128xf32, #tpu.memory_space<vmem>>, vector<256x1x128xf32>,
    %c0_18 = arith.constant 0 : index
    %c0_19 = arith.constant 0 : index
    %27 = vector.load %arg1[%c0_18, %c0_19] : memref<256x256xf32, #tpu.memory_space<vmem>>, vector<256x256xf32>
    %cst_20 = arith.constant dense<0.000000e+00> : vector<256x128xf32>
    %28 = tpu.matmul %27, %23, %cst_20 {dimension_numbers = #tpu.dot_dimension_numbers<[1], [0], [0], [1], [0, 0, 1, 1], [], []>} : vector<256x256xf32>, vector<256x128xf32>, vector<256x128xf32> -> vector<256x128xf32>
    %cst_21 = arith.constant 1.42164242 : f32
    %29 = vector.broadcast %cst_21 : f32 to vector<256x128xf32>
    %30 = arith.mulf %29, %28 : vector<256x128xf32>
    %cst_22 = arith.constant -0.000000e+00 : f32
    %31 = vector.broadcast %cst_22 : f32 to vector<256x128xf32>
    %32 = arith.mulf %31, %23 : vector<256x128xf32>
    %33 = arith.addf %30, %32 : vector<256x128xf32>
    %cst_23 = arith.constant -0.46402052 : f32
    %34 = vector.broadcast %cst_23 : f32 to vector<256x128xf32>
    %35 = arith.mulf %34, %10 : vector<256x128xf32>
    %36 = arith.addf %33, %35 : vector<256x128xf32>
    %c0_24 = arith.constant 0 : index
    %c3 = arith.constant 3 : index
    %c0_25 = arith.constant 0 : index
    %37 = vector.load %arg3[%c0_24, %c3, %c0_25] : memref<256x4x128xf32, #tpu.memory_space<vmem>>, vector<256x1x128xf32>
    %38 = vector.shape_cast %37 : vector<256x1x128xf32> to vector<256x128xf32>
    %39 = vector.shape_cast %36 : vector<256x128xf32> to vector<256x1x128xf32>
    tpu.vector_store %arg3[%c0_24, %c3, %c0_25], %39 {strides = array<i32>} : memref<256x4x128xf32, #tpu.memory_space<vmem>>, vector<256x1x128xf32>,
    return
  }
  func.func @transform_0(%arg0: i32) -> (i32, i32) {
    %c0_i32 = arith.constant 0 : i32
    %c0_i32_0 = arith.constant 0 : i32
    %c0_i32_1 = arith.constant 0 : i32
    return %c0_i32, %c0_i32_0 : i32, i32
  }
  func.func @transform_1(%arg0: i32) -> (i32, i32) {
    %c0_i32 = arith.constant 0 : i32
    %c0_i32_0 = arith.constant 0 : i32
    return %c0_i32, %arg0 : i32, i32
  }
  func.func @transform_2(%arg0: i32) -> (i32, i32, i32) {
    %c0_i32 = arith.constant 0 : i32
    %c0_i32_0 = arith.constant 0 : i32
    %c0_i32_1 = arith.constant 0 : i32
    return %c0_i32, %c0_i32_0, %arg0 : i32, i32, i32
  }
}

</mosaic_0001>

<llo_original>
// kernel: tpu_custom_call.1
$region0: #{tpu_custom_call.1}
  #allocation0 [shape = 'u32[]', space=smem, size = 0x4, offset = 0x4, fixed_abs, tag = 'smem constant byte address 0x4 - core index']
  #allocation1 [shape = 'u32[72,128]{1,0:T(1,128)}', space=vmem, size = 0x9000, scoped, tag = 'internal scratch']
  %s0 = inlined_call_operand.hbm [shape: f32[256,256], index: 0, kind: input, shape index: {}]
  %s1 = inlined_call_operand.hbm [shape: f32[256,256], index: 1, kind: input, shape index: {}]
  %s2 = inlined_call_operand.hbm [shape: f32[256,4,256], index: 2, kind: output, shape index: {}]
  %s3 = sld [smem:[#allocation0]]
  $region49: #{tpu_custom_call.1} parent=0
    _
  %s5 = ssub.s32 1, %s3
  %s6 = scalar_select 0, %s5, %s3
  $region1: #{tpu_custom_call.1} parent=0
    #allocation2 [shape = 'u8[262144]{0}', space=vmem, size = 0x40000, scoped, tag = 'input window, operand 0, single buffered']
    #allocation3 [shape = 's32[2]{0}', space=sflag, size = 0x8, scoped, tag = 'scoped memory for tpu_custom_call.1']
    #allocation4 [shape = 's32[2]{0}', space=sflag, size = 0x8, scoped, tag = 'scoped memory for tpu_custom_call.1']
    #allocation5 [shape = 'u8[262144]{0}', space=vmem, size = 0x40000, scoped, tag = 'input window, operand 1']
    #allocation6 [shape = 's32[2]{0}', space=sflag, size = 0x8, scoped, tag = 'scoped memory for tpu_custom_call.1']
    #allocation7 [shape = 'u8[1048576]{0}', space=vmem, size = 0x100000, scoped, tag = 'output window, operand 0']
    %7 = vsyncpa [#allocation3], 0
    %8 = vsyncpa [#allocation6], 0
    %s9 = scalar_lea.sflag [#allocation6], 1
    %10 = vsyncpa %s9, 0
    %11 = vsyncpa [#allocation4], 0
    %s12 = scalar_lea.sflag [#allocation4], 1
    %13 = vsyncpa %s12, 0
    loop: start=0, step=1, limit=4
    $region2: #{tpu_custom_call.1} parent=1 // loop_pre_header
      _
    $region3: #{tpu_custom_call.1} parent=1 // loop_header
      %s15 = sphi 0, %s19
      %p16 = scmp.ge.s32.totalorder %s15, 4
      %s23 = sphi 0, %s23
      %s25 = sphi 0, %s23
      %s26 = sphi 0, %s25
      %s40 = sphi 0, %s26
      %s46 = sphi 0, %s48
      %s49 = sphi 0, %s46
      %s50 = sphi 0, %s49
      %s66 = sphi 0, %s50
      %s72 = sphi 0, %s74
      %s75 = sphi 0, %s72
      %s76 = sphi 0, %s75
      %s92 = sphi 0, %s76
    $region4: #{tpu_custom_call.1} parent=1 // loop_header_branch
      %18 = sbr.rel (%p16) target = $region8
    $region5: #{tpu_custom_call.1} parent=1 // loop_body
      %s20 = ssub.s32 %s15, 1
      %s21 = ssub.s32 %s15, 2
      %s22 = sadd.s32 %s15, 1
      %s24 = sadd.s32 %s23, 1
      %p27 = scmp.eq.s32.totalorder %s15, 1
      %p28 = scmp.ne.s32.totalorder %s23, %s25
      %p29 = scmp.eq.s32.totalorder %s15, 0
      %p30 = por %p28, %p29
      %p31 = scmp.ne.s32.totalorder %s23, %s25
      %p32 = scmp.eq.s32.totalorder %s20, 1
      %p33 = por %p31, %p32
      %p34 = scmp.ne.s32.totalorder %s25, %s26
      %p35 = scmp.eq.s32.totalorder %s20, 0
      %p36 = por %p34, %p35
      %p37 = scmp.ne.s32.totalorder %s25, %s26
      %p38 = scmp.eq.s32.totalorder %s21, 1
      %p39 = por %p37, %p38
      %p41 = scmp.ne.s32.totalorder %s26, %s40
      %p42 = scmp.eq.s32.totalorder %s21, 0
      %p43 = por %p41, %p42
      %s44 = ssub.s32 %s15, %s22
      %p45 = scmp.eq.s32.totalorder %s44, 0
      %s47 = sadd.s32 %s46, 1
      %s48 = scalar_select %p45, %s46, %s47
      %p51 = pneg %p45
      %p52 = scmp.eq.s32.totalorder %s15, 1
      %p53 = por %p51, %p52
      %p54 = scmp.ne.s32.totalorder %s46, %s49
      %p55 = scmp.eq.s32.totalorder %s15, 0
      %p56 = por %p54, %p55
      %p57 = scmp.ne.s32.totalorder %s46, %s49
      %p58 = scmp.eq.s32.totalorder %s20, 1
      %p59 = por %p57, %p58
      %p60 = scmp.ne.s32.totalorder %s49, %s50
      %p61 = scmp.eq.s32.totalorder %s20, 0
      %p62 = por %p60, %p61
      %p63 = scmp.ne.s32.totalorder %s49, %s50
      %p64 = scmp.eq.s32.totalorder %s21, 1
      %p65 = por %p63, %p64
      %p67 = scmp.ne.s32.totalorder %s50, %s66
      %p68 = scmp.eq.s32.totalorder %s21, 0
      %p69 = por %p67, %p68
      %s70 = ssub.s32 %s15, %s22
      %p71 = scmp.eq.s32.totalorder %s70, 0
      %s73 = sadd.s32 %s72, 1
      %s74 = scalar_select %p71, %s72, %s73
      %p77 = pneg %p71
      %p78 = scmp.eq.s32.totalorder %s15, 1
      %p79 = por %p77, %p78
      %p80 = scmp.ne.s32.totalorder %s72, %s75
      %p81 = scmp.eq.s32.totalorder %s15, 0
      %p82 = por %p80, %p81
      %p83 = scmp.ne.s32.totalorder %s72, %s75
      %p84 = scmp.eq.s32.totalorder %s20, 1
      %p85 = por %p83, %p84
      %p86 = scmp.ne.s32.totalorder %s75, %s76
      %p87 = scmp.eq.s32.totalorder %s20, 0
      %p88 = por %p86, %p87
      %p89 = scmp.ne.s32.totalorder %s75, %s76
      %p90 = scmp.eq.s32.totalorder %s21, 1
      %p91 = por %p89, %p90
      %p93 = scmp.ne.s32.totalorder %s76, %s92
      %p94 = scmp.eq.s32.totalorder %s21, 0
      %p95 = por %p93, %p94
      %p96 = scmp.le.s32.totalorder 1, %s15
      %p97 = scmp.lt.s32.totalorder %s15, 3
      %p98 = pnand %p96, %p97
      %p99 = pneg %p98
      // Predicated region
      $region9: #{tpu_custom_call.1} parent=5 // pred_check
        _
      $region10: #{tpu_custom_call.1} parent=5 // pred_check_branch
        %101 = sbr.rel (%p98) target = $region12
      $region11: #{tpu_custom_call.1} parent=5 // pred_region
        %s102 = ssub.s32 %s15, 1
        // Predicated region
        $region13: #{tpu_custom_call.1} parent=11 // pred_check
          %p103 = pneg %p36
        $region14: #{tpu_custom_call.1} parent=11 // pred_check_branch
          %105 = sbr.rel (%p103) target = $region16
        $region15: #{tpu_custom_call.1} parent=11 // pred_region
          %107 = vsyncadd [#allocation3], 0
          %s108 = sshll.u32 %s0, 4
          %s109 = int_to_ptr.hbm [resolvable:$true] %s108
          %s110 = sshll.u32 [#allocation2], 4
          %s111 = int_to_ptr.vmem [resolvable:$true] %s110
          %116 = dma.hbm_to_vmem [thread:$0]  %s109, 8192, %s111, [#allocation3], 256, 256, 16
        $region16: #{tpu_custom_call.1} parent=11 // pred_fallthru
          _
      $region12: #{tpu_custom_call.1} parent=5 // pred_fallthru
        _
      %p117 = scmp.lt.s32.totalorder %s15, 2
      // Predicated region
      $region17: #{tpu_custom_call.1} parent=5 // pred_check
        %p118 = pneg %p117
      $region18: #{tpu_custom_call.1} parent=5 // pred_check_branch
        %120 = sbr.rel (%p118) target = $region20
      $region19: #{tpu_custom_call.1} parent=5 // pred_region
        // Predicated region
        $region21: #{tpu_custom_call.1} parent=19 // pred_check
          %p121 = pneg %p56
        $region22: #{tpu_custom_call.1} parent=19 // pred_check_branch
          %123 = sbr.rel (%p121) target = $region24
        $region23: #{tpu_custom_call.1} parent=19 // pred_region
          %s124 = sand.u32 %s46, 1
          %s125 = scalar_lea.sflag [#allocation6], %s124
          %s126 = sand.u32 %s46, 1
          %s127 = smul.addr %s126, 256
          %s128 = scalar_lea.vmem [#allocation5], %s127
          %130 = vsyncadd %s125, 0
          %s131 = smul.addr %s15, 8
          %s132 = scalar_lea.hbm %s1, %s131
          %s133 = sshll.u32 %s132, 4
          %s134 = int_to_ptr.hbm [resolvable:$true] %s133
          %s135 = sshll.u32 %s128, 4
          %s136 = int_to_ptr.vmem [resolvable:$true] %s135
          %141 = dma.hbm_to_vmem [thread:$0]  %s134, 4096, %s136, %s125, 256, 128, 8
        $region24: #{tpu_custom_call.1} parent=19 // pred_fallthru
          _
      $region20: #{tpu_custom_call.1} parent=5 // pred_fallthru
        _
      %p142 = scmp.le.s32.totalorder 1, %s15
      %p143 = scmp.lt.s32.totalorder %s15, 3
      %p144 = pnand %p142, %p143
      %p145 = pneg %p144
      // Predicated region
      $region25: #{tpu_custom_call.1} parent=5 // pred_check
        _
      $region26: #{tpu_custom_call.1} parent=5 // pred_check_branch
        %147 = sbr.rel (%p144) target = $region28
      $region27: #{tpu_custom_call.1} parent=5 // pred_region
        %s148 = ssub.s32 %s15, 1
        // Predicated region
        $region29: #{tpu_custom_call.1} parent=27 // pred_check
          %p149 = pneg %p36
        $region30: #{tpu_custom_call.1} parent=27 // pred_check_branch
          %151 = sbr.rel (%p149) target = $region32
        $region31: #{tpu_custom_call.1} parent=27 // pred_region
          %153 = dma.done [#allocation3], 8192
        $region32: #{tpu_custom_call.1} parent=27 // pred_fallthru
          _
        %s154 = sand.u32 %s49, 1
        %s155 = scalar_lea.sflag [#allocation6], %s154
        %s156 = sand.u32 %s49, 1
        %s157 = smul.addr %s156, 256
        %s158 = scalar_lea.vmem [#allocation5], %s157
        // Predicated region
        $region33: #{tpu_custom_call.1} parent=27 // pred_check
          %p159 = pneg %p62
        $region34: #{tpu_custom_call.1} parent=27 // pred_check_branch
          %161 = sbr.rel (%p159) target = $region36
        $region35: #{tpu_custom_call.1} parent=27 // pred_region
          %163 = dma.done %s155, 4096
        $region36: #{tpu_custom_call.1} parent=27 // pred_fallthru
          _
        %p164 = pneg %p36
        %p165 = pneg %p33
        %s166 = sand.u32 %s49, 1
        %s167 = scalar_lea.sflag [#allocation6], %s166
        %s168 = sand.u32 %s49, 1
        %s169 = smul.addr %s168, 256
        %s170 = scalar_lea.vmem [#allocation5], %s169
        %p171 = pneg %p62
        %p172 = pneg %p59
        %p173 = pneg %p88
        %p174 = pneg %p85
        %s175 = sand.u32 %s75, 1
        %s176 = scalar_lea.sflag [#allocation4], %s175
        %s177 = sand.u32 %s75, 1
        %s178 = smul.addr %s177, 1024
        %s179 = scalar_lea.vmem [#allocation7], %s178
        %v180 = vld [vmem:[%s158] sm:$0xff]
        %v181 = vld [vmem:[%s158 + $0x8] sm:$0xff]
        %v182 = vld [vmem:[%s158 + $0x10] sm:$0xff]
        %v183 = vld [vmem:[%s158 + $0x18] sm:$0xff]
        %v184 = vld [vmem:[%s158 + $0x20] sm:$0xff]
        %v185 = vld [vmem:[%s158 + $0x28] sm:$0xff]
        %v186 = vld [vmem:[%s158 + $0x30] sm:$0xff]
        %v187 = vld [vmem:[%s158 + $0x38] sm:$0xff]
        %v188 = vld [vmem:[%s158 + $0x40] sm:$0xff]
        %v189 = vld [vmem:[%s158 + $0x48] sm:$0xff]
        %v190 = vld [vmem:[%s158 + $0x50] sm:$0xff]
        %v191 = vld [vmem:[%s158 + $0x58] sm:$0xff]
        %v192 = vld [vmem:[%s158 + $0x60] sm:$0xff]
        %v193 = vld [vmem:[%s158 + $0x68] sm:$0xff]
        %v194 = vld [vmem:[%s158 + $0x70] sm:$0xff]
        %v195 = vld [vmem:[%s158 + $0x78] sm:$0xff]
        %v196 = vld [vmem:[%s158 + $0x80] sm:$0xff]
        %v197 = vld [vmem:[%s158 + $0x88] sm:$0xff]
        %v198 = vld [vmem:[%s158 + $0x90] sm:$0xff]
        %v199 = vld [vmem:[%s158 + $0x98] sm:$0xff]
        %v200 = vld [vmem:[%s158 + $0xa0] sm:$0xff]
        %v201 = vld [vmem:[%s158 + $0xa8] sm:$0xff]
        %v202 = vld [vmem:[%s158 + $0xb0] sm:$0xff]
        %v203 = vld [vmem:[%s158 + $0xb8] sm:$0xff]
        %v204 = vld [vmem:[%s158 + $0xc0] sm:$0xff]
        %v205 = vld [vmem:[%s158 + $0xc8] sm:$0xff]
        %v206 = vld [vmem:[%s158 + $0xd0] sm:$0xff]
        %v207 = vld [vmem:[%s158 + $0xd8] sm:$0xff]
        %v208 = vld [vmem:[%s158 + $0xe0] sm:$0xff]
        %v209 = vld [vmem:[%s158 + $0xe8] sm:$0xff]
        %v210 = vld [vmem:[%s158 + $0xf0] sm:$0xff]
        %v211 = vld [vmem:[%s158 + $0xf8] sm:$0xff]
        %v244 = vrot.slane %v180, 1
        %v245 = vrot.slane %v180, 2
        %v246 = vrot.slane %v180, 3
        %v247 = vrot.slane %v180, 4
        %v248 = vrot.slane %v180, 5
        %v249 = vrot.slane %v180, 6
        %v250 = vrot.slane %v180, 7
        %v251 = vrot.slane %v181, 1
        %v252 = vrot.slane %v181, 2
        %v253 = vrot.slane %v181, 3
        %v254 = vrot.slane %v181, 4
        %v255 = vrot.slane %v181, 5
        %v256 = vrot.slane %v181, 6
        %v257 = vrot.slane %v181, 7
        %v258 = vrot.slane %v182, 1
        %v259 = vrot.slane %v182, 2
        %v260 = vrot.slane %v182, 3
        %v261 = vrot.slane %v182, 4
        %v262 = vrot.slane %v182, 5
        %v263 = vrot.slane %v182, 6
        %v264 = vrot.slane %v182, 7
        %v265 = vrot.slane %v183, 1
        %v266 = vrot.slane %v183, 2
        %v267 = vrot.slane %v183, 3
        %v268 = vrot.slane %v183, 4
        %v269 = vrot.slane %v183, 5
        %v270 = vrot.slane %v183, 6
        %v271 = vrot.slane %v183, 7
        %v272 = vrot.slane %v184, 1
        %v273 = vrot.slane %v184, 2
        %v274 = vrot.slane %v184, 3
        %v275 = vrot.slane %v184, 4
        %v276 = vrot.slane %v184, 5
        %v277 = vrot.slane %v184, 6
        %v278 = vrot.slane %v184, 7
        %v279 = vrot.slane %v185, 1
        %v280 = vrot.slane %v185, 2
        %v281 = vrot.slane %v185, 3
        %v282 = vrot.slane %v185, 4
        %v283 = vrot.slane %v185, 5
        %v284 = vrot.slane %v185, 6
        %v285 = vrot.slane %v185, 7
        %v286 = vrot.slane %v186, 1
        %v287 = vrot.slane %v186, 2
        %v288 = vrot.slane %v186, 3
        %v289 = vrot.slane %v186, 4
        %v290 = vrot.slane %v186, 5
        %v291 = vrot.slane %v186, 6
        %v292 = vrot.slane %v186, 7
        %v293 = vrot.slane %v187, 1
        %v294 = vrot.slane %v187, 2
        %v295 = vrot.slane %v187, 3
        %v296 = vrot.slane %v187, 4
        %v297 = vrot.slane %v187, 5
        %v298 = vrot.slane %v187, 6
        %v299 = vrot.slane %v187, 7
        %v300 = vrot.slane %v188, 1
        %v301 = vrot.slane %v188, 2
        %v302 = vrot.slane %v188, 3
        %v303 = vrot.slane %v188, 4
        %v304 = vrot.slane %v188, 5
        %v305 = vrot.slane %v188, 6
        %v306 = vrot.slane %v188, 7
        %v307 = vrot.slane %v189, 1
        %v308 = vrot.slane %v189, 2
        %v309 = vrot.slane %v189, 3
        %v310 = vrot.slane %v189, 4
        %v311 = vrot.slane %v189, 5
        %v312 = vrot.slane %v189, 6
        %v313 = vrot.slane %v189, 7
        %v314 = vrot.slane %v190, 1
        %v315 = vrot.slane %v190, 2
        %v316 = vrot.slane %v190, 3
        %v317 = vrot.slane %v190, 4
        %v318 = vrot.slane %v190, 5
        %v319 = vrot.slane %v190, 6
        %v320 = vrot.slane %v190, 7
        %v321 = vrot.slane %v191, 1
        %v322 = vrot.slane %v191, 2
        %v323 = vrot.slane %v191, 3
        %v324 = vrot.slane %v191, 4
        %v325 = vrot.slane %v191, 5
        %v326 = vrot.slane %v191, 6
        %v327 = vrot.slane %v191, 7
        %v328 = vrot.slane %v192, 1
        %v329 = vrot.slane %v192, 2
        %v330 = vrot.slane %v192, 3
        %v331 = vrot.slane %v192, 4
        %v332 = vrot.slane %v192, 5
        %v333 = vrot.slane %v192, 6
        %v334 = vrot.slane %v192, 7
        %v335 = vrot.slane %v193, 1
        %v336 = vrot.slane %v193, 2
        %v337 = vrot.slane %v193, 3
        %v338 = vrot.slane %v193, 4
        %v339 = vrot.slane %v193, 5
        %v340 = vrot.slane %v193, 6
        %v341 = vrot.slane %v193, 7
        %v342 = vrot.slane %v194, 1
        %v343 = vrot.slane %v194, 2
        %v344 = vrot.slane %v194, 3
        %v345 = vrot.slane %v194, 4
        %v346 = vrot.slane %v194, 5
        %v347 = vrot.slane %v194, 6
        %v348 = vrot.slane %v194, 7
        %v349 = vrot.slane %v195, 1
        %v350 = vrot.slane %v195, 2
        %v351 = vrot.slane %v195, 3
        %v352 = vrot.slane %v195, 4
        %v353 = vrot.slane %v195, 5
        %v354 = vrot.slane %v195, 6
        %v355 = vrot.slane %v195, 7
        %v356 = vrot.slane %v196, 1
        %v357 = vrot.slane %v196, 2
        %v358 = vrot.slane %v196, 3
        %v359 = vrot.slane %v196, 4
        %v360 = vrot.slane %v196, 5
        %v361 = vrot.slane %v196, 6
        %v362 = vrot.slane %v196, 7
        %v363 = vrot.slane %v197, 1
        %v364 = vrot.slane %v197, 2
        %v365 = vrot.slane %v197, 3
        %v366 = vrot.slane %v197, 4
        %v367 = vrot.slane %v197, 5
        %v368 = vrot.slane %v197, 6
        %v369 = vrot.slane %v197, 7
        %v370 = vrot.slane %v198, 1
        %v371 = vrot.slane %v198, 2
        %v372 = vrot.slane %v198, 3
        %v373 = vrot.slane %v198, 4
        %v374 = vrot.slane %v198, 5
        %v375 = vrot.slane %v198, 6
        %v376 = vrot.slane %v198, 7
        %v377 = vrot.slane %v199, 1
        %v378 = vrot.slane %v199, 2
        %v379 = vrot.slane %v199, 3
        %v380 = vrot.slane %v199, 4
        %v381 = vrot.slane %v199, 5
        %v382 = vrot.slane %v199, 6
        %v383 = vrot.slane %v199, 7
        %v384 = vrot.slane %v200, 1
        %v385 = vrot.slane %v200, 2
        %v386 = vrot.slane %v200, 3
        %v387 = vrot.slane %v200, 4
        %v388 = vrot.slane %v200, 5
        %v389 = vrot.slane %v200, 6
        %v390 = vrot.slane %v200, 7
        %v391 = vrot.slane %v201, 1
        %v392 = vrot.slane %v201, 2
        %v393 = vrot.slane %v201, 3
        %v394 = vrot.slane %v201, 4
        %v395 = vrot.slane %v201, 5
        %v396 = vrot.slane %v201, 6
        %v397 = vrot.slane %v201, 7
        %v398 = vrot.slane %v202, 1
        %v399 = vrot.slane %v202, 2
        %v400 = vrot.slane %v202, 3
        %v401 = vrot.slane %v202, 4
        %v402 = vrot.slane %v202, 5
        %v403 = vrot.slane %v202, 6
        %v404 = vrot.slane %v202, 7
        %v405 = vrot.slane %v203, 1
        %v406 = vrot.slane %v203, 2
        %v407 = vrot.slane %v203, 3
        %v408 = vrot.slane %v203, 4
        %v409 = vrot.slane %v203, 5
        %v410 = vrot.slane %v203, 6
        %v411 = vrot.slane %v203, 7
        %v412 = vrot.slane %v204, 1
        %v413 = vrot.slane %v204, 2
        %v414 = vrot.slane %v204, 3
        %v415 = vrot.slane %v204, 4
        %v416 = vrot.slane %v204, 5
        %v417 = vrot.slane %v204, 6
        %v418 = vrot.slane %v204, 7
        %v419 = vrot.slane %v205, 1
        %v420 = vrot.slane %v205, 2
        %v421 = vrot.slane %v205, 3
        %v422 = vrot.slane %v205, 4
        %v423 = vrot.slane %v205, 5
        %v424 = vrot.slane %v205, 6
        %v425 = vrot.slane %v205, 7
        %v426 = vrot.slane %v206, 1
        %v427 = vrot.slane %v206, 2
        %v428 = vrot.slane %v206, 3
        %v429 = vrot.slane %v206, 4
        %v430 = vrot.slane %v206, 5
        %v431 = vrot.slane %v206, 6
        %v432 = vrot.slane %v206, 7
        %v433 = vrot.slane %v207, 1
        %v434 = vrot.slane %v207, 2
        %v435 = vrot.slane %v207, 3
        %v436 = vrot.slane %v207, 4
        %v437 = vrot.slane %v207, 5
        %v438 = vrot.slane %v207, 6
        %v439 = vrot.slane %v207, 7
        %v440 = vrot.slane %v208, 1
        %v441 = vrot.slane %v208, 2
        %v442 = vrot.slane %v208, 3
        %v443 = vrot.slane %v208, 4
        %v444 = vrot.slane %v208, 5
        %v445 = vrot.slane %v208, 6
        %v446 = vrot.slane %v208, 7
        %v447 = vrot.slane %v209, 1
        %v448 = vrot.slane %v209, 2
        %v449 = vrot.slane %v209, 3
        %v450 = vrot.slane %v209, 4
        %v451 = vrot.slane %v209, 5
        %v452 = vrot.slane %v209, 6
        %v453 = vrot.slane %v209, 7
        %v454 = vrot.slane %v210, 1
        %v455 = vrot.slane %v210, 2
        %v456 = vrot.slane %v210, 3
        %v457 = vrot.slane %v210, 4
        %v458 = vrot.slane %v210, 5
        %v459 = vrot.slane %v210, 6
        %v460 = vrot.slane %v210, 7
        %v461 = vrot.slane %v211, 1
        %v462 = vrot.slane %v211, 2
        %v463 = vrot.slane %v211, 3
        %v464 = vrot.slane %v211, 4
        %v465 = vrot.slane %v211, 5
        %v466 = vrot.slane %v211, 6
        %v467 = vrot.slane %v211, 7
        %692 = vst [vmem:[%s179] sm:$0x1] %v180
        %693 = vst [vmem:[%s179 + $0x4] sm:$0x1] %v244
        %694 = vst [vmem:[%s179 + $0x8] sm:$0x1] %v245
        %695 = vst [vmem:[%s179 + $0xc] sm:$0x1] %v246
        %696 = vst [vmem:[%s179 + $0x10] sm:$0x1] %v247
        %697 = vst [vmem:[%s179 + $0x14] sm:$0x1] %v248
        %698 = vst [vmem:[%s179 + $0x18] sm:$0x1] %v249
        %699 = vst [vmem:[%s179 + $0x1c] sm:$0x1] %v250
        %700 = vst [vmem:[%s179 + $0x20] sm:$0x1] %v181
        %701 = vst [vmem:[%s179 + $0x24] sm:$0x1] %v251
        %702 = vst [vmem:[%s179 + $0x28] sm:$0x1] %v252
        %703 = vst [vmem:[%s179 + $0x2c] sm:$0x1] %v253
        %704 = vst [vmem:[%s179 + $0x30] sm:$0x1] %v254
        %705 = vst [vmem:[%s179 + $0x34] sm:$0x1] %v255
        %706 = vst [vmem:[%s179 + $0x38] sm:$0x1] %v256
        %707 = vst [vmem:[%s179 + $0x3c] sm:$0x1] %v257
        %708 = vst [vmem:[%s179 + $0x40] sm:$0x1] %v182
        %709 = vst [vmem:[%s179 + $0x44] sm:$0x1] %v258
        %710 = vst [vmem:[%s179 + $0x48] sm:$0x1] %v259
        %711 = vst [vmem:[%s179 + $0x4c] sm:$0x1] %v260
        %712 = vst [vmem:[%s179 + $0x50] sm:$0x1] %v261
        %713 = vst [vmem:[%s179 + $0x54] sm:$0x1] %v262
        %714 = vst [vmem:[%s179 + $0x58] sm:$0x1] %v263
        %715 = vst [vmem:[%s179 + $0x5c] sm:$0x1] %v264
        %716 = vst [vmem:[%s179 + $0x60] sm:$0x1] %v183
        %717 = vst [vmem:[%s179 + $0x64] sm:$0x1] %v265
        %718 = vst [vmem:[%s179 + $0x68] sm:$0x1] %v266
        %719 = vst [vmem:[%s179 + $0x6c] sm:$0x1] %v267
        %720 = vst [vmem:[%s179 + $0x70] sm:$0x1] %v268
        %721 = vst [vmem:[%s179 + $0x74] sm:$0x1] %v269
        %722 = vst [vmem:[%s179 + $0x78] sm:$0x1] %v270
        %723 = vst [vmem:[%s179 + $0x7c] sm:$0x1] %v271
        %724 = vst [vmem:[%s179 + $0x80] sm:$0x1] %v184
        %725 = vst [vmem:[%s179 + $0x84] sm:$0x1] %v272
        %726 = vst [vmem:[%s179 + $0x88] sm:$0x1] %v273
        %727 = vst [vmem:[%s179 + $0x8c] sm:$0x1] %v274
        %728 = vst [vmem:[%s179 + $0x90] sm:$0x1] %v275
        %729 = vst [vmem:[%s179 + $0x94] sm:$0x1] %v276
        %730 = vst [vmem:[%s179 + $0x98] sm:$0x1] %v277
        %731 = vst [vmem:[%s179 + $0x9c] sm:$0x1] %v278
        %732 = vst [vmem:[%s179 + $0xa0] sm:$0x1] %v185
        %733 = vst [vmem:[%s179 + $0xa4] sm:$0x1] %v279
        %734 = vst [vmem:[%s179 + $0xa8] sm:$0x1] %v280
        %735 = vst [vmem:[%s179 + $0xac] sm:$0x1] %v281
        %736 = vst [vmem:[%s179 + $0xb0] sm:$0x1] %v282
        %737 = vst [vmem:[%s179 + $0xb4] sm:$0x1] %v283
        %738 = vst [vmem:[%s179 + $0xb8] sm:$0x1] %v284
        %739 = vst [vmem:[%s179 + $0xbc] sm:$0x1] %v285
        %740 = vst [vmem:[%s179 + $0xc0] sm:$0x1] %v186
        %741 = vst [vmem:[%s179 + $0xc4] sm:$0x1] %v286
        %742 = vst [vmem:[%s179 + $0xc8] sm:$0x1] %v287
        %743 = vst [vmem:[%s179 + $0xcc] sm:$0x1] %v288
        %744 = vst [vmem:[%s179 + $0xd0] sm:$0x1] %v289
        %745 = vst [vmem:[%s179 + $0xd4] sm:$0x1] %v290
        %746 = vst [vmem:[%s179 + $0xd8] sm:$0x1] %v291
        %747 = vst [vmem:[%s179 + $0xdc] sm:$0x1] %v292
        %748 = vst [vmem:[%s179 + $0xe0] sm:$0x1] %v187
        %749 = vst [vmem:[%s179 + $0xe4] sm:$0x1] %v293
        %750 = vst [vmem:[%s179 + $0xe8] sm:$0x1] %v294
        %751 = vst [vmem:[%s179 + $0xec] sm:$0x1] %v295
        %752 = vst [vmem:[%s179 + $0xf0] sm:$0x1] %v296
        %753 = vst [vmem:[%s179 + $0xf4] sm:$0x1] %v297
        %754 = vst [vmem:[%s179 + $0xf8] sm:$0x1] %v298
        %755 = vst [vmem:[%s179 + $0xfc] sm:$0x1] %v299
        %756 = vst [vmem:[%s179 + $0x100] sm:$0x1] %v188
        %757 = vst [vmem:[%s179 + $0x104] sm:$0x1] %v300
        %758 = vst [vmem:[%s179 + $0x108] sm:$0x1] %v301
        %759 = vst [vmem:[%s179 + $0x10c] sm:$0x1] %v302
        %760 = vst [vmem:[%s179 + $0x110] sm:$0x1] %v303
        %761 = vst [vmem:[%s179 + $0x114] sm:$0x1] %v304
        %762 = vst [vmem:[%s179 + $0x118] sm:$0x1] %v305
        %763 = vst [vmem:[%s179 + $0x11c] sm:$0x1] %v306
        %764 = vst [vmem:[%s179 + $0x120] sm:$0x1] %v189
        %765 = vst [vmem:[%s179 + $0x124] sm:$0x1] %v307
        %766 = vst [vmem:[%s179 + $0x128] sm:$0x1] %v308
        %767 = vst [vmem:[%s179 + $0x12c] sm:$0x1] %v309
        %768 = vst [vmem:[%s179 + $0x130] sm:$0x1] %v310
        %769 = vst [vmem:[%s179 + $0x134] sm:$0x1] %v311
        %770 = vst [vmem:[%s179 + $0x138] sm:$0x1] %v312
        %771 = vst [vmem:[%s179 + $0x13c] sm:$0x1] %v313
        %772 = vst [vmem:[%s179 + $0x140] sm:$0x1] %v190
        %773 = vst [vmem:[%s179 + $0x144] sm:$0x1] %v314
        %774 = vst [vmem:[%s179 + $0x148] sm:$0x1] %v315
        %775 = vst [vmem:[%s179 + $0x14c] sm:$0x1] %v316
        %776 = vst [vmem:[%s179 + $0x150] sm:$0x1] %v317
        %777 = vst [vmem:[%s179 + $0x154] sm:$0x1] %v318
        %778 = vst [vmem:[%s179 + $0x158] sm:$0x1] %v319
        %779 = vst [vmem:[%s179 + $0x15c] sm:$0x1] %v320
        %780 = vst [vmem:[%s179 + $0x160] sm:$0x1] %v191
        %781 = vst [vmem:[%s179 + $0x164] sm:$0x1] %v321
        %782 = vst [vmem:[%s179 + $0x168] sm:$0x1] %v322
        %783 = vst [vmem:[%s179 + $0x16c] sm:$0x1] %v323
        %784 = vst [vmem:[%s179 + $0x170] sm:$0x1] %v324
        %785 = vst [vmem:[%s179 + $0x174] sm:$0x1] %v325
        %786 = vst [vmem:[%s179 + $0x178] sm:$0x1] %v326
        %787 = vst [vmem:[%s179 + $0x17c] sm:$0x1] %v327
        %788 = vst [vmem:[%s179 + $0x180] sm:$0x1] %v192
        %789 = vst [vmem:[%s179 + $0x184] sm:$0x1] %v328
        %790 = vst [vmem:[%s179 + $0x188] sm:$0x1] %v329
        %791 = vst [vmem:[%s179 + $0x18c] sm:$0x1] %v330
        %792 = vst [vmem:[%s179 + $0x190] sm:$0x1] %v331
        %793 = vst [vmem:[%s179 + $0x194] sm:$0x1] %v332
        %794 = vst [vmem:[%s179 + $0x198] sm:$0x1] %v333
        %795 = vst [vmem:[%s179 + $0x19c] sm:$0x1] %v334
        %796 = vst [vmem:[%s179 + $0x1a0] sm:$0x1] %v193
        %797 = vst [vmem:[%s179 + $0x1a4] sm:$0x1] %v335
        %798 = vst [vmem:[%s179 + $0x1a8] sm:$0x1] %v336
        %799 = vst [vmem:[%s179 + $0x1ac] sm:$0x1] %v337
        %800 = vst [vmem:[%s179 + $0x1b0] sm:$0x1] %v338
        %801 = vst [vmem:[%s179 + $0x1b4] sm:$0x1] %v339
        %802 = vst [vmem:[%s179 + $0x1b8] sm:$0x1] %v340
        %803 = vst [vmem:[%s179 + $0x1bc] sm:$0x1] %v341
        %804 = vst [vmem:[%s179 + $0x1c0] sm:$0x1] %v194
        %805 = vst [vmem:[%s179 + $0x1c4] sm:$0x1] %v342
        %806 = vst [vmem:[%s179 + $0x1c8] sm:$0x1] %v343
        %807 = vst [vmem:[%s179 + $0x1cc] sm:$0x1] %v344
        %808 = vst [vmem:[%s179 + $0x1d0] sm:$0x1] %v345
        %809 = vst [vmem:[%s179 + $0x1d4] sm:$0x1] %v346
        %810 = vst [vmem:[%s179 + $0x1d8] sm:$0x1] %v347
        %811 = vst [vmem:[%s179 + $0x1dc] sm:$0x1] %v348
        %812 = vst [vmem:[%s179 + $0x1e0] sm:$0x1] %v195
        %813 = vst [vmem:[%s179 + $0x1e4] sm:$0x1] %v349
        %814 = vst [vmem:[%s179 + $0x1e8] sm:$0x1] %v350
        %815 = vst [vmem:[%s179 + $0x1ec] sm:$0x1] %v351
        %816 = vst [vmem:[%s179 + $0x1f0] sm:$0x1] %v352
        %817 = vst [vmem:[%s179 + $0x1f4] sm:$0x1] %v353
        %818 = vst [vmem:[%s179 + $0x1f8] sm:$0x1] %v354
        %819 = vst [vmem:[%s179 + $0x1fc] sm:$0x1] %v355
        %820 = vst [vmem:[%s179 + $0x200] sm:$0x1] %v196
        %821 = vst [vmem:[%s179 + $0x204] sm:$0x1] %v356
        %822 = vst [vmem:[%s179 + $0x208] sm:$0x1] %v357
        %823 = vst [vmem:[%s179 + $0x20c] sm:$0x1] %v358
        %824 = vst [vmem:[%s179 + $0x210] sm:$0x1] %v359
        %825 = vst [vmem:[%s179 + $0x214] sm:$0x1] %v360
        %826 = vst [vmem:[%s179 + $0x218] sm:$0x1] %v361
        %827 = vst [vmem:[%s179 + $0x21c] sm:$0x1] %v362
        %828 = vst [vmem:[%s179 + $0x220] sm:$0x1] %v197
        %829 = vst [vmem:[%s179 + $0x224] sm:$0x1] %v363
        %830 = vst [vmem:[%s179 + $0x228] sm:$0x1] %v364
        %831 = vst [vmem:[%s179 + $0x22c] sm:$0x1] %v365
        %832 = vst [vmem:[%s179 + $0x230] sm:$0x1] %v366
        %833 = vst [vmem:[%s179 + $0x234] sm:$0x1] %v367
        %834 = vst [vmem:[%s179 + $0x238] sm:$0x1] %v368
        %835 = vst [vmem:[%s179 + $0x23c] sm:$0x1] %v369
        %836 = vst [vmem:[%s179 + $0x240] sm:$0x1] %v198
        %837 = vst [vmem:[%s179 + $0x244] sm:$0x1] %v370
        %838 = vst [vmem:[%s179 + $0x248] sm:$0x1] %v371
        %839 = vst [vmem:[%s179 + $0x24c] sm:$0x1] %v372
        %840 = vst [vmem:[%s179 + $0x250] sm:$0x1] %v373
        %841 = vst [vmem:[%s179 + $0x254] sm:$0x1] %v374
        %842 = vst [vmem:[%s179 + $0x258] sm:$0x1] %v375
        %843 = vst [vmem:[%s179 + $0x25c] sm:$0x1] %v376
        %844 = vst [vmem:[%s179 + $0x260] sm:$0x1] %v199
        %845 = vst [vmem:[%s179 + $0x264] sm:$0x1] %v377
        %846 = vst [vmem:[%s179 + $0x268] sm:$0x1] %v378
        %847 = vst [vmem:[%s179 + $0x26c] sm:$0x1] %v379
        %848 = vst [vmem:[%s179 + $0x270] sm:$0x1] %v380
        %849 = vst [vmem:[%s179 + $0x274] sm:$0x1] %v381
        %850 = vst [vmem:[%s179 + $0x278] sm:$0x1] %v382
        %851 = vst [vmem:[%s179 + $0x27c] sm:$0x1] %v383
        %852 = vst [vmem:[%s179 + $0x280] sm:$0x1] %v200
        %853 = vst [vmem:[%s179 + $0x284] sm:$0x1] %v384
        %854 = vst [vmem:[%s179 + $0x288] sm:$0x1] %v385
        %855 = vst [vmem:[%s179 + $0x28c] sm:$0x1] %v386
        %856 = vst [vmem:[%s179 + $0x290] sm:$0x1] %v387
        %857 = vst [vmem:[%s179 + $0x294] sm:$0x1] %v388
        %858 = vst [vmem:[%s179 + $0x298] sm:$0x1] %v389
        %859 = vst [vmem:[%s179 + $0x29c] sm:$0x1] %v390
        %860 = vst [vmem:[%s179 + $0x2a0] sm:$0x1] %v201
        %861 = vst [vmem:[%s179 + $0x2a4] sm:$0x1] %v391
        %862 = vst [vmem:[%s179 + $0x2a8] sm:$0x1] %v392
        %863 = vst [vmem:[%s179 + $0x2ac] sm:$0x1] %v393
        %864 = vst [vmem:[%s179 + $0x2b0] sm:$0x1] %v394
        %865 = vst [vmem:[%s179 + $0x2b4] sm:$0x1] %v395
        %866 = vst [vmem:[%s179 + $0x2b8] sm:$0x1] %v396
        %867 = vst [vmem:[%s179 + $0x2bc] sm:$0x1] %v397
        %868 = vst [vmem:[%s179 + $0x2c0] sm:$0x1] %v202
        %869 = vst [vmem:[%s179 + $0x2c4] sm:$0x1] %v398
        %870 = vst [vmem:[%s179 + $0x2c8] sm:$0x1] %v399
        %871 = vst [vmem:[%s179 + $0x2cc] sm:$0x1] %v400
        %872 = vst [vmem:[%s179 + $0x2d0] sm:$0x1] %v401
        %873 = vst [vmem:[%s179 + $0x2d4] sm:$0x1] %v402
        %874 = vst [vmem:[%s179 + $0x2d8] sm:$0x1] %v403
        %875 = vst [vmem:[%s179 + $0x2dc] sm:$0x1] %v404
        %876 = vst [vmem:[%s179 + $0x2e0] sm:$0x1] %v203
        %877 = vst [vmem:[%s179 + $0x2e4] sm:$0x1] %v405
        %878 = vst [vmem:[%s179 + $0x2e8] sm:$0x1] %v406
        %879 = vst [vmem:[%s179 + $0x2ec] sm:$0x1] %v407
        %880 = vst [vmem:[%s179 + $0x2f0] sm:$0x1] %v408
        %881 = vst [vmem:[%s179 + $0x2f4] sm:$0x1] %v409
        %882 = vst [vmem:[%s179 + $0x2f8] sm:$0x1] %v410
        %883 = vst [vmem:[%s179 + $0x2fc] sm:$0x1] %v411
        %884 = vst [vmem:[%s179 + $0x300] sm:$0x1] %v204
        %885 = vst [vmem:[%s179 + $0x304] sm:$0x1] %v412
        %886 = vst [vmem:[%s179 + $0x308] sm:$0x1] %v413
        %887 = vst [vmem:[%s179 + $0x30c] sm:$0x1] %v414
        %888 = vst [vmem:[%s179 + $0x310] sm:$0x1] %v415
        %889 = vst [vmem:[%s179 + $0x314] sm:$0x1] %v416
        %890 = vst [vmem:[%s179 + $0x318] sm:$0x1] %v417
        %891 = vst [vmem:[%s179 + $0x31c] sm:$0x1] %v418
        %892 = vst [vmem:[%s179 + $0x320] sm:$0x1] %v205
        %893 = vst [vmem:[%s179 + $0x324] sm:$0x1] %v419
        %894 = vst [vmem:[%s179 + $0x328] sm:$0x1] %v420
        %895 = vst [vmem:[%s179 + $0x32c] sm:$0x1] %v421
        %896 = vst [vmem:[%s179 + $0x330] sm:$0x1] %v422
        %897 = vst [vmem:[%s179 + $0x334] sm:$0x1] %v423
        %898 = vst [vmem:[%s179 + $0x338] sm:$0x1] %v424
        %899 = vst [vmem:[%s179 + $0x33c] sm:$0x1] %v425
        %900 = vst [vmem:[%s179 + $0x340] sm:$0x1] %v206
        %901 = vst [vmem:[%s179 + $0x344] sm:$0x1] %v426
        %902 = vst [vmem:[%s179 + $0x348] sm:$0x1] %v427
        %903 = vst [vmem:[%s179 + $0x34c] sm:$0x1] %v428
        %904 = vst [vmem:[%s179 + $0x350] sm:$0x1] %v429
        %905 = vst [vmem:[%s179 + $0x354] sm:$0x1] %v430
        %906 = vst [vmem:[%s179 + $0x358] sm:$0x1] %v431
        %907 = vst [vmem:[%s179 + $0x35c] sm:$0x1] %v432
        %908 = vst [vmem:[%s179 + $0x360] sm:$0x1] %v207
        %909 = vst [vmem:[%s179 + $0x364] sm:$0x1] %v433
        %910 = vst [vmem:[%s179 + $0x368] sm:$0x1] %v434
        %911 = vst [vmem:[%s179 + $0x36c] sm:$0x1] %v435
        %912 = vst [vmem:[%s179 + $0x370] sm:$0x1] %v436
        %913 = vst [vmem:[%s179 + $0x374] sm:$0x1] %v437
        %914 = vst [vmem:[%s179 + $0x378] sm:$0x1] %v438
        %915 = vst [vmem:[%s179 + $0x37c] sm:$0x1] %v439
        %916 = vst [vmem:[%s179 + $0x380] sm:$0x1] %v208
        %917 = vst [vmem:[%s179 + $0x384] sm:$0x1] %v440
        %918 = vst [vmem:[%s179 + $0x388] sm:$0x1] %v441
        %919 = vst [vmem:[%s179 + $0x38c] sm:$0x1] %v442
        %920 = vst [vmem:[%s179 + $0x390] sm:$0x1] %v443
        %921 = vst [vmem:[%s179 + $0x394] sm:$0x1] %v444
        %922 = vst [vmem:[%s179 + $0x398] sm:$0x1] %v445
        %923 = vst [vmem:[%s179 + $0x39c] sm:$0x1] %v446
        %924 = vst [vmem:[%s179 + $0x3a0] sm:$0x1] %v209
        %925 = vst [vmem:[%s179 + $0x3a4] sm:$0x1] %v447
        %926 = vst [vmem:[%s179 + $0x3a8] sm:$0x1] %v448
        %927 = vst [vmem:[%s179 + $0x3ac] sm:$0x1] %v449
        %928 = vst [vmem:[%s179 + $0x3b0] sm:$0x1] %v450
        %929 = vst [vmem:[%s179 + $0x3b4] sm:$0x1] %v451
        %930 = vst [vmem:[%s179 + $0x3b8] sm:$0x1] %v452
        %931 = vst [vmem:[%s179 + $0x3bc] sm:$0x1] %v453
        %932 = vst [vmem:[%s179 + $0x3c0] sm:$0x1] %v210
        %933 = vst [vmem:[%s179 + $0x3c4] sm:$0x1] %v454
        %934 = vst [vmem:[%s179 + $0x3c8] sm:$0x1] %v455
        %935 = vst [vmem:[%s179 + $0x3cc] sm:$0x1] %v456
        %936 = vst [vmem:[%s179 + $0x3d0] sm:$0x1] %v457
        %937 = vst [vmem:[%s179 + $0x3d4] sm:$0x1] %v458
        %938 = vst [vmem:[%s179 + $0x3d8] sm:$0x1] %v459
        %939 = vst [vmem:[%s179 + $0x3dc] sm:$0x1] %v460
        %940 = vst [vmem:[%s179 + $0x3e0] sm:$0x1] %v211
        %941 = vst [vmem:[%s179 + $0x3e4] sm:$0x1] %v461
        %942 = vst [vmem:[%s179 + $0x3e8] sm:$0x1] %v462
        %943 = vst [vmem:[%s179 + $0x3ec] sm:$0x1] %v463
        %944 = vst [vmem:[%s179 + $0x3f0] sm:$0x1] %v464
        %945 = vst [vmem:[%s179 + $0x3f4] sm:$0x1] %v465
        %946 = vst [vmem:[%s179 + $0x3f8] sm:$0x1] %v466
        %947 = vst [vmem:[%s179 + $0x3fc] sm:$0x1] %v467
        %v948 = vld [vmem:[#allocation2] sm:$0xff]
        %v949 = vld [vmem:[#allocation2 + $0x8] sm:$0xff]
        %v950 = vld [vmem:[#allocation2 + $0x10] sm:$0xff]
        %v951 = vld [vmem:[#allocation2 + $0x18] sm:$0xff]
        %v952 = vld [vmem:[#allocation2 + $0x20] sm:$0xff]
        %v953 = vld [vmem:[#allocation2 + $0x28] sm:$0xff]
        %v954 = vld [vmem:[#allocation2 + $0x30] sm:$0xff]
        %v955 = vld [vmem:[#allocation2 + $0x38] sm:$0xff]
        %v956 = vld [vmem:[#allocation2 + $0x40] sm:$0xff]
        %v957 = vld [vmem:[#allocation2 + $0x48] sm:$0xff]
        %v958 = vld [vmem:[#allocation2 + $0x50] sm:$0xff]
        %v959 = vld [vmem:[#allocation2 + $0x58] sm:$0xff]
        %v960 = vld [vmem:[#allocation2 + $0x60] sm:$0xff]
        %v961 = vld [vmem:[#allocation2 + $0x68] sm:$0xff]
        %v962 = vld [vmem:[#allocation2 + $0x70] sm:$0xff]
        %v963 = vld [vmem:[#allocation2 + $0x78] sm:$0xff]
        %v964 = vld [vmem:[#allocation2 + $0x80] sm:$0xff]
        %v965 = vld [vmem:[#allocation2 + $0x88] sm:$0xff]
        %v966 = vld [vmem:[#allocation2 + $0x90] sm:$0xff]
        %v967 = vld [vmem:[#allocation2 + $0x98] sm:$0xff]
        %v968 = vld [vmem:[#allocation2 + $0xa0] sm:$0xff]
        %v969 = vld [vmem:[#allocation2 + $0xa8] sm:$0xff]
        %v970 = vld [vmem:[#allocation2 + $0xb0] sm:$0xff]
        %v971 = vld [vmem:[#allocation2 + $0xb8] sm:$0xff]
        %v972 = vld [vmem:[#allocation2 + $0xc0] sm:$0xff]
        %v973 = vld [vmem:[#allocation2 + $0xc8] sm:$0xff]
        %v974 = vld [vmem:[#allocation2 + $0xd0] sm:$0xff]
        %v975 = vld [vmem:[#allocation2 + $0xd8] sm:$0xff]
        %v976 = vld [vmem:[#allocation2 + $0xe0] sm:$0xff]
        %v977 = vld [vmem:[#allocation2 + $0xe8] sm:$0xff]
        %v978 = vld [vmem:[#allocation2 + $0xf0] sm:$0xff]
        %v979 = vld [vmem:[#allocation2 + $0xf8] sm:$0xff]
        %v980 = vld [vmem:[#allocation2 + $0x100] sm:$0xff]
        %v981 = vld [vmem:[#allocation2 + $0x108] sm:$0xff]
        %v982 = vld [vmem:[#allocation2 + $0x110] sm:$0xff]
        %v983 = vld [vmem:[#allocation2 + $0x118] sm:$0xff]
        %v984 = vld [vmem:[#allocation2 + $0x120] sm:$0xff]
        %v985 = vld [vmem:[#allocation2 + $0x128] sm:$0xff]
        %v986 = vld [vmem:[#allocation2 + $0x130] sm:$0xff]
        %v987 = vld [vmem:[#allocation2 + $0x138] sm:$0xff]
        %v988 = vld [vmem:[#allocation2 + $0x140] sm:$0xff]
        %v989 = vld [vmem:[#allocation2 + $0x148] sm:$0xff]
        %v990 = vld [vmem:[#allocation2 + $0x150] sm:$0xff]
        %v991 = vld [vmem:[#allocation2 + $0x158] sm:$0xff]
        %v992 = vld [vmem:[#allocation2 + $0x160] sm:$0xff]
        %v993 = vld [vmem:[#allocation2 + $0x168] sm:$0xff]
        %v994 = vld [vmem:[#allocation2 + $0x170] sm:$0xff]
        %v995 = vld [vmem:[#allocation2 + $0x178] sm:$0xff]
        %v996 = vld [vmem:[#allocation2 + $0x180] sm:$0xff]
        %v997 = vld [vmem:[#allocation2 + $0x188] sm:$0xff]
        %v998 = vld [vmem:[#allocation2 + $0x190] sm:$0xff]
        %v999 = vld [vmem:[#allocation2 + $0x198] sm:$0xff]
        %v1000 = vld [vmem:[#allocation2 + $0x1a0] sm:$0xff]
        %v1001 = vld [vmem:[#allocation2 + $0x1a8] sm:$0xff]
        %v1002 = vld [vmem:[#allocation2 + $0x1b0] sm:$0xff]
        %v1003 = vld [vmem:[#allocation2 + $0x1b8] sm:$0xff]
        %v1004 = vld [vmem:[#allocation2 + $0x1c0] sm:$0xff]
        %v1005 = vld [vmem:[#allocation2 + $0x1c8] sm:$0xff]
        %v1006 = vld [vmem:[#allocation2 + $0x1d0] sm:$0xff]
        %v1007 = vld [vmem:[#allocation2 + $0x1d8] sm:$0xff]
        %v1008 = vld [vmem:[#allocation2 + $0x1e0] sm:$0xff]
        %v1009 = vld [vmem:[#allocation2 + $0x1e8] sm:$0xff]
        %v1010 = vld [vmem:[#allocation2 + $0x1f0] sm:$0xff]
        %v1011 = vld [vmem:[#allocation2 + $0x1f8] sm:$0xff]
        %1012 = vmatpush.msra.mxu0 %v195
        %1013 = vmatpush.msra.mxu0 %v194
        %1014 = vmatpush.msra.mxu0 %v193
        %1015 = vmatpush.msra.mxu0 %v192
        %1016 = vmatpush.msra.mxu0 %v191
        %1017 = vmatpush.msra.mxu0 %v190
        %1018 = vmatpush.msra.mxu0 %v189
        %1019 = vmatpush.msra.mxu0 %v188
        %1020 = vmatpush.msra.mxu0 %v187
        %1021 = vmatpush.msra.mxu0 %v186
        %1022 = vmatpush.msra.mxu0 %v185
        %1023 = vmatpush.msra.mxu0 %v184
        %1024 = vmatpush.msra.mxu0 %v183
        %1025 = vmatpush.msra.mxu0 %v182
        %1026 = vmatpush.msra.mxu0 %v181
        %1027 = vmatpush.msra.mxu0 %v180
        %1028 = vmatmul.f32.gmra.mxu0 %v948
        %v1029 = vpop.f32.mrf.mxu0
        %v1030 = vadd.f32 0.0, %v1029
        %1031 = vmatmul.f32.gmra.mxu0 %v950
        %v1032 = vpop.f32.mrf.mxu0
        %v1033 = vadd.f32 0.0, %v1032
        %1034 = vmatmul.f32.gmra.mxu0 %v952
        %v1035 = vpop.f32.mrf.mxu0
        %v1036 = vadd.f32 0.0, %v1035
        %1037 = vmatmul.f32.gmra.mxu0 %v954
        %v1038 = vpop.f32.mrf.mxu0
        %v1039 = vadd.f32 0.0, %v1038
        %1040 = vmatmul.f32.gmra.mxu0 %v956
        %v1041 = vpop.f32.mrf.mxu0
        %v1042 = vadd.f32 0.0, %v1041
        %1043 = vmatmul.f32.gmra.mxu0 %v958
        %v1044 = vpop.f32.mrf.mxu0
        %v1045 = vadd.f32 0.0, %v1044
        %1046 = vmatmul.f32.gmra.mxu0 %v960
        %v1047 = vpop.f32.mrf.mxu0
        %v1048 = vadd.f32 0.0, %v1047
        %1049 = vmatmul.f32.gmra.mxu0 %v962
        %v1050 = vpop.f32.mrf.mxu0
        %v1051 = vadd.f32 0.0, %v1050
        %1052 = vmatmul.f32.gmra.mxu0 %v964
        %v1053 = vpop.f32.mrf.mxu0
        %v1054 = vadd.f32 0.0, %v1053
        %1055 = vmatmul.f32.gmra.mxu0 %v966
        %v1056 = vpop.f32.mrf.mxu0
        %v1057 = vadd.f32 0.0, %v1056
        %1058 = vmatmul.f32.gmra.mxu0 %v968
        %v1059 = vpop.f32.mrf.mxu0
        %v1060 = vadd.f32 0.0, %v1059
        %1061 = vmatmul.f32.gmra.mxu0 %v970
        %v1062 = vpop.f32.mrf.mxu0
        %v1063 = vadd.f32 0.0, %v1062
        %1064 = vmatmul.f32.gmra.mxu0 %v972
        %v1065 = vpop.f32.mrf.mxu0
        %v1066 = vadd.f32 0.0, %v1065
        %1067 = vmatmul.f32.gmra.mxu0 %v974
        %v1068 = vpop.f32.mrf.mxu0
        %v1069 = vadd.f32 0.0, %v1068
        %1070 = vmatmul.f32.gmra.mxu0 %v976
        %v1071 = vpop.f32.mrf.mxu0
        %v1072 = vadd.f32 0.0, %v1071
        %1073 = vmatmul.f32.gmra.mxu0 %v978
        %v1074 = vpop.f32.mrf.mxu0
        %v1075 = vadd.f32 0.0, %v1074
        %1076 = vmatmul.f32.gmra.mxu0 %v980
        %v1077 = vpop.f32.mrf.mxu0
        %v1078 = vadd.f32 0.0, %v1077
        %1079 = vmatmul.f32.gmra.mxu0 %v982
        %v1080 = vpop.f32.mrf.mxu0
        %v1081 = vadd.f32 0.0, %v1080
        %1082 = vmatmul.f32.gmra.mxu0 %v984
        %v1083 = vpop.f32.mrf.mxu0
        %v1084 = vadd.f32 0.0, %v1083
        %1085 = vmatmul.f32.gmra.mxu0 %v986
        %v1086 = vpop.f32.mrf.mxu0
        %v1087 = vadd.f32 0.0, %v1086
        %1088 = vmatmul.f32.gmra.mxu0 %v988
        %v1089 = vpop.f32.mrf.mxu0
        %v1090 = vadd.f32 0.0, %v1089
        %1091 = vmatmul.f32.gmra.mxu0 %v990
        %v1092 = vpop.f32.mrf.mxu0
        %v1093 = vadd.f32 0.0, %v1092
        %1094 = vmatmul.f32.gmra.mxu0 %v992
        %v1095 = vpop.f32.mrf.mxu0
        %v1096 = vadd.f32 0.0, %v1095
        %1097 = vmatmul.f32.gmra.mxu0 %v994
        %v1098 = vpop.f32.mrf.mxu0
        %v1099 = vadd.f32 0.0, %v1098
        %1100 = vmatmul.f32.gmra.mxu0 %v996
        %v1101 = vpop.f32.mrf.mxu0
        %v1102 = vadd.f32 0.0, %v1101
        %1103 = vmatmul.f32.gmra.mxu0 %v998
        %v1104 = vpop.f32.mrf.mxu0
        %v1105 = vadd.f32 0.0, %v1104
        %1106 = vmatmul.f32.gmra.mxu0 %v1000
        %v1107 = vpop.f32.mrf.mxu0
        %v1108 = vadd.f32 0.0, %v1107
        %1109 = vmatmul.f32.gmra.mxu0 %v1002
        %v1110 = vpop.f32.mrf.mxu0
        %v1111 = vadd.f32 0.0, %v1110
        %1112 = vmatmul.f32.gmra.mxu0 %v1004
        %v1113 = vpop.f32.mrf.mxu0
        %v1114 = vadd.f32 0.0, %v1113
        %1115 = vmatmul.f32.gmra.mxu0 %v1006
        %v1116 = vpop.f32.mrf.mxu0
        %v1117 = vadd.f32 0.0, %v1116
        %1118 = vmatmul.f32.gmra.mxu0 %v1008
        %v1119 = vpop.f32.mrf.mxu0
        %v1120 = vadd.f32 0.0, %v1119
        %1121 = vmatmul.f32.gmra.mxu0 %v1010
        %v1122 = vpop.f32.mrf.mxu0
        %v1123 = vadd.f32 0.0, %v1122
        %1124 = vdwg.mxu0
        %1125 = vmatpush.msra.mxu0 %v211
        %1126 = vmatpush.msra.mxu0 %v210
        %1127 = vmatpush.msra.mxu0 %v209
        %1128 = vmatpush.msra.mxu0 %v208
        %1129 = vmatpush.msra.mxu0 %v207
        %1130 = vmatpush.msra.mxu0 %v206
        %1131 = vmatpush.msra.mxu0 %v205
        %1132 = vmatpush.msra.mxu0 %v204
        %1133 = vmatpush.msra.mxu0 %v203
        %1134 = vmatpush.msra.mxu0 %v202
        %1135 = vmatpush.msra.mxu0 %v201
        %1136 = vmatpush.msra.mxu0 %v200
        %1137 = vmatpush.msra.mxu0 %v199
        %1138 = vmatpush.msra.mxu0 %v198
        %1139 = vmatpush.msra.mxu0 %v197
        %1140 = vmatpush.msra.mxu0 %v196
        %1141 = vmatmul.f32.gmra.mxu0 %v949
        %v1142 = vpop.f32.mrf.mxu0
        %v1143 = vadd.f32 %v1030, %v1142
        %1144 = vmatmul.f32.gmra.mxu0 %v951
        %v1145 = vpop.f32.mrf.mxu0
        %v1146 = vadd.f32 %v1033, %v1145
        %1147 = vmatmul.f32.gmra.mxu0 %v953
        %v1148 = vpop.f32.mrf.mxu0
        %v1149 = vadd.f32 %v1036, %v1148
        %1150 = vmatmul.f32.gmra.mxu0 %v955
        %v1151 = vpop.f32.mrf.mxu0
        %v1152 = vadd.f32 %v1039, %v1151
        %1153 = vmatmul.f32.gmra.mxu0 %v957
        %v1154 = vpop.f32.mrf.mxu0
        %v1155 = vadd.f32 %v1042, %v1154
        %1156 = vmatmul.f32.gmra.mxu0 %v959
        %v1157 = vpop.f32.mrf.mxu0
        %v1158 = vadd.f32 %v1045, %v1157
        %1159 = vmatmul.f32.gmra.mxu0 %v961
        %v1160 = vpop.f32.mrf.mxu0
        %v1161 = vadd.f32 %v1048, %v1160
        %1162 = vmatmul.f32.gmra.mxu0 %v963
        %v1163 = vpop.f32.mrf.mxu0
        %v1164 = vadd.f32 %v1051, %v1163
        %1165 = vmatmul.f32.gmra.mxu0 %v965
        %v1166 = vpop.f32.mrf.mxu0
        %v1167 = vadd.f32 %v1054, %v1166
        %1168 = vmatmul.f32.gmra.mxu0 %v967
        %v1169 = vpop.f32.mrf.mxu0
        %v1170 = vadd.f32 %v1057, %v1169
        %1171 = vmatmul.f32.gmra.mxu0 %v969
        %v1172 = vpop.f32.mrf.mxu0
        %v1173 = vadd.f32 %v1060, %v1172
        %1174 = vmatmul.f32.gmra.mxu0 %v971
        %v1175 = vpop.f32.mrf.mxu0
        %v1176 = vadd.f32 %v1063, %v1175
        %1177 = vmatmul.f32.gmra.mxu0 %v973
        %v1178 = vpop.f32.mrf.mxu0
        %v1179 = vadd.f32 %v1066, %v1178
        %1180 = vmatmul.f32.gmra.mxu0 %v975
        %v1181 = vpop.f32.mrf.mxu0
        %v1182 = vadd.f32 %v1069, %v1181
        %1183 = vmatmul.f32.gmra.mxu0 %v977
        %v1184 = vpop.f32.mrf.mxu0
        %v1185 = vadd.f32 %v1072, %v1184
        %1186 = vmatmul.f32.gmra.mxu0 %v979
        %v1187 = vpop.f32.mrf.mxu0
        %v1188 = vadd.f32 %v1075, %v1187
        %1189 = vmatmul.f32.gmra.mxu0 %v981
        %v1190 = vpop.f32.mrf.mxu0
        %v1191 = vadd.f32 %v1078, %v1190
        %1192 = vmatmul.f32.gmra.mxu0 %v983
        %v1193 = vpop.f32.mrf.mxu0
        %v1194 = vadd.f32 %v1081, %v1193
        %1195 = vmatmul.f32.gmra.mxu0 %v985
        %v1196 = vpop.f32.mrf.mxu0
        %v1197 = vadd.f32 %v1084, %v1196
        %1198 = vmatmul.f32.gmra.mxu0 %v987
        %v1199 = vpop.f32.mrf.mxu0
        %v1200 = vadd.f32 %v1087, %v1199
        %1201 = vmatmul.f32.gmra.mxu0 %v989
        %v1202 = vpop.f32.mrf.mxu0
        %v1203 = vadd.f32 %v1090, %v1202
        %1204 = vmatmul.f32.gmra.mxu0 %v991
        %v1205 = vpop.f32.mrf.mxu0
        %v1206 = vadd.f32 %v1093, %v1205
        %1207 = vmatmul.f32.gmra.mxu0 %v993
        %v1208 = vpop.f32.mrf.mxu0
        %v1209 = vadd.f32 %v1096, %v1208
        %1210 = vmatmul.f32.gmra.mxu0 %v995
        %v1211 = vpop.f32.mrf.mxu0
        %v1212 = vadd.f32 %v1099, %v1211
        %1213 = vmatmul.f32.gmra.mxu0 %v997
        %v1214 = vpop.f32.mrf.mxu0
        %v1215 = vadd.f32 %v1102, %v1214
        %1216 = vmatmul.f32.gmra.mxu0 %v999
        %v1217 = vpop.f32.mrf.mxu0
        %v1218 = vadd.f32 %v1105, %v1217
        %1219 = vmatmul.f32.gmra.mxu0 %v1001
        %v1220 = vpop.f32.mrf.mxu0
        %v1221 = vadd.f32 %v1108, %v1220
        %1222 = vmatmul.f32.gmra.mxu0 %v1003
        %v1223 = vpop.f32.mrf.mxu0
        %v1224 = vadd.f32 %v1111, %v1223
        %1225 = vmatmul.f32.gmra.mxu0 %v1005
        %v1226 = vpop.f32.mrf.mxu0
        %v1227 = vadd.f32 %v1114, %v1226
        %1228 = vmatmul.f32.gmra.mxu0 %v1007
        %v1229 = vpop.f32.mrf.mxu0
        %v1230 = vadd.f32 %v1117, %v1229
        %1231 = vmatmul.f32.gmra.mxu0 %v1009
        %v1232 = vpop.f32.mrf.mxu0
        %v1233 = vadd.f32 %v1120, %v1232
        %1234 = vmatmul.f32.gmra.mxu0 %v1011
        %v1235 = vpop.f32.mrf.mxu0
        %v1236 = vadd.f32 %v1123, %v1235
        %1237 = vdwg.mxu0
        %v1238 = vmul.f32 %v1143, 1.5231884
        %v1239 = vmul.f32 %v1146, 1.5231884
        %v1240 = vmul.f32 %v1149, 1.5231884
        %v1241 = vmul.f32 %v1152, 1.5231884
        %v1242 = vmul.f32 %v1155, 1.5231884
        %v1243 = vmul.f32 %v1158, 1.5231884
        %v1244 = vmul.f32 %v1161, 1.5231884
        %v1245 = vmul.f32 %v1164, 1.5231884
        %v1246 = vmul.f32 %v1167, 1.5231884
        %v1247 = vmul.f32 %v1170, 1.5231884
        %v1248 = vmul.f32 %v1173, 1.5231884
        %v1249 = vmul.f32 %v1176, 1.5231884
        %v1250 = vmul.f32 %v1179, 1.5231884
        %v1251 = vmul.f32 %v1182, 1.5231884
        %v1252 = vmul.f32 %v1185, 1.5231884
        %v1253 = vmul.f32 %v1188, 1.5231884
        %v1254 = vmul.f32 %v1191, 1.5231884
        %v1255 = vmul.f32 %v1194, 1.5231884
        %v1256 = vmul.f32 %v1197, 1.5231884
        %v1257 = vmul.f32 %v1200, 1.5231884
        %v1258 = vmul.f32 %v1203, 1.5231884
        %v1259 = vmul.f32 %v1206, 1.5231884
        %v1260 = vmul.f32 %v1209, 1.5231884
        %v1261 = vmul.f32 %v1212, 1.5231884
        %v1262 = vmul.f32 %v1215, 1.5231884
        %v1263 = vmul.f32 %v1218, 1.5231884
        %v1264 = vmul.f32 %v1221, 1.5231884
        %v1265 = vmul.f32 %v1224, 1.5231884
        %v1266 = vmul.f32 %v1227, 1.5231884
        %v1267 = vmul.f32 %v1230, 1.5231884
        %v1268 = vmul.f32 %v1233, 1.5231884
        %v1269 = vmul.f32 %v1236, 1.5231884
        %v1270 = vmul.f32 %v180, 0.0
        %v1271 = vmul.f32 %v181, 0.0
        %v1272 = vmul.f32 %v182, 0.0
        %v1273 = vmul.f32 %v183, 0.0
        %v1274 = vmul.f32 %v184, 0.0
        %v1275 = vmul.f32 %v185, 0.0
        %v1276 = vmul.f32 %v186, 0.0
        %v1277 = vmul.f32 %v187, 0.0
        %v1278 = vmul.f32 %v188, 0.0
        %v1279 = vmul.f32 %v189, 0.0
        %v1280 = vmul.f32 %v190, 0.0
        %v1281 = vmul.f32 %v191, 0.0
        %v1282 = vmul.f32 %v192, 0.0
        %v1283 = vmul.f32 %v193, 0.0
        %v1284 = vmul.f32 %v194, 0.0
        %v1285 = vmul.f32 %v195, 0.0
        %v1286 = vmul.f32 %v196, 0.0
        %v1287 = vmul.f32 %v197, 0.0
        %v1288 = vmul.f32 %v198, 0.0
        %v1289 = vmul.f32 %v199, 0.0
        %v1290 = vmul.f32 %v200, 0.0
        %v1291 = vmul.f32 %v201, 0.0
        %v1292 = vmul.f32 %v202, 0.0
        %v1293 = vmul.f32 %v203, 0.0
        %v1294 = vmul.f32 %v204, 0.0
        %v1295 = vmul.f32 %v205, 0.0
        %v1296 = vmul.f32 %v206, 0.0
        %v1297 = vmul.f32 %v207, 0.0
        %v1298 = vmul.f32 %v208, 0.0
        %v1299 = vmul.f32 %v209, 0.0
        %v1300 = vmul.f32 %v210, 0.0
        %v1301 = vmul.f32 %v211, 0.0
        %v1302 = vadd.f32 %v1238, %v1270
        %v1303 = vadd.f32 %v1239, %v1271
        %v1304 = vadd.f32 %v1240, %v1272
        %v1305 = vadd.f32 %v1241, %v1273
        %v1306 = vadd.f32 %v1242, %v1274
        %v1307 = vadd.f32 %v1243, %v1275
        %v1308 = vadd.f32 %v1244, %v1276
        %v1309 = vadd.f32 %v1245, %v1277
        %v1310 = vadd.f32 %v1246, %v1278
        %v1311 = vadd.f32 %v1247, %v1279
        %v1312 = vadd.f32 %v1248, %v1280
        %v1313 = vadd.f32 %v1249, %v1281
        %v1314 = vadd.f32 %v1250, %v1282
        %v1315 = vadd.f32 %v1251, %v1283
        %v1316 = vadd.f32 %v1252, %v1284
        %v1317 = vadd.f32 %v1253, %v1285
        %v1318 = vadd.f32 %v1254, %v1286
        %v1319 = vadd.f32 %v1255, %v1287
        %v1320 = vadd.f32 %v1256, %v1288
        %v1321 = vadd.f32 %v1257, %v1289
        %v1322 = vadd.f32 %v1258, %v1290
        %v1323 = vadd.f32 %v1259, %v1291
        %v1324 = vadd.f32 %v1260, %v1292
        %v1325 = vadd.f32 %v1261, %v1293
        %v1326 = vadd.f32 %v1262, %v1294
        %v1327 = vadd.f32 %v1263, %v1295
        %v1328 = vadd.f32 %v1264, %v1296
        %v1329 = vadd.f32 %v1265, %v1297
        %v1330 = vadd.f32 %v1266, %v1298
        %v1331 = vadd.f32 %v1267, %v1299
        %v1332 = vadd.f32 %v1268, %v1300
        %v1333 = vadd.f32 %v1269, %v1301
        %v1366 = vrot.slane %v1302, 1
        %v1367 = vrot.slane %v1302, 2
        %v1368 = vrot.slane %v1302, 3
        %v1369 = vrot.slane %v1302, 4
        %v1370 = vrot.slane %v1302, 5
        %v1371 = vrot.slane %v1302, 6
        %v1372 = vrot.slane %v1302, 7
        %v1373 = vrot.slane %v1303, 1
        %v1374 = vrot.slane %v1303, 2
        %v1375 = vrot.slane %v1303, 3
        %v1376 = vrot.slane %v1303, 4
        %v1377 = vrot.slane %v1303, 5
        %v1378 = vrot.slane %v1303, 6
        %v1379 = vrot.slane %v1303, 7
        %v1380 = vrot.slane %v1304, 1
        %v1381 = vrot.slane %v1304, 2
        %v1382 = vrot.slane %v1304, 3
        %v1383 = vrot.slane %v1304, 4
        %v1384 = vrot.slane %v1304, 5
        %v1385 = vrot.slane %v1304, 6
        %v1386 = vrot.slane %v1304, 7
        %v1387 = vrot.slane %v1305, 1
        %v1388 = vrot.slane %v1305, 2
        %v1389 = vrot.slane %v1305, 3
        %v1390 = vrot.slane %v1305, 4
        %v1391 = vrot.slane %v1305, 5
        %v1392 = vrot.slane %v1305, 6
        %v1393 = vrot.slane %v1305, 7
        %v1394 = vrot.slane %v1306, 1
        %v1395 = vrot.slane %v1306, 2
        %v1396 = vrot.slane %v1306, 3
        %v1397 = vrot.slane %v1306, 4
        %v1398 = vrot.slane %v1306, 5
        %v1399 = vrot.slane %v1306, 6
        %v1400 = vrot.slane %v1306, 7
        %v1401 = vrot.slane %v1307, 1
        %v1402 = vrot.slane %v1307, 2
        %v1403 = vrot.slane %v1307, 3
        %v1404 = vrot.slane %v1307, 4
        %v1405 = vrot.slane %v1307, 5
        %v1406 = vrot.slane %v1307, 6
        %v1407 = vrot.slane %v1307, 7
        %v1408 = vrot.slane %v1308, 1
        %v1409 = vrot.slane %v1308, 2
        %v1410 = vrot.slane %v1308, 3
        %v1411 = vrot.slane %v1308, 4
        %v1412 = vrot.slane %v1308, 5
        %v1413 = vrot.slane %v1308, 6
        %v1414 = vrot.slane %v1308, 7
        %v1415 = vrot.slane %v1309, 1
        %v1416 = vrot.slane %v1309, 2
        %v1417 = vrot.slane %v1309, 3
        %v1418 = vrot.slane %v1309, 4
        %v1419 = vrot.slane %v1309, 5
        %v1420 = vrot.slane %v1309, 6
        %v1421 = vrot.slane %v1309, 7
        %v1422 = vrot.slane %v1310, 1
        %v1423 = vrot.slane %v1310, 2
        %v1424 = vrot.slane %v1310, 3
        %v1425 = vrot.slane %v1310, 4
        %v1426 = vrot.slane %v1310, 5
        %v1427 = vrot.slane %v1310, 6
        %v1428 = vrot.slane %v1310, 7
        %v1429 = vrot.slane %v1311, 1
        %v1430 = vrot.slane %v1311, 2
        %v1431 = vrot.slane %v1311, 3
        %v1432 = vrot.slane %v1311, 4
        %v1433 = vrot.slane %v1311, 5
        %v1434 = vrot.slane %v1311, 6
        %v1435 = vrot.slane %v1311, 7
        %v1436 = vrot.slane %v1312, 1
        %v1437 = vrot.slane %v1312, 2
        %v1438 = vrot.slane %v1312, 3
        %v1439 = vrot.slane %v1312, 4
        %v1440 = vrot.slane %v1312, 5
        %v1441 = vrot.slane %v1312, 6
        %v1442 = vrot.slane %v1312, 7
        %v1443 = vrot.slane %v1313, 1
        %v1444 = vrot.slane %v1313, 2
        %v1445 = vrot.slane %v1313, 3
        %v1446 = vrot.slane %v1313, 4
        %v1447 = vrot.slane %v1313, 5
        %v1448 = vrot.slane %v1313, 6
        %v1449 = vrot.slane %v1313, 7
        %v1450 = vrot.slane %v1314, 1
        %v1451 = vrot.slane %v1314, 2
        %v1452 = vrot.slane %v1314, 3
        %v1453 = vrot.slane %v1314, 4
        %v1454 = vrot.slane %v1314, 5
        %v1455 = vrot.slane %v1314, 6
        %v1456 = vrot.slane %v1314, 7
        %v1457 = vrot.slane %v1315, 1
        %v1458 = vrot.slane %v1315, 2
        %v1459 = vrot.slane %v1315, 3
        %v1460 = vrot.slane %v1315, 4
        %v1461 = vrot.slane %v1315, 5
        %v1462 = vrot.slane %v1315, 6
        %v1463 = vrot.slane %v1315, 7
        %v1464 = vrot.slane %v1316, 1
        %v1465 = vrot.slane %v1316, 2
        %v1466 = vrot.slane %v1316, 3
        %v1467 = vrot.slane %v1316, 4
        %v1468 = vrot.slane %v1316, 5
        %v1469 = vrot.slane %v1316, 6
        %v1470 = vrot.slane %v1316, 7
        %v1471 = vrot.slane %v1317, 1
        %v1472 = vrot.slane %v1317, 2
        %v1473 = vrot.slane %v1317, 3
        %v1474 = vrot.slane %v1317, 4
        %v1475 = vrot.slane %v1317, 5
        %v1476 = vrot.slane %v1317, 6
        %v1477 = vrot.slane %v1317, 7
        %v1478 = vrot.slane %v1318, 1
        %v1479 = vrot.slane %v1318, 2
        %v1480 = vrot.slane %v1318, 3
        %v1481 = vrot.slane %v1318, 4
        %v1482 = vrot.slane %v1318, 5
        %v1483 = vrot.slane %v1318, 6
        %v1484 = vrot.slane %v1318, 7
        %v1485 = vrot.slane %v1319, 1
        %v1486 = vrot.slane %v1319, 2
        %v1487 = vrot.slane %v1319, 3
        %v1488 = vrot.slane %v1319, 4
        %v1489 = vrot.slane %v1319, 5
        %v1490 = vrot.slane %v1319, 6
        %v1491 = vrot.slane %v1319, 7
        %v1492 = vrot.slane %v1320, 1
        %v1493 = vrot.slane %v1320, 2
        %v1494 = vrot.slane %v1320, 3
        %v1495 = vrot.slane %v1320, 4
        %v1496 = vrot.slane %v1320, 5
        %v1497 = vrot.slane %v1320, 6
        %v1498 = vrot.slane %v1320, 7
        %v1499 = vrot.slane %v1321, 1
        %v1500 = vrot.slane %v1321, 2
        %v1501 = vrot.slane %v1321, 3
        %v1502 = vrot.slane %v1321, 4
        %v1503 = vrot.slane %v1321, 5
        %v1504 = vrot.slane %v1321, 6
        %v1505 = vrot.slane %v1321, 7
        %v1506 = vrot.slane %v1322, 1
        %v1507 = vrot.slane %v1322, 2
        %v1508 = vrot.slane %v1322, 3
        %v1509 = vrot.slane %v1322, 4
        %v1510 = vrot.slane %v1322, 5
        %v1511 = vrot.slane %v1322, 6
        %v1512 = vrot.slane %v1322, 7
        %v1513 = vrot.slane %v1323, 1
        %v1514 = vrot.slane %v1323, 2
        %v1515 = vrot.slane %v1323, 3
        %v1516 = vrot.slane %v1323, 4
        %v1517 = vrot.slane %v1323, 5
        %v1518 = vrot.slane %v1323, 6
        %v1519 = vrot.slane %v1323, 7
        %v1520 = vrot.slane %v1324, 1
        %v1521 = vrot.slane %v1324, 2
        %v1522 = vrot.slane %v1324, 3
        %v1523 = vrot.slane %v1324, 4
        %v1524 = vrot.slane %v1324, 5
        %v1525 = vrot.slane %v1324, 6
        %v1526 = vrot.slane %v1324, 7
        %v1527 = vrot.slane %v1325, 1
        %v1528 = vrot.slane %v1325, 2
        %v1529 = vrot.slane %v1325, 3
        %v1530 = vrot.slane %v1325, 4
        %v1531 = vrot.slane %v1325, 5
        %v1532 = vrot.slane %v1325, 6
        %v1533 = vrot.slane %v1325, 7
        %v1534 = vrot.slane %v1326, 1
        %v1535 = vrot.slane %v1326, 2
        %v1536 = vrot.slane %v1326, 3
        %v1537 = vrot.slane %v1326, 4
        %v1538 = vrot.slane %v1326, 5
        %v1539 = vrot.slane %v1326, 6
        %v1540 = vrot.slane %v1326, 7
        %v1541 = vrot.slane %v1327, 1
        %v1542 = vrot.slane %v1327, 2
        %v1543 = vrot.slane %v1327, 3
        %v1544 = vrot.slane %v1327, 4
        %v1545 = vrot.slane %v1327, 5
        %v1546 = vrot.slane %v1327, 6
        %v1547 = vrot.slane %v1327, 7
        %v1548 = vrot.slane %v1328, 1
        %v1549 = vrot.slane %v1328, 2
        %v1550 = vrot.slane %v1328, 3
        %v1551 = vrot.slane %v1328, 4
        %v1552 = vrot.slane %v1328, 5
        %v1553 = vrot.slane %v1328, 6
        %v1554 = vrot.slane %v1328, 7
        %v1555 = vrot.slane %v1329, 1
        %v1556 = vrot.slane %v1329, 2
        %v1557 = vrot.slane %v1329, 3
        %v1558 = vrot.slane %v1329, 4
        %v1559 = vrot.slane %v1329, 5
        %v1560 = vrot.slane %v1329, 6
        %v1561 = vrot.slane %v1329, 7
        %v1562 = vrot.slane %v1330, 1
        %v1563 = vrot.slane %v1330, 2
        %v1564 = vrot.slane %v1330, 3
        %v1565 = vrot.slane %v1330, 4
        %v1566 = vrot.slane %v1330, 5
        %v1567 = vrot.slane %v1330, 6
        %v1568 = vrot.slane %v1330, 7
        %v1569 = vrot.slane %v1331, 1
        %v1570 = vrot.slane %v1331, 2
        %v1571 = vrot.slane %v1331, 3
        %v1572 = vrot.slane %v1331, 4
        %v1573 = vrot.slane %v1331, 5
        %v1574 = vrot.slane %v1331, 6
        %v1575 = vrot.slane %v1331, 7
        %v1576 = vrot.slane %v1332, 1
        %v1577 = vrot.slane %v1332, 2
        %v1578 = vrot.slane %v1332, 3
        %v1579 = vrot.slane %v1332, 4
        %v1580 = vrot.slane %v1332, 5
        %v1581 = vrot.slane %v1332, 6
        %v1582 = vrot.slane %v1332, 7
        %v1583 = vrot.slane %v1333, 1
        %v1584 = vrot.slane %v1333, 2
        %v1585 = vrot.slane %v1333, 3
        %v1586 = vrot.slane %v1333, 4
        %v1587 = vrot.slane %v1333, 5
        %v1588 = vrot.slane %v1333, 6
        %v1589 = vrot.slane %v1333, 7
        %1814 = vst [vmem:[%s179 + $0x1] sm:$0x1] %v1302
        %1815 = vst [vmem:[%s179 + $0x5] sm:$0x1] %v1366
        %1816 = vst [vmem:[%s179 + $0x9] sm:$0x1] %v1367
        %1817 = vst [vmem:[%s179 + $0xd] sm:$0x1] %v1368
        %1818 = vst [vmem:[%s179 + $0x11] sm:$0x1] %v1369
        %1819 = vst [vmem:[%s179 + $0x15] sm:$0x1] %v1370
        %1820 = vst [vmem:[%s179 + $0x19] sm:$0x1] %v1371
        %1821 = vst [vmem:[%s179 + $0x1d] sm:$0x1] %v1372
        %1822 = vst [vmem:[%s179 + $0x21] sm:$0x1] %v1303
        %1823 = vst [vmem:[%s179 + $0x25] sm:$0x1] %v1373
        %1824 = vst [vmem:[%s179 + $0x29] sm:$0x1] %v1374
        %1825 = vst [vmem:[%s179 + $0x2d] sm:$0x1] %v1375
        %1826 = vst [vmem:[%s179 + $0x31] sm:$0x1] %v1376
        %1827 = vst [vmem:[%s179 + $0x35] sm:$0x1] %v1377
        %1828 = vst [vmem:[%s179 + $0x39] sm:$0x1] %v1378
        %1829 = vst [vmem:[%s179 + $0x3d] sm:$0x1] %v1379
        %1830 = vst [vmem:[%s179 + $0x41] sm:$0x1] %v1304
        %1831 = vst [vmem:[%s179 + $0x45] sm:$0x1] %v1380
        %1832 = vst [vmem:[%s179 + $0x49] sm:$0x1] %v1381
        %1833 = vst [vmem:[%s179 + $0x4d] sm:$0x1] %v1382
        %1834 = vst [vmem:[%s179 + $0x51] sm:$0x1] %v1383
        %1835 = vst [vmem:[%s179 + $0x55] sm:$0x1] %v1384
        %1836 = vst [vmem:[%s179 + $0x59] sm:$0x1] %v1385
        %1837 = vst [vmem:[%s179 + $0x5d] sm:$0x1] %v1386
        %1838 = vst [vmem:[%s179 + $0x61] sm:$0x1] %v1305
        %1839 = vst [vmem:[%s179 + $0x65] sm:$0x1] %v1387
        %1840 = vst [vmem:[%s179 + $0x69] sm:$0x1] %v1388
        %1841 = vst [vmem:[%s179 + $0x6d] sm:$0x1] %v1389
        %1842 = vst [vmem:[%s179 + $0x71] sm:$0x1] %v1390
        %1843 = vst [vmem:[%s179 + $0x75] sm:$0x1] %v1391
        %1844 = vst [vmem:[%s179 + $0x79] sm:$0x1] %v1392
        %1845 = vst [vmem:[%s179 + $0x7d] sm:$0x1] %v1393
        %1846 = vst [vmem:[%s179 + $0x81] sm:$0x1] %v1306
        %1847 = vst [vmem:[%s179 + $0x85] sm:$0x1] %v1394
        %1848 = vst [vmem:[%s179 + $0x89] sm:$0x1] %v1395
        %1849 = vst [vmem:[%s179 + $0x8d] sm:$0x1] %v1396
        %1850 = vst [vmem:[%s179 + $0x91] sm:$0x1] %v1397
        %1851 = vst [vmem:[%s179 + $0x95] sm:$0x1] %v1398
        %1852 = vst [vmem:[%s179 + $0x99] sm:$0x1] %v1399
        %1853 = vst [vmem:[%s179 + $0x9d] sm:$0x1] %v1400
        %1854 = vst [vmem:[%s179 + $0xa1] sm:$0x1] %v1307
        %1855 = vst [vmem:[%s179 + $0xa5] sm:$0x1] %v1401
        %1856 = vst [vmem:[%s179 + $0xa9] sm:$0x1] %v1402
        %1857 = vst [vmem:[%s179 + $0xad] sm:$0x1] %v1403
        %1858 = vst [vmem:[%s179 + $0xb1] sm:$0x1] %v1404
        %1859 = vst [vmem:[%s179 + $0xb5] sm:$0x1] %v1405
        %1860 = vst [vmem:[%s179 + $0xb9] sm:$0x1] %v1406
        %1861 = vst [vmem:[%s179 + $0xbd] sm:$0x1] %v1407
        %1862 = vst [vmem:[%s179 + $0xc1] sm:$0x1] %v1308
        %1863 = vst [vmem:[%s179 + $0xc5] sm:$0x1] %v1408
        %1864 = vst [vmem:[%s179 + $0xc9] sm:$0x1] %v1409
        %1865 = vst [vmem:[%s179 + $0xcd] sm:$0x1] %v1410
        %1866 = vst [vmem:[%s179 + $0xd1] sm:$0x1] %v1411
        %1867 = vst [vmem:[%s179 + $0xd5] sm:$0x1] %v1412
        %1868 = vst [vmem:[%s179 + $0xd9] sm:$0x1] %v1413
        %1869 = vst [vmem:[%s179 + $0xdd] sm:$0x1] %v1414
        %1870 = vst [vmem:[%s179 + $0xe1] sm:$0x1] %v1309
        %1871 = vst [vmem:[%s179 + $0xe5] sm:$0x1] %v1415
        %1872 = vst [vmem:[%s179 + $0xe9] sm:$0x1] %v1416
        %1873 = vst [vmem:[%s179 + $0xed] sm:$0x1] %v1417
        %1874 = vst [vmem:[%s179 + $0xf1] sm:$0x1] %v1418
        %1875 = vst [vmem:[%s179 + $0xf5] sm:$0x1] %v1419
        %1876 = vst [vmem:[%s179 + $0xf9] sm:$0x1] %v1420
        %1877 = vst [vmem:[%s179 + $0xfd] sm:$0x1] %v1421
        %1878 = vst [vmem:[%s179 + $0x101] sm:$0x1] %v1310
        %1879 = vst [vmem:[%s179 + $0x105] sm:$0x1] %v1422
        %1880 = vst [vmem:[%s179 + $0x109] sm:$0x1] %v1423
        %1881 = vst [vmem:[%s179 + $0x10d] sm:$0x1] %v1424
        %1882 = vst [vmem:[%s179 + $0x111] sm:$0x1] %v1425
        %1883 = vst [vmem:[%s179 + $0x115] sm:$0x1] %v1426
        %1884 = vst [vmem:[%s179 + $0x119] sm:$0x1] %v1427
        %1885 = vst [vmem:[%s179 + $0x11d] sm:$0x1] %v1428
        %1886 = vst [vmem:[%s179 + $0x121] sm:$0x1] %v1311
        %1887 = vst [vmem:[%s179 + $0x125] sm:$0x1] %v1429
        %1888 = vst [vmem:[%s179 + $0x129] sm:$0x1] %v1430
        %1889 = vst [vmem:[%s179 + $0x12d] sm:$0x1] %v1431
        %1890 = vst [vmem:[%s179 + $0x131] sm:$0x1] %v1432
        %1891 = vst [vmem:[%s179 + $0x135] sm:$0x1] %v1433
        %1892 = vst [vmem:[%s179 + $0x139] sm:$0x1] %v1434
        %1893 = vst [vmem:[%s179 + $0x13d] sm:$0x1] %v1435
        %1894 = vst [vmem:[%s179 + $0x141] sm:$0x1] %v1312
        %1895 = vst [vmem:[%s179 + $0x145] sm:$0x1] %v1436
        %1896 = vst [vmem:[%s179 + $0x149] sm:$0x1] %v1437
        %1897 = vst [vmem:[%s179 + $0x14d] sm:$0x1] %v1438
        %1898 = vst [vmem:[%s179 + $0x151] sm:$0x1] %v1439
        %1899 = vst [vmem:[%s179 + $0x155] sm:$0x1] %v1440
        %1900 = vst [vmem:[%s179 + $0x159] sm:$0x1] %v1441
        %1901 = vst [vmem:[%s179 + $0x15d] sm:$0x1] %v1442
        %1902 = vst [vmem:[%s179 + $0x161] sm:$0x1] %v1313
        %1903 = vst [vmem:[%s179 + $0x165] sm:$0x1] %v1443
        %1904 = vst [vmem:[%s179 + $0x169] sm:$0x1] %v1444
        %1905 = vst [vmem:[%s179 + $0x16d] sm:$0x1] %v1445
        %1906 = vst [vmem:[%s179 + $0x171] sm:$0x1] %v1446
        %1907 = vst [vmem:[%s179 + $0x175] sm:$0x1] %v1447
        %1908 = vst [vmem:[%s179 + $0x179] sm:$0x1] %v1448
        %1909 = vst [vmem:[%s179 + $0x17d] sm:$0x1] %v1449
        %1910 = vst [vmem:[%s179 + $0x181] sm:$0x1] %v1314
        %1911 = vst [vmem:[%s179 + $0x185] sm:$0x1] %v1450
        %1912 = vst [vmem:[%s179 + $0x189] sm:$0x1] %v1451
        %1913 = vst [vmem:[%s179 + $0x18d] sm:$0x1] %v1452
        %1914 = vst [vmem:[%s179 + $0x191] sm:$0x1] %v1453
        %1915 = vst [vmem:[%s179 + $0x195] sm:$0x1] %v1454
        %1916 = vst [vmem:[%s179 + $0x199] sm:$0x1] %v1455
        %1917 = vst [vmem:[%s179 + $0x19d] sm:$0x1] %v1456
        %1918 = vst [vmem:[%s179 + $0x1a1] sm:$0x1] %v1315
        %1919 = vst [vmem:[%s179 + $0x1a5] sm:$0x1] %v1457
        %1920 = vst [vmem:[%s179 + $0x1a9] sm:$0x1] %v1458
        %1921 = vst [vmem:[%s179 + $0x1ad] sm:$0x1] %v1459
        %1922 = vst [vmem:[%s179 + $0x1b1] sm:$0x1] %v1460
        %1923 = vst [vmem:[%s179 + $0x1b5] sm:$0x1] %v1461
        %1924 = vst [vmem:[%s179 + $0x1b9] sm:$0x1] %v1462
        %1925 = vst [vmem:[%s179 + $0x1bd] sm:$0x1] %v1463
        %1926 = vst [vmem:[%s179 + $0x1c1] sm:$0x1] %v1316
        %1927 = vst [vmem:[%s179 + $0x1c5] sm:$0x1] %v1464
        %1928 = vst [vmem:[%s179 + $0x1c9] sm:$0x1] %v1465
        %1929 = vst [vmem:[%s179 + $0x1cd] sm:$0x1] %v1466
        %1930 = vst [vmem:[%s179 + $0x1d1] sm:$0x1] %v1467
        %1931 = vst [vmem:[%s179 + $0x1d5] sm:$0x1] %v1468
        %1932 = vst [vmem:[%s179 + $0x1d9] sm:$0x1] %v1469
        %1933 = vst [vmem:[%s179 + $0x1dd] sm:$0x1] %v1470
        %1934 = vst [vmem:[%s179 + $0x1e1] sm:$0x1] %v1317
        %1935 = vst [vmem:[%s179 + $0x1e5] sm:$0x1] %v1471
        %1936 = vst [vmem:[%s179 + $0x1e9] sm:$0x1] %v1472
        %1937 = vst [vmem:[%s179 + $0x1ed] sm:$0x1] %v1473
        %1938 = vst [vmem:[%s179 + $0x1f1] sm:$0x1] %v1474
        %1939 = vst [vmem:[%s179 + $0x1f5] sm:$0x1] %v1475
        %1940 = vst [vmem:[%s179 + $0x1f9] sm:$0x1] %v1476
        %1941 = vst [vmem:[%s179 + $0x1fd] sm:$0x1] %v1477
        %1942 = vst [vmem:[%s179 + $0x201] sm:$0x1] %v1318
        %1943 = vst [vmem:[%s179 + $0x205] sm:$0x1] %v1478
        %1944 = vst [vmem:[%s179 + $0x209] sm:$0x1] %v1479
        %1945 = vst [vmem:[%s179 + $0x20d] sm:$0x1] %v1480
        %1946 = vst [vmem:[%s179 + $0x211] sm:$0x1] %v1481
        %1947 = vst [vmem:[%s179 + $0x215] sm:$0x1] %v1482
        %1948 = vst [vmem:[%s179 + $0x219] sm:$0x1] %v1483
        %1949 = vst [vmem:[%s179 + $0x21d] sm:$0x1] %v1484
        %1950 = vst [vmem:[%s179 + $0x221] sm:$0x1] %v1319
        %1951 = vst [vmem:[%s179 + $0x225] sm:$0x1] %v1485
        %1952 = vst [vmem:[%s179 + $0x229] sm:$0x1] %v1486
        %1953 = vst [vmem:[%s179 + $0x22d] sm:$0x1] %v1487
        %1954 = vst [vmem:[%s179 + $0x231] sm:$0x1] %v1488
        %1955 = vst [vmem:[%s179 + $0x235] sm:$0x1] %v1489
        %1956 = vst [vmem:[%s179 + $0x239] sm:$0x1] %v1490
        %1957 = vst [vmem:[%s179 + $0x23d] sm:$0x1] %v1491
        %1958 = vst [vmem:[%s179 + $0x241] sm:$0x1] %v1320
        %1959 = vst [vmem:[%s179 + $0x245] sm:$0x1] %v1492
        %1960 = vst [vmem:[%s179 + $0x249] sm:$0x1] %v1493
        %1961 = vst [vmem:[%s179 + $0x24d] sm:$0x1] %v1494
        %1962 = vst [vmem:[%s179 + $0x251] sm:$0x1] %v1495
        %1963 = vst [vmem:[%s179 + $0x255] sm:$0x1] %v1496
        %1964 = vst [vmem:[%s179 + $0x259] sm:$0x1] %v1497
        %1965 = vst [vmem:[%s179 + $0x25d] sm:$0x1] %v1498
        %1966 = vst [vmem:[%s179 + $0x261] sm:$0x1] %v1321
        %1967 = vst [vmem:[%s179 + $0x265] sm:$0x1] %v1499
        %1968 = vst [vmem:[%s179 + $0x269] sm:$0x1] %v1500
        %1969 = vst [vmem:[%s179 + $0x26d] sm:$0x1] %v1501
        %1970 = vst [vmem:[%s179 + $0x271] sm:$0x1] %v1502
        %1971 = vst [vmem:[%s179 + $0x275] sm:$0x1] %v1503
        %1972 = vst [vmem:[%s179 + $0x279] sm:$0x1] %v1504
        %1973 = vst [vmem:[%s179 + $0x27d] sm:$0x1] %v1505
        %1974 = vst [vmem:[%s179 + $0x281] sm:$0x1] %v1322
        %1975 = vst [vmem:[%s179 + $0x285] sm:$0x1] %v1506
        %1976 = vst [vmem:[%s179 + $0x289] sm:$0x1] %v1507
        %1977 = vst [vmem:[%s179 + $0x28d] sm:$0x1] %v1508
        %1978 = vst [vmem:[%s179 + $0x291] sm:$0x1] %v1509
        %1979 = vst [vmem:[%s179 + $0x295] sm:$0x1] %v1510
        %1980 = vst [vmem:[%s179 + $0x299] sm:$0x1] %v1511
        %1981 = vst [vmem:[%s179 + $0x29d] sm:$0x1] %v1512
        %1982 = vst [vmem:[%s179 + $0x2a1] sm:$0x1] %v1323
        %1983 = vst [vmem:[%s179 + $0x2a5] sm:$0x1] %v1513
        %1984 = vst [vmem:[%s179 + $0x2a9] sm:$0x1] %v1514
        %1985 = vst [vmem:[%s179 + $0x2ad] sm:$0x1] %v1515
        %1986 = vst [vmem:[%s179 + $0x2b1] sm:$0x1] %v1516
        %1987 = vst [vmem:[%s179 + $0x2b5] sm:$0x1] %v1517
        %1988 = vst [vmem:[%s179 + $0x2b9] sm:$0x1] %v1518
        %1989 = vst [vmem:[%s179 + $0x2bd] sm:$0x1] %v1519
        %1990 = vst [vmem:[%s179 + $0x2c1] sm:$0x1] %v1324
        %1991 = vst [vmem:[%s179 + $0x2c5] sm:$0x1] %v1520
        %1992 = vst [vmem:[%s179 + $0x2c9] sm:$0x1] %v1521
        %1993 = vst [vmem:[%s179 + $0x2cd] sm:$0x1] %v1522
        %1994 = vst [vmem:[%s179 + $0x2d1] sm:$0x1] %v1523
        %1995 = vst [vmem:[%s179 + $0x2d5] sm:$0x1] %v1524
        %1996 = vst [vmem:[%s179 + $0x2d9] sm:$0x1] %v1525
        %1997 = vst [vmem:[%s179 + $0x2dd] sm:$0x1] %v1526
        %1998 = vst [vmem:[%s179 + $0x2e1] sm:$0x1] %v1325
        %1999 = vst [vmem:[%s179 + $0x2e5] sm:$0x1] %v1527
        %2000 = vst [vmem:[%s179 + $0x2e9] sm:$0x1] %v1528
        %2001 = vst [vmem:[%s179 + $0x2ed] sm:$0x1] %v1529
        %2002 = vst [vmem:[%s179 + $0x2f1] sm:$0x1] %v1530
        %2003 = vst [vmem:[%s179 + $0x2f5] sm:$0x1] %v1531
        %2004 = vst [vmem:[%s179 + $0x2f9] sm:$0x1] %v1532
        %2005 = vst [vmem:[%s179 + $0x2fd] sm:$0x1] %v1533
        %2006 = vst [vmem:[%s179 + $0x301] sm:$0x1] %v1326
        %2007 = vst [vmem:[%s179 + $0x305] sm:$0x1] %v1534
        %2008 = vst [vmem:[%s179 + $0x309] sm:$0x1] %v1535
        %2009 = vst [vmem:[%s179 + $0x30d] sm:$0x1] %v1536
        %2010 = vst [vmem:[%s179 + $0x311] sm:$0x1] %v1537
        %2011 = vst [vmem:[%s179 + $0x315] sm:$0x1] %v1538
        %2012 = vst [vmem:[%s179 + $0x319] sm:$0x1] %v1539
        %2013 = vst [vmem:[%s179 + $0x31d] sm:$0x1] %v1540
        %2014 = vst [vmem:[%s179 + $0x321] sm:$0x1] %v1327
        %2015 = vst [vmem:[%s179 + $0x325] sm:$0x1] %v1541
        %2016 = vst [vmem:[%s179 + $0x329] sm:$0x1] %v1542
        %2017 = vst [vmem:[%s179 + $0x32d] sm:$0x1] %v1543
        %2018 = vst [vmem:[%s179 + $0x331] sm:$0x1] %v1544
        %2019 = vst [vmem:[%s179 + $0x335] sm:$0x1] %v1545
        %2020 = vst [vmem:[%s179 + $0x339] sm:$0x1] %v1546
        %2021 = vst [vmem:[%s179 + $0x33d] sm:$0x1] %v1547
        %2022 = vst [vmem:[%s179 + $0x341] sm:$0x1] %v1328
        %2023 = vst [vmem:[%s179 + $0x345] sm:$0x1] %v1548
        %2024 = vst [vmem:[%s179 + $0x349] sm:$0x1] %v1549
        %2025 = vst [vmem:[%s179 + $0x34d] sm:$0x1] %v1550
        %2026 = vst [vmem:[%s179 + $0x351] sm:$0x1] %v1551
        %2027 = vst [vmem:[%s179 + $0x355] sm:$0x1] %v1552
        %2028 = vst [vmem:[%s179 + $0x359] sm:$0x1] %v1553
        %2029 = vst [vmem:[%s179 + $0x35d] sm:$0x1] %v1554
        %2030 = vst [vmem:[%s179 + $0x361] sm:$0x1] %v1329
        %2031 = vst [vmem:[%s179 + $0x365] sm:$0x1] %v1555
        %2032 = vst [vmem:[%s179 + $0x369] sm:$0x1] %v1556
        %2033 = vst [vmem:[%s179 + $0x36d] sm:$0x1] %v1557
        %2034 = vst [vmem:[%s179 + $0x371] sm:$0x1] %v1558
        %2035 = vst [vmem:[%s179 + $0x375] sm:$0x1] %v1559
        %2036 = vst [vmem:[%s179 + $0x379] sm:$0x1] %v1560
        %2037 = vst [vmem:[%s179 + $0x37d] sm:$0x1] %v1561
        %2038 = vst [vmem:[%s179 + $0x381] sm:$0x1] %v1330
        %2039 = vst [vmem:[%s179 + $0x385] sm:$0x1] %v1562
        %2040 = vst [vmem:[%s179 + $0x389] sm:$0x1] %v1563
        %2041 = vst [vmem:[%s179 + $0x38d] sm:$0x1] %v1564
        %2042 = vst [vmem:[%s179 + $0x391] sm:$0x1] %v1565
        %2043 = vst [vmem:[%s179 + $0x395] sm:$0x1] %v1566
        %2044 = vst [vmem:[%s179 + $0x399] sm:$0x1] %v1567
        %2045 = vst [vmem:[%s179 + $0x39d] sm:$0x1] %v1568
        %2046 = vst [vmem:[%s179 + $0x3a1] sm:$0x1] %v1331
        %2047 = vst [vmem:[%s179 + $0x3a5] sm:$0x1] %v1569
        %2048 = vst [vmem:[%s179 + $0x3a9] sm:$0x1] %v1570
        %2049 = vst [vmem:[%s179 + $0x3ad] sm:$0x1] %v1571
        %2050 = vst [vmem:[%s179 + $0x3b1] sm:$0x1] %v1572
        %2051 = vst [vmem:[%s179 + $0x3b5] sm:$0x1] %v1573
        %2052 = vst [vmem:[%s179 + $0x3b9] sm:$0x1] %v1574
        %2053 = vst [vmem:[%s179 + $0x3bd] sm:$0x1] %v1575
        %2054 = vst [vmem:[%s179 + $0x3c1] sm:$0x1] %v1332
        %2055 = vst [vmem:[%s179 + $0x3c5] sm:$0x1] %v1576
        %2056 = vst [vmem:[%s179 + $0x3c9] sm:$0x1] %v1577
        %2057 = vst [vmem:[%s179 + $0x3cd] sm:$0x1] %v1578
        %2058 = vst [vmem:[%s179 + $0x3d1] sm:$0x1] %v1579
        %2059 = vst [vmem:[%s179 + $0x3d5] sm:$0x1] %v1580
        %2060 = vst [vmem:[%s179 + $0x3d9] sm:$0x1] %v1581
        %2061 = vst [vmem:[%s179 + $0x3dd] sm:$0x1] %v1582
        %2062 = vst [vmem:[%s179 + $0x3e1] sm:$0x1] %v1333
        %2063 = vst [vmem:[%s179 + $0x3e5] sm:$0x1] %v1583
        %2064 = vst [vmem:[%s179 + $0x3e9] sm:$0x1] %v1584
        %2065 = vst [vmem:[%s179 + $0x3ed] sm:$0x1] %v1585
        %2066 = vst [vmem:[%s179 + $0x3f1] sm:$0x1] %v1586
        %2067 = vst [vmem:[%s179 + $0x3f5] sm:$0x1] %v1587
        %2068 = vst [vmem:[%s179 + $0x3f9] sm:$0x1] %v1588
        %2069 = vst [vmem:[%s179 + $0x3fd] sm:$0x1] %v1589
        %v2070 = vld [vmem:[#allocation2] sm:$0xff]
        %v2071 = vld [vmem:[#allocation2 + $0x8] sm:$0xff]
        %v2072 = vld [vmem:[#allocation2 + $0x10] sm:$0xff]
        %v2073 = vld [vmem:[#allocation2 + $0x18] sm:$0xff]
        %v2074 = vld [vmem:[#allocation2 + $0x20] sm:$0xff]
        %v2075 = vld [vmem:[#allocation2 + $0x28] sm:$0xff]
        %v2076 = vld [vmem:[#allocation2 + $0x30] sm:$0xff]
        %v2077 = vld [vmem:[#allocation2 + $0x38] sm:$0xff]
        %v2078 = vld [vmem:[#allocation2 + $0x40] sm:$0xff]
        %v2079 = vld [vmem:[#allocation2 + $0x48] sm:$0xff]
        %v2080 = vld [vmem:[#allocation2 + $0x50] sm:$0xff]
        %v2081 = vld [vmem:[#allocation2 + $0x58] sm:$0xff]
        %v2082 = vld [vmem:[#allocation2 + $0x60] sm:$0xff]
        %v2083 = vld [vmem:[#allocation2 + $0x68] sm:$0xff]
        %v2084 = vld [vmem:[#allocation2 + $0x70] sm:$0xff]
        %v2085 = vld [vmem:[#allocation2 + $0x78] sm:$0xff]
        %v2086 = vld [vmem:[#allocation2 + $0x80] sm:$0xff]
        %v2087 = vld [vmem:[#allocation2 + $0x88] sm:$0xff]
        %v2088 = vld [vmem:[#allocation2 + $0x90] sm:$0xff]
        %v2089 = vld [vmem:[#allocation2 + $0x98] sm:$0xff]
        %v2090 = vld [vmem:[#allocation2 + $0xa0] sm:$0xff]
        %v2091 = vld [vmem:[#allocation2 + $0xa8] sm:$0xff]
        %v2092 = vld [vmem:[#allocation2 + $0xb0] sm:$0xff]
        %v2093 = vld [vmem:[#allocation2 + $0xb8] sm:$0xff]
        %v2094 = vld [vmem:[#allocation2 + $0xc0] sm:$0xff]
        %v2095 = vld [vmem:[#allocation2 + $0xc8] sm:$0xff]
        %v2096 = vld [vmem:[#allocation2 + $0xd0] sm:$0xff]
        %v2097 = vld [vmem:[#allocation2 + $0xd8] sm:$0xff]
        %v2098 = vld [vmem:[#allocation2 + $0xe0] sm:$0xff]
        %v2099 = vld [vmem:[#allocation2 + $0xe8] sm:$0xff]
        %v2100 = vld [vmem:[#allocation2 + $0xf0] sm:$0xff]
        %v2101 = vld [vmem:[#allocation2 + $0xf8] sm:$0xff]
        %v2102 = vld [vmem:[#allocation2 + $0x100] sm:$0xff]
        %v2103 = vld [vmem:[#allocation2 + $0x108] sm:$0xff]
        %v2104 = vld [vmem:[#allocation2 + $0x110] sm:$0xff]
        %v2105 = vld [vmem:[#allocation2 + $0x118] sm:$0xff]
        %v2106 = vld [vmem:[#allocation2 + $0x120] sm:$0xff]
        %v2107 = vld [vmem:[#allocation2 + $0x128] sm:$0xff]
        %v2108 = vld [vmem:[#allocation2 + $0x130] sm:$0xff]
        %v2109 = vld [vmem:[#allocation2 + $0x138] sm:$0xff]
        %v2110 = vld [vmem:[#allocation2 + $0x140] sm:$0xff]
        %v2111 = vld [vmem:[#allocation2 + $0x148] sm:$0xff]
        %v2112 = vld [vmem:[#allocation2 + $0x150] sm:$0xff]
        %v2113 = vld [vmem:[#allocation2 + $0x158] sm:$0xff]
        %v2114 = vld [vmem:[#allocation2 + $0x160] sm:$0xff]
        %v2115 = vld [vmem:[#allocation2 + $0x168] sm:$0xff]
        %v2116 = vld [vmem:[#allocation2 + $0x170] sm:$0xff]
        %v2117 = vld [vmem:[#allocation2 + $0x178] sm:$0xff]
        %v2118 = vld [vmem:[#allocation2 + $0x180] sm:$0xff]
        %v2119 = vld [vmem:[#allocation2 + $0x188] sm:$0xff]
        %v2120 = vld [vmem:[#allocation2 + $0x190] sm:$0xff]
        %v2121 = vld [vmem:[#allocation2 + $0x198] sm:$0xff]
        %v2122 = vld [vmem:[#allocation2 + $0x1a0] sm:$0xff]
        %v2123 = vld [vmem:[#allocation2 + $0x1a8] sm:$0xff]
        %v2124 = vld [vmem:[#allocation2 + $0x1b0] sm:$0xff]
        %v2125 = vld [vmem:[#allocation2 + $0x1b8] sm:$0xff]
        %v2126 = vld [vmem:[#allocation2 + $0x1c0] sm:$0xff]
        %v2127 = vld [vmem:[#allocation2 + $0x1c8] sm:$0xff]
        %v2128 = vld [vmem:[#allocation2 + $0x1d0] sm:$0xff]
        %v2129 = vld [vmem:[#allocation2 + $0x1d8] sm:$0xff]
        %v2130 = vld [vmem:[#allocation2 + $0x1e0] sm:$0xff]
        %v2131 = vld [vmem:[#allocation2 + $0x1e8] sm:$0xff]
        %v2132 = vld [vmem:[#allocation2 + $0x1f0] sm:$0xff]
        %v2133 = vld [vmem:[#allocation2 + $0x1f8] sm:$0xff]
        %2134 = vmatpush.msra.mxu0 %v1317
        %2135 = vmatpush.msra.mxu0 %v1316
        %2136 = vmatpush.msra.mxu0 %v1315
        %2137 = vmatpush.msra.mxu0 %v1314
        %2138 = vmatpush.msra.mxu0 %v1313
        %2139 = vmatpush.msra.mxu0 %v1312
        %2140 = vmatpush.msra.mxu0 %v1311
        %2141 = vmatpush.msra.mxu0 %v1310
        %2142 = vmatpush.msra.mxu0 %v1309
        %2143 = vmatpush.msra.mxu0 %v1308
        %2144 = vmatpush.msra.mxu0 %v1307
        %2145 = vmatpush.msra.mxu0 %v1306
        %2146 = vmatpush.msra.mxu0 %v1305
        %2147 = vmatpush.msra.mxu0 %v1304
        %2148 = vmatpush.msra.mxu0 %v1303
        %2149 = vmatpush.msra.mxu0 %v1302
        %2150 = vmatmul.f32.gmra.mxu0 %v2070
        %v2151 = vpop.f32.mrf.mxu0
        %v2152 = vadd.f32 0.0, %v2151
        %2153 = vmatmul.f32.gmra.mxu0 %v2072
        %v2154 = vpop.f32.mrf.mxu0
        %v2155 = vadd.f32 0.0, %v2154
        %2156 = vmatmul.f32.gmra.mxu0 %v2074
        %v2157 = vpop.f32.mrf.mxu0
        %v2158 = vadd.f32 0.0, %v2157
        %2159 = vmatmul.f32.gmra.mxu0 %v2076
        %v2160 = vpop.f32.mrf.mxu0
        %v2161 = vadd.f32 0.0, %v2160
        %2162 = vmatmul.f32.gmra.mxu0 %v2078
        %v2163 = vpop.f32.mrf.mxu0
        %v2164 = vadd.f32 0.0, %v2163
        %2165 = vmatmul.f32.gmra.mxu0 %v2080
        %v2166 = vpop.f32.mrf.mxu0
        %v2167 = vadd.f32 0.0, %v2166
        %2168 = vmatmul.f32.gmra.mxu0 %v2082
        %v2169 = vpop.f32.mrf.mxu0
        %v2170 = vadd.f32 0.0, %v2169
        %2171 = vmatmul.f32.gmra.mxu0 %v2084
        %v2172 = vpop.f32.mrf.mxu0
        %v2173 = vadd.f32 0.0, %v2172
        %2174 = vmatmul.f32.gmra.mxu0 %v2086
        %v2175 = vpop.f32.mrf.mxu0
        %v2176 = vadd.f32 0.0, %v2175
        %2177 = vmatmul.f32.gmra.mxu0 %v2088
        %v2178 = vpop.f32.mrf.mxu0
        %v2179 = vadd.f32 0.0, %v2178
        %2180 = vmatmul.f32.gmra.mxu0 %v2090
        %v2181 = vpop.f32.mrf.mxu0
        %v2182 = vadd.f32 0.0, %v2181
        %2183 = vmatmul.f32.gmra.mxu0 %v2092
        %v2184 = vpop.f32.mrf.mxu0
        %v2185 = vadd.f32 0.0, %v2184
        %2186 = vmatmul.f32.gmra.mxu0 %v2094
        %v2187 = vpop.f32.mrf.mxu0
        %v2188 = vadd.f32 0.0, %v2187
        %2189 = vmatmul.f32.gmra.mxu0 %v2096
        %v2190 = vpop.f32.mrf.mxu0
        %v2191 = vadd.f32 0.0, %v2190
        %2192 = vmatmul.f32.gmra.mxu0 %v2098
        %v2193 = vpop.f32.mrf.mxu0
        %v2194 = vadd.f32 0.0, %v2193
        %2195 = vmatmul.f32.gmra.mxu0 %v2100
        %v2196 = vpop.f32.mrf.mxu0
        %v2197 = vadd.f32 0.0, %v2196
        %2198 = vmatmul.f32.gmra.mxu0 %v2102
        %v2199 = vpop.f32.mrf.mxu0
        %v2200 = vadd.f32 0.0, %v2199
        %2201 = vmatmul.f32.gmra.mxu0 %v2104
        %v2202 = vpop.f32.mrf.mxu0
        %v2203 = vadd.f32 0.0, %v2202
        %2204 = vmatmul.f32.gmra.mxu0 %v2106
        %v2205 = vpop.f32.mrf.mxu0
        %v2206 = vadd.f32 0.0, %v2205
        %2207 = vmatmul.f32.gmra.mxu0 %v2108
        %v2208 = vpop.f32.mrf.mxu0
        %v2209 = vadd.f32 0.0, %v2208
        %2210 = vmatmul.f32.gmra.mxu0 %v2110
        %v2211 = vpop.f32.mrf.mxu0
        %v2212 = vadd.f32 0.0, %v2211
        %2213 = vmatmul.f32.gmra.mxu0 %v2112
        %v2214 = vpop.f32.mrf.mxu0
        %v2215 = vadd.f32 0.0, %v2214
        %2216 = vmatmul.f32.gmra.mxu0 %v2114
        %v2217 = vpop.f32.mrf.mxu0
        %v2218 = vadd.f32 0.0, %v2217
        %2219 = vmatmul.f32.gmra.mxu0 %v2116
        %v2220 = vpop.f32.mrf.mxu0
        %v2221 = vadd.f32 0.0, %v2220
        %2222 = vmatmul.f32.gmra.mxu0 %v2118
        %v2223 = vpop.f32.mrf.mxu0
        %v2224 = vadd.f32 0.0, %v2223
        %2225 = vmatmul.f32.gmra.mxu0 %v2120
        %v2226 = vpop.f32.mrf.mxu0
        %v2227 = vadd.f32 0.0, %v2226
        %2228 = vmatmul.f32.gmra.mxu0 %v2122
        %v2229 = vpop.f32.mrf.mxu0
        %v2230 = vadd.f32 0.0, %v2229
        %2231 = vmatmul.f32.gmra.mxu0 %v2124
        %v2232 = vpop.f32.mrf.mxu0
        %v2233 = vadd.f32 0.0, %v2232
        %2234 = vmatmul.f32.gmra.mxu0 %v2126
        %v2235 = vpop.f32.mrf.mxu0
        %v2236 = vadd.f32 0.0, %v2235
        %2237 = vmatmul.f32.gmra.mxu0 %v2128
        %v2238 = vpop.f32.mrf.mxu0
        %v2239 = vadd.f32 0.0, %v2238
        %2240 = vmatmul.f32.gmra.mxu0 %v2130
        %v2241 = vpop.f32.mrf.mxu0
        %v2242 = vadd.f32 0.0, %v2241
        %2243 = vmatmul.f32.gmra.mxu0 %v2132
        %v2244 = vpop.f32.mrf.mxu0
        %v2245 = vadd.f32 0.0, %v2244
        %2246 = vdwg.mxu0
        %2247 = vmatpush.msra.mxu0 %v1333
        %2248 = vmatpush.msra.mxu0 %v1332
        %2249 = vmatpush.msra.mxu0 %v1331
        %2250 = vmatpush.msra.mxu0 %v1330
        %2251 = vmatpush.msra.mxu0 %v1329
        %2252 = vmatpush.msra.mxu0 %v1328
        %2253 = vmatpush.msra.mxu0 %v1327
        %2254 = vmatpush.msra.mxu0 %v1326
        %2255 = vmatpush.msra.mxu0 %v1325
        %2256 = vmatpush.msra.mxu0 %v1324
        %2257 = vmatpush.msra.mxu0 %v1323
        %2258 = vmatpush.msra.mxu0 %v1322
        %2259 = vmatpush.msra.mxu0 %v1321
        %2260 = vmatpush.msra.mxu0 %v1320
        %2261 = vmatpush.msra.mxu0 %v1319
        %2262 = vmatpush.msra.mxu0 %v1318
        %2263 = vmatmul.f32.gmra.mxu0 %v2071
        %v2264 = vpop.f32.mrf.mxu0
        %v2265 = vadd.f32 %v2152, %v2264
        %2266 = vmatmul.f32.gmra.mxu0 %v2073
        %v2267 = vpop.f32.mrf.mxu0
        %v2268 = vadd.f32 %v2155, %v2267
        %2269 = vmatmul.f32.gmra.mxu0 %v2075
        %v2270 = vpop.f32.mrf.mxu0
        %v2271 = vadd.f32 %v2158, %v2270
        %2272 = vmatmul.f32.gmra.mxu0 %v2077
        %v2273 = vpop.f32.mrf.mxu0
        %v2274 = vadd.f32 %v2161, %v2273
        %2275 = vmatmul.f32.gmra.mxu0 %v2079
        %v2276 = vpop.f32.mrf.mxu0
        %v2277 = vadd.f32 %v2164, %v2276
        %2278 = vmatmul.f32.gmra.mxu0 %v2081
        %v2279 = vpop.f32.mrf.mxu0
        %v2280 = vadd.f32 %v2167, %v2279
        %2281 = vmatmul.f32.gmra.mxu0 %v2083
        %v2282 = vpop.f32.mrf.mxu0
        %v2283 = vadd.f32 %v2170, %v2282
        %2284 = vmatmul.f32.gmra.mxu0 %v2085
        %v2285 = vpop.f32.mrf.mxu0
        %v2286 = vadd.f32 %v2173, %v2285
        %2287 = vmatmul.f32.gmra.mxu0 %v2087
        %v2288 = vpop.f32.mrf.mxu0
        %v2289 = vadd.f32 %v2176, %v2288
        %2290 = vmatmul.f32.gmra.mxu0 %v2089
        %v2291 = vpop.f32.mrf.mxu0
        %v2292 = vadd.f32 %v2179, %v2291
        %2293 = vmatmul.f32.gmra.mxu0 %v2091
        %v2294 = vpop.f32.mrf.mxu0
        %v2295 = vadd.f32 %v2182, %v2294
        %2296 = vmatmul.f32.gmra.mxu0 %v2093
        %v2297 = vpop.f32.mrf.mxu0
        %v2298 = vadd.f32 %v2185, %v2297
        %2299 = vmatmul.f32.gmra.mxu0 %v2095
        %v2300 = vpop.f32.mrf.mxu0
        %v2301 = vadd.f32 %v2188, %v2300
        %2302 = vmatmul.f32.gmra.mxu0 %v2097
        %v2303 = vpop.f32.mrf.mxu0
        %v2304 = vadd.f32 %v2191, %v2303
        %2305 = vmatmul.f32.gmra.mxu0 %v2099
        %v2306 = vpop.f32.mrf.mxu0
        %v2307 = vadd.f32 %v2194, %v2306
        %2308 = vmatmul.f32.gmra.mxu0 %v2101
        %v2309 = vpop.f32.mrf.mxu0
        %v2310 = vadd.f32 %v2197, %v2309
        %2311 = vmatmul.f32.gmra.mxu0 %v2103
        %v2312 = vpop.f32.mrf.mxu0
        %v2313 = vadd.f32 %v2200, %v2312
        %2314 = vmatmul.f32.gmra.mxu0 %v2105
        %v2315 = vpop.f32.mrf.mxu0
        %v2316 = vadd.f32 %v2203, %v2315
        %2317 = vmatmul.f32.gmra.mxu0 %v2107
        %v2318 = vpop.f32.mrf.mxu0
        %v2319 = vadd.f32 %v2206, %v2318
        %2320 = vmatmul.f32.gmra.mxu0 %v2109
        %v2321 = vpop.f32.mrf.mxu0
        %v2322 = vadd.f32 %v2209, %v2321
        %2323 = vmatmul.f32.gmra.mxu0 %v2111
        %v2324 = vpop.f32.mrf.mxu0
        %v2325 = vadd.f32 %v2212, %v2324
        %2326 = vmatmul.f32.gmra.mxu0 %v2113
        %v2327 = vpop.f32.mrf.mxu0
        %v2328 = vadd.f32 %v2215, %v2327
        %2329 = vmatmul.f32.gmra.mxu0 %v2115
        %v2330 = vpop.f32.mrf.mxu0
        %v2331 = vadd.f32 %v2218, %v2330
        %2332 = vmatmul.f32.gmra.mxu0 %v2117
        %v2333 = vpop.f32.mrf.mxu0
        %v2334 = vadd.f32 %v2221, %v2333
        %2335 = vmatmul.f32.gmra.mxu0 %v2119
        %v2336 = vpop.f32.mrf.mxu0
        %v2337 = vadd.f32 %v2224, %v2336
        %2338 = vmatmul.f32.gmra.mxu0 %v2121
        %v2339 = vpop.f32.mrf.mxu0
        %v2340 = vadd.f32 %v2227, %v2339
        %2341 = vmatmul.f32.gmra.mxu0 %v2123
        %v2342 = vpop.f32.mrf.mxu0
        %v2343 = vadd.f32 %v2230, %v2342
        %2344 = vmatmul.f32.gmra.mxu0 %v2125
        %v2345 = vpop.f32.mrf.mxu0
        %v2346 = vadd.f32 %v2233, %v2345
        %2347 = vmatmul.f32.gmra.mxu0 %v2127
        %v2348 = vpop.f32.mrf.mxu0
        %v2349 = vadd.f32 %v2236, %v2348
        %2350 = vmatmul.f32.gmra.mxu0 %v2129
        %v2351 = vpop.f32.mrf.mxu0
        %v2352 = vadd.f32 %v2239, %v2351
        %2353 = vmatmul.f32.gmra.mxu0 %v2131
        %v2354 = vpop.f32.mrf.mxu0
        %v2355 = vadd.f32 %v2242, %v2354
        %2356 = vmatmul.f32.gmra.mxu0 %v2133
        %v2357 = vpop.f32.mrf.mxu0
        %v2358 = vadd.f32 %v2245, %v2357
        %2359 = vdwg.mxu0
        %v2360 = vmul.f32 %v2265, 1.427989
        %v2361 = vmul.f32 %v2268, 1.427989
        %v2362 = vmul.f32 %v2271, 1.427989
        %v2363 = vmul.f32 %v2274, 1.427989
        %v2364 = vmul.f32 %v2277, 1.427989
        %v2365 = vmul.f32 %v2280, 1.427989
        %v2366 = vmul.f32 %v2283, 1.427989
        %v2367 = vmul.f32 %v2286, 1.427989
        %v2368 = vmul.f32 %v2289, 1.427989
        %v2369 = vmul.f32 %v2292, 1.427989
        %v2370 = vmul.f32 %v2295, 1.427989
        %v2371 = vmul.f32 %v2298, 1.427989
        %v2372 = vmul.f32 %v2301, 1.427989
        %v2373 = vmul.f32 %v2304, 1.427989
        %v2374 = vmul.f32 %v2307, 1.427989
        %v2375 = vmul.f32 %v2310, 1.427989
        %v2376 = vmul.f32 %v2313, 1.427989
        %v2377 = vmul.f32 %v2316, 1.427989
        %v2378 = vmul.f32 %v2319, 1.427989
        %v2379 = vmul.f32 %v2322, 1.427989
        %v2380 = vmul.f32 %v2325, 1.427989
        %v2381 = vmul.f32 %v2328, 1.427989
        %v2382 = vmul.f32 %v2331, 1.427989
        %v2383 = vmul.f32 %v2334, 1.427989
        %v2384 = vmul.f32 %v2337, 1.427989
        %v2385 = vmul.f32 %v2340, 1.427989
        %v2386 = vmul.f32 %v2343, 1.427989
        %v2387 = vmul.f32 %v2346, 1.427989
        %v2388 = vmul.f32 %v2349, 1.427989
        %v2389 = vmul.f32 %v2352, 1.427989
        %v2390 = vmul.f32 %v2355, 1.427989
        %v2391 = vmul.f32 %v2358, 1.427989
        %v2392 = vmul.f32 %v1302, -0.0
        %v2393 = vmul.f32 %v1303, -0.0
        %v2394 = vmul.f32 %v1304, -0.0
        %v2395 = vmul.f32 %v1305, -0.0
        %v2396 = vmul.f32 %v1306, -0.0
        %v2397 = vmul.f32 %v1307, -0.0
        %v2398 = vmul.f32 %v1308, -0.0
        %v2399 = vmul.f32 %v1309, -0.0
        %v2400 = vmul.f32 %v1310, -0.0
        %v2401 = vmul.f32 %v1311, -0.0
        %v2402 = vmul.f32 %v1312, -0.0
        %v2403 = vmul.f32 %v1313, -0.0
        %v2404 = vmul.f32 %v1314, -0.0
        %v2405 = vmul.f32 %v1315, -0.0
        %v2406 = vmul.f32 %v1316, -0.0
        %v2407 = vmul.f32 %v1317, -0.0
        %v2408 = vmul.f32 %v1318, -0.0
        %v2409 = vmul.f32 %v1319, -0.0
        %v2410 = vmul.f32 %v1320, -0.0
        %v2411 = vmul.f32 %v1321, -0.0
        %v2412 = vmul.f32 %v1322, -0.0
        %v2413 = vmul.f32 %v1323, -0.0
        %v2414 = vmul.f32 %v1324, -0.0
        %v2415 = vmul.f32 %v1325, -0.0
        %v2416 = vmul.f32 %v1326, -0.0
        %v2417 = vmul.f32 %v1327, -0.0
        %v2418 = vmul.f32 %v1328, -0.0
        %v2419 = vmul.f32 %v1329, -0.0
        %v2420 = vmul.f32 %v1330, -0.0
        %v2421 = vmul.f32 %v1331, -0.0
        %v2422 = vmul.f32 %v1332, -0.0
        %v2423 = vmul.f32 %v1333, -0.0
        %v2424 = vadd.f32 %v2360, %v2392
        %v2425 = vadd.f32 %v2361, %v2393
        %v2426 = vadd.f32 %v2362, %v2394
        %v2427 = vadd.f32 %v2363, %v2395
        %v2428 = vadd.f32 %v2364, %v2396
        %v2429 = vadd.f32 %v2365, %v2397
        %v2430 = vadd.f32 %v2366, %v2398
        %v2431 = vadd.f32 %v2367, %v2399
        %v2432 = vadd.f32 %v2368, %v2400
        %v2433 = vadd.f32 %v2369, %v2401
        %v2434 = vadd.f32 %v2370, %v2402
        %v2435 = vadd.f32 %v2371, %v2403
        %v2436 = vadd.f32 %v2372, %v2404
        %v2437 = vadd.f32 %v2373, %v2405
        %v2438 = vadd.f32 %v2374, %v2406
        %v2439 = vadd.f32 %v2375, %v2407
        %v2440 = vadd.f32 %v2376, %v2408
        %v2441 = vadd.f32 %v2377, %v2409
        %v2442 = vadd.f32 %v2378, %v2410
        %v2443 = vadd.f32 %v2379, %v2411
        %v2444 = vadd.f32 %v2380, %v2412
        %v2445 = vadd.f32 %v2381, %v2413
        %v2446 = vadd.f32 %v2382, %v2414
        %v2447 = vadd.f32 %v2383, %v2415
        %v2448 = vadd.f32 %v2384, %v2416
        %v2449 = vadd.f32 %v2385, %v2417
        %v2450 = vadd.f32 %v2386, %v2418
        %v2451 = vadd.f32 %v2387, %v2419
        %v2452 = vadd.f32 %v2388, %v2420
        %v2453 = vadd.f32 %v2389, %v2421
        %v2454 = vadd.f32 %v2390, %v2422
        %v2455 = vadd.f32 %v2391, %v2423
        %v2456 = vmul.f32 %v180, -0.43501925
        %v2457 = vmul.f32 %v181, -0.43501925
        %v2458 = vmul.f32 %v182, -0.43501925
        %v2459 = vmul.f32 %v183, -0.43501925
        %v2460 = vmul.f32 %v184, -0.43501925
        %v2461 = vmul.f32 %v185, -0.43501925
        %v2462 = vmul.f32 %v186, -0.43501925
        %v2463 = vmul.f32 %v187, -0.43501925
        %v2464 = vmul.f32 %v188, -0.43501925
        %v2465 = vmul.f32 %v189, -0.43501925
        %v2466 = vmul.f32 %v190, -0.43501925
        %v2467 = vmul.f32 %v191, -0.43501925
        %v2468 = vmul.f32 %v192, -0.43501925
        %v2469 = vmul.f32 %v193, -0.43501925
        %v2470 = vmul.f32 %v194, -0.43501925
        %v2471 = vmul.f32 %v195, -0.43501925
        %v2472 = vmul.f32 %v196, -0.43501925
        %v2473 = vmul.f32 %v197, -0.43501925
        %v2474 = vmul.f32 %v198, -0.43501925
        %v2475 = vmul.f32 %v199, -0.43501925
        %v2476 = vmul.f32 %v200, -0.43501925
        %v2477 = vmul.f32 %v201, -0.43501925
        %v2478 = vmul.f32 %v202, -0.43501925
        %v2479 = vmul.f32 %v203, -0.43501925
        %v2480 = vmul.f32 %v204, -0.43501925
        %v2481 = vmul.f32 %v205, -0.43501925
        %v2482 = vmul.f32 %v206, -0.43501925
        %v2483 = vmul.f32 %v207, -0.43501925
        %v2484 = vmul.f32 %v208, -0.43501925
        %v2485 = vmul.f32 %v209, -0.43501925
        %v2486 = vmul.f32 %v210, -0.43501925
        %v2487 = vmul.f32 %v211, -0.43501925
        %v2488 = vadd.f32 %v2424, %v2456
        %v2489 = vadd.f32 %v2425, %v2457
        %v2490 = vadd.f32 %v2426, %v2458
        %v2491 = vadd.f32 %v2427, %v2459
        %v2492 = vadd.f32 %v2428, %v2460
        %v2493 = vadd.f32 %v2429, %v2461
        %v2494 = vadd.f32 %v2430, %v2462
        %v2495 = vadd.f32 %v2431, %v2463
        %v2496 = vadd.f32 %v2432, %v2464
        %v2497 = vadd.f32 %v2433, %v2465
        %v2498 = vadd.f32 %v2434, %v2466
        %v2499 = vadd.f32 %v2435, %v2467
        %v2500 = vadd.f32 %v2436, %v2468
        %v2501 = vadd.f32 %v2437, %v2469
        %v2502 = vadd.f32 %v2438, %v2470
        %v2503 = vadd.f32 %v2439, %v2471
        %v2504 = vadd.f32 %v2440, %v2472
        %v2505 = vadd.f32 %v2441, %v2473
        %v2506 = vadd.f32 %v2442, %v2474
        %v2507 = vadd.f32 %v2443, %v2475
        %v2508 = vadd.f32 %v2444, %v2476
        %v2509 = vadd.f32 %v2445, %v2477
        %v2510 = vadd.f32 %v2446, %v2478
        %v2511 = vadd.f32 %v2447, %v2479
        %v2512 = vadd.f32 %v2448, %v2480
        %v2513 = vadd.f32 %v2449, %v2481
        %v2514 = vadd.f32 %v2450, %v2482
        %v2515 = vadd.f32 %v2451, %v2483
        %v2516 = vadd.f32 %v2452, %v2484
        %v2517 = vadd.f32 %v2453, %v2485
        %v2518 = vadd.f32 %v2454, %v2486
        %v2519 = vadd.f32 %v2455, %v2487
        %v2552 = vrot.slane %v2488, 1
        %v2553 = vrot.slane %v2488, 2
        %v2554 = vrot.slane %v2488, 3
        %v2555 = vrot.slane %v2488, 4
        %v2556 = vrot.slane %v2488, 5
        %v2557 = vrot.slane %v2488, 6
        %v2558 = vrot.slane %v2488, 7
        %v2559 = vrot.slane %v2489, 1
        %v2560 = vrot.slane %v2489, 2
        %v2561 = vrot.slane %v2489, 3
        %v2562 = vrot.slane %v2489, 4
        %v2563 = vrot.slane %v2489, 5
        %v2564 = vrot.slane %v2489, 6
        %v2565 = vrot.slane %v2489, 7
        %v2566 = vrot.slane %v2490, 1
        %v2567 = vrot.slane %v2490, 2
        %v2568 = vrot.slane %v2490, 3
        %v2569 = vrot.slane %v2490, 4
        %v2570 = vrot.slane %v2490, 5
        %v2571 = vrot.slane %v2490, 6
        %v2572 = vrot.slane %v2490, 7
        %v2573 = vrot.slane %v2491, 1
        %v2574 = vrot.slane %v2491, 2
        %v2575 = vrot.slane %v2491, 3
        %v2576 = vrot.slane %v2491, 4
        %v2577 = vrot.slane %v2491, 5
        %v2578 = vrot.slane %v2491, 6
        %v2579 = vrot.slane %v2491, 7
        %v2580 = vrot.slane %v2492, 1
        %v2581 = vrot.slane %v2492, 2
        %v2582 = vrot.slane %v2492, 3
        %v2583 = vrot.slane %v2492, 4
        %v2584 = vrot.slane %v2492, 5
        %v2585 = vrot.slane %v2492, 6
        %v2586 = vrot.slane %v2492, 7
        %v2587 = vrot.slane %v2493, 1
        %v2588 = vrot.slane %v2493, 2
        %v2589 = vrot.slane %v2493, 3
        %v2590 = vrot.slane %v2493, 4
        %v2591 = vrot.slane %v2493, 5
        %v2592 = vrot.slane %v2493, 6
        %v2593 = vrot.slane %v2493, 7
        %v2594 = vrot.slane %v2494, 1
        %v2595 = vrot.slane %v2494, 2
        %v2596 = vrot.slane %v2494, 3
        %v2597 = vrot.slane %v2494, 4
        %v2598 = vrot.slane %v2494, 5
        %v2599 = vrot.slane %v2494, 6
        %v2600 = vrot.slane %v2494, 7
        %v2601 = vrot.slane %v2495, 1
        %v2602 = vrot.slane %v2495, 2
        %v2603 = vrot.slane %v2495, 3
        %v2604 = vrot.slane %v2495, 4
        %v2605 = vrot.slane %v2495, 5
        %v2606 = vrot.slane %v2495, 6
        %v2607 = vrot.slane %v2495, 7
        %v2608 = vrot.slane %v2496, 1
        %v2609 = vrot.slane %v2496, 2
        %v2610 = vrot.slane %v2496, 3
        %v2611 = vrot.slane %v2496, 4
        %v2612 = vrot.slane %v2496, 5
        %v2613 = vrot.slane %v2496, 6
        %v2614 = vrot.slane %v2496, 7
        %v2615 = vrot.slane %v2497, 1
        %v2616 = vrot.slane %v2497, 2
        %v2617 = vrot.slane %v2497, 3
        %v2618 = vrot.slane %v2497, 4
        %v2619 = vrot.slane %v2497, 5
        %v2620 = vrot.slane %v2497, 6
        %v2621 = vrot.slane %v2497, 7
        %v2622 = vrot.slane %v2498, 1
        %v2623 = vrot.slane %v2498, 2
        %v2624 = vrot.slane %v2498, 3
        %v2625 = vrot.slane %v2498, 4
        %v2626 = vrot.slane %v2498, 5
        %v2627 = vrot.slane %v2498, 6
        %v2628 = vrot.slane %v2498, 7
        %v2629 = vrot.slane %v2499, 1
        %v2630 = vrot.slane %v2499, 2
        %v2631 = vrot.slane %v2499, 3
        %v2632 = vrot.slane %v2499, 4
        %v2633 = vrot.slane %v2499, 5
        %v2634 = vrot.slane %v2499, 6
        %v2635 = vrot.slane %v2499, 7
        %v2636 = vrot.slane %v2500, 1
        %v2637 = vrot.slane %v2500, 2
        %v2638 = vrot.slane %v2500, 3
        %v2639 = vrot.slane %v2500, 4
        %v2640 = vrot.slane %v2500, 5
        %v2641 = vrot.slane %v2500, 6
        %v2642 = vrot.slane %v2500, 7
        %v2643 = vrot.slane %v2501, 1
        %v2644 = vrot.slane %v2501, 2
        %v2645 = vrot.slane %v2501, 3
        %v2646 = vrot.slane %v2501, 4
        %v2647 = vrot.slane %v2501, 5
        %v2648 = vrot.slane %v2501, 6
        %v2649 = vrot.slane %v2501, 7
        %v2650 = vrot.slane %v2502, 1
        %v2651 = vrot.slane %v2502, 2
        %v2652 = vrot.slane %v2502, 3
        %v2653 = vrot.slane %v2502, 4
        %v2654 = vrot.slane %v2502, 5
        %v2655 = vrot.slane %v2502, 6
        %v2656 = vrot.slane %v2502, 7
        %v2657 = vrot.slane %v2503, 1
        %v2658 = vrot.slane %v2503, 2
        %v2659 = vrot.slane %v2503, 3
        %v2660 = vrot.slane %v2503, 4
        %v2661 = vrot.slane %v2503, 5
        %v2662 = vrot.slane %v2503, 6
        %v2663 = vrot.slane %v2503, 7
        %v2664 = vrot.slane %v2504, 1
        %v2665 = vrot.slane %v2504, 2
        %v2666 = vrot.slane %v2504, 3
        %v2667 = vrot.slane %v2504, 4
        %v2668 = vrot.slane %v2504, 5
        %v2669 = vrot.slane %v2504, 6
        %v2670 = vrot.slane %v2504, 7
        %v2671 = vrot.slane %v2505, 1
        %v2672 = vrot.slane %v2505, 2
        %v2673 = vrot.slane %v2505, 3
        %v2674 = vrot.slane %v2505, 4
        %v2675 = vrot.slane %v2505, 5
        %v2676 = vrot.slane %v2505, 6
        %v2677 = vrot.slane %v2505, 7
        %v2678 = vrot.slane %v2506, 1
        %v2679 = vrot.slane %v2506, 2
        %v2680 = vrot.slane %v2506, 3
        %v2681 = vrot.slane %v2506, 4
        %v2682 = vrot.slane %v2506, 5
        %v2683 = vrot.slane %v2506, 6
        %v2684 = vrot.slane %v2506, 7
        %v2685 = vrot.slane %v2507, 1
        %v2686 = vrot.slane %v2507, 2
        %v2687 = vrot.slane %v2507, 3
        %v2688 = vrot.slane %v2507, 4
        %v2689 = vrot.slane %v2507, 5
        %v2690 = vrot.slane %v2507, 6
        %v2691 = vrot.slane %v2507, 7
        %v2692 = vrot.slane %v2508, 1
        %v2693 = vrot.slane %v2508, 2
        %v2694 = vrot.slane %v2508, 3
        %v2695 = vrot.slane %v2508, 4
        %v2696 = vrot.slane %v2508, 5
        %v2697 = vrot.slane %v2508, 6
        %v2698 = vrot.slane %v2508, 7
        %v2699 = vrot.slane %v2509, 1
        %v2700 = vrot.slane %v2509, 2
        %v2701 = vrot.slane %v2509, 3
        %v2702 = vrot.slane %v2509, 4
        %v2703 = vrot.slane %v2509, 5
        %v2704 = vrot.slane %v2509, 6
        %v2705 = vrot.slane %v2509, 7
        %v2706 = vrot.slane %v2510, 1
        %v2707 = vrot.slane %v2510, 2
        %v2708 = vrot.slane %v2510, 3
        %v2709 = vrot.slane %v2510, 4
        %v2710 = vrot.slane %v2510, 5
        %v2711 = vrot.slane %v2510, 6
        %v2712 = vrot.slane %v2510, 7
        %v2713 = vrot.slane %v2511, 1
        %v2714 = vrot.slane %v2511, 2
        %v2715 = vrot.slane %v2511, 3
        %v2716 = vrot.slane %v2511, 4
        %v2717 = vrot.slane %v2511, 5
        %v2718 = vrot.slane %v2511, 6
        %v2719 = vrot.slane %v2511, 7
        %v2720 = vrot.slane %v2512, 1
        %v2721 = vrot.slane %v2512, 2
        %v2722 = vrot.slane %v2512, 3
        %v2723 = vrot.slane %v2512, 4
        %v2724 = vrot.slane %v2512, 5
        %v2725 = vrot.slane %v2512, 6
        %v2726 = vrot.slane %v2512, 7
        %v2727 = vrot.slane %v2513, 1
        %v2728 = vrot.slane %v2513, 2
        %v2729 = vrot.slane %v2513, 3
        %v2730 = vrot.slane %v2513, 4
        %v2731 = vrot.slane %v2513, 5
        %v2732 = vrot.slane %v2513, 6
        %v2733 = vrot.slane %v2513, 7
        %v2734 = vrot.slane %v2514, 1
        %v2735 = vrot.slane %v2514, 2
        %v2736 = vrot.slane %v2514, 3
        %v2737 = vrot.slane %v2514, 4
        %v2738 = vrot.slane %v2514, 5
        %v2739 = vrot.slane %v2514, 6
        %v2740 = vrot.slane %v2514, 7
        %v2741 = vrot.slane %v2515, 1
        %v2742 = vrot.slane %v2515, 2
        %v2743 = vrot.slane %v2515, 3
        %v2744 = vrot.slane %v2515, 4
        %v2745 = vrot.slane %v2515, 5
        %v2746 = vrot.slane %v2515, 6
        %v2747 = vrot.slane %v2515, 7
        %v2748 = vrot.slane %v2516, 1
        %v2749 = vrot.slane %v2516, 2
        %v2750 = vrot.slane %v2516, 3
        %v2751 = vrot.slane %v2516, 4
        %v2752 = vrot.slane %v2516, 5
        %v2753 = vrot.slane %v2516, 6
        %v2754 = vrot.slane %v2516, 7
        %v2755 = vrot.slane %v2517, 1
        %v2756 = vrot.slane %v2517, 2
        %v2757 = vrot.slane %v2517, 3
        %v2758 = vrot.slane %v2517, 4
        %v2759 = vrot.slane %v2517, 5
        %v2760 = vrot.slane %v2517, 6
        %v2761 = vrot.slane %v2517, 7
        %v2762 = vrot.slane %v2518, 1
        %v2763 = vrot.slane %v2518, 2
        %v2764 = vrot.slane %v2518, 3
        %v2765 = vrot.slane %v2518, 4
        %v2766 = vrot.slane %v2518, 5
        %v2767 = vrot.slane %v2518, 6
        %v2768 = vrot.slane %v2518, 7
        %v2769 = vrot.slane %v2519, 1
        %v2770 = vrot.slane %v2519, 2
        %v2771 = vrot.slane %v2519, 3
        %v2772 = vrot.slane %v2519, 4
        %v2773 = vrot.slane %v2519, 5
        %v2774 = vrot.slane %v2519, 6
        %v2775 = vrot.slane %v2519, 7
        %3000 = vst [vmem:[%s179 + $0x2] sm:$0x1] %v2488
        %3001 = vst [vmem:[%s179 + $0x6] sm:$0x1] %v2552
        %3002 = vst [vmem:[%s179 + $0xa] sm:$0x1] %v2553
        %3003 = vst [vmem:[%s179 + $0xe] sm:$0x1] %v2554
        %3004 = vst [vmem:[%s179 + $0x12] sm:$0x1] %v2555
        %3005 = vst [vmem:[%s179 + $0x16] sm:$0x1] %v2556
        %3006 = vst [vmem:[%s179 + $0x1a] sm:$0x1] %v2557
        %3007 = vst [vmem:[%s179 + $0x1e] sm:$0x1] %v2558
        %3008 = vst [vmem:[%s179 + $0x22] sm:$0x1] %v2489
        %3009 = vst [vmem:[%s179 + $0x26] sm:$0x1] %v2559
        %3010 = vst [vmem:[%s179 + $0x2a] sm:$0x1] %v2560
        %3011 = vst [vmem:[%s179 + $0x2e] sm:$0x1] %v2561
        %3012 = vst [vmem:[%s179 + $0x32] sm:$0x1] %v2562
        %3013 = vst [vmem:[%s179 + $0x36] sm:$0x1] %v2563
        %3014 = vst [vmem:[%s179 + $0x3a] sm:$0x1] %v2564
        %3015 = vst [vmem:[%s179 + $0x3e] sm:$0x1] %v2565
        %3016 = vst [vmem:[%s179 + $0x42] sm:$0x1] %v2490
        %3017 = vst [vmem:[%s179 + $0x46] sm:$0x1] %v2566
        %3018 = vst [vmem:[%s179 + $0x4a] sm:$0x1] %v2567
        %3019 = vst [vmem:[%s179 + $0x4e] sm:$0x1] %v2568
        %3020 = vst [vmem:[%s179 + $0x52] sm:$0x1] %v2569
        %3021 = vst [vmem:[%s179 + $0x56] sm:$0x1] %v2570
        %3022 = vst [vmem:[%s179 + $0x5a] sm:$0x1] %v2571
        %3023 = vst [vmem:[%s179 + $0x5e] sm:$0x1] %v2572
        %3024 = vst [vmem:[%s179 + $0x62] sm:$0x1] %v2491
        %3025 = vst [vmem:[%s179 + $0x66] sm:$0x1] %v2573
        %3026 = vst [vmem:[%s179 + $0x6a] sm:$0x1] %v2574
        %3027 = vst [vmem:[%s179 + $0x6e] sm:$0x1] %v2575
        %3028 = vst [vmem:[%s179 + $0x72] sm:$0x1] %v2576
        %3029 = vst [vmem:[%s179 + $0x76] sm:$0x1] %v2577
        %3030 = vst [vmem:[%s179 + $0x7a] sm:$0x1] %v2578
        %3031 = vst [vmem:[%s179 + $0x7e] sm:$0x1] %v2579
        %3032 = vst [vmem:[%s179 + $0x82] sm:$0x1] %v2492
        %3033 = vst [vmem:[%s179 + $0x86] sm:$0x1] %v2580
        %3034 = vst [vmem:[%s179 + $0x8a] sm:$0x1] %v2581
        %3035 = vst [vmem:[%s179 + $0x8e] sm:$0x1] %v2582
        %3036 = vst [vmem:[%s179 + $0x92] sm:$0x1] %v2583
        %3037 = vst [vmem:[%s179 + $0x96] sm:$0x1] %v2584
        %3038 = vst [vmem:[%s179 + $0x9a] sm:$0x1] %v2585
        %3039 = vst [vmem:[%s179 + $0x9e] sm:$0x1] %v2586
        %3040 = vst [vmem:[%s179 + $0xa2] sm:$0x1] %v2493
        %3041 = vst [vmem:[%s179 + $0xa6] sm:$0x1] %v2587
        %3042 = vst [vmem:[%s179 + $0xaa] sm:$0x1] %v2588
        %3043 = vst [vmem:[%s179 + $0xae] sm:$0x1] %v2589
        %3044 = vst [vmem:[%s179 + $0xb2] sm:$0x1] %v2590
        %3045 = vst [vmem:[%s179 + $0xb6] sm:$0x1] %v2591
        %3046 = vst [vmem:[%s179 + $0xba] sm:$0x1] %v2592
        %3047 = vst [vmem:[%s179 + $0xbe] sm:$0x1] %v2593
        %3048 = vst [vmem:[%s179 + $0xc2] sm:$0x1] %v2494
        %3049 = vst [vmem:[%s179 + $0xc6] sm:$0x1] %v2594
        %3050 = vst [vmem:[%s179 + $0xca] sm:$0x1] %v2595
        %3051 = vst [vmem:[%s179 + $0xce] sm:$0x1] %v2596
        %3052 = vst [vmem:[%s179 + $0xd2] sm:$0x1] %v2597
        %3053 = vst [vmem:[%s179 + $0xd6] sm:$0x1] %v2598
        %3054 = vst [vmem:[%s179 + $0xda] sm:$0x1] %v2599
        %3055 = vst [vmem:[%s179 + $0xde] sm:$0x1] %v2600
        %3056 = vst [vmem:[%s179 + $0xe2] sm:$0x1] %v2495
        %3057 = vst [vmem:[%s179 + $0xe6] sm:$0x1] %v2601
        %3058 = vst [vmem:[%s179 + $0xea] sm:$0x1] %v2602
        %3059 = vst [vmem:[%s179 + $0xee] sm:$0x1] %v2603
        %3060 = vst [vmem:[%s179 + $0xf2] sm:$0x1] %v2604
        %3061 = vst [vmem:[%s179 + $0xf6] sm:$0x1] %v2605
        %3062 = vst [vmem:[%s179 + $0xfa] sm:$0x1] %v2606
        %3063 = vst [vmem:[%s179 + $0xfe] sm:$0x1] %v2607
        %3064 = vst [vmem:[%s179 + $0x102] sm:$0x1] %v2496
        %3065 = vst [vmem:[%s179 + $0x106] sm:$0x1] %v2608
        %3066 = vst [vmem:[%s179 + $0x10a] sm:$0x1] %v2609
        %3067 = vst [vmem:[%s179 + $0x10e] sm:$0x1] %v2610
        %3068 = vst [vmem:[%s179 + $0x112] sm:$0x1] %v2611
        %3069 = vst [vmem:[%s179 + $0x116] sm:$0x1] %v2612
        %3070 = vst [vmem:[%s179 + $0x11a] sm:$0x1] %v2613
        %3071 = vst [vmem:[%s179 + $0x11e] sm:$0x1] %v2614
        %3072 = vst [vmem:[%s179 + $0x122] sm:$0x1] %v2497
        %3073 = vst [vmem:[%s179 + $0x126] sm:$0x1] %v2615
        %3074 = vst [vmem:[%s179 + $0x12a] sm:$0x1] %v2616
        %3075 = vst [vmem:[%s179 + $0x12e] sm:$0x1] %v2617
        %3076 = vst [vmem:[%s179 + $0x132] sm:$0x1] %v2618
        %3077 = vst [vmem:[%s179 + $0x136] sm:$0x1] %v2619
        %3078 = vst [vmem:[%s179 + $0x13a] sm:$0x1] %v2620
        %3079 = vst [vmem:[%s179 + $0x13e] sm:$0x1] %v2621
        %3080 = vst [vmem:[%s179 + $0x142] sm:$0x1] %v2498
        %3081 = vst [vmem:[%s179 + $0x146] sm:$0x1] %v2622
        %3082 = vst [vmem:[%s179 + $0x14a] sm:$0x1] %v2623
        %3083 = vst [vmem:[%s179 + $0x14e] sm:$0x1] %v2624
        %3084 = vst [vmem:[%s179 + $0x152] sm:$0x1] %v2625
        %3085 = vst [vmem:[%s179 + $0x156] sm:$0x1] %v2626
        %3086 = vst [vmem:[%s179 + $0x15a] sm:$0x1] %v2627
        %3087 = vst [vmem:[%s179 + $0x15e] sm:$0x1] %v2628
        %3088 = vst [vmem:[%s179 + $0x162] sm:$0x1] %v2499
        %3089 = vst [vmem:[%s179 + $0x166] sm:$0x1] %v2629
        %3090 = vst [vmem:[%s179 + $0x16a] sm:$0x1] %v2630
        %3091 = vst [vmem:[%s179 + $0x16e] sm:$0x1] %v2631
        %3092 = vst [vmem:[%s179 + $0x172] sm:$0x1] %v2632
        %3093 = vst [vmem:[%s179 + $0x176] sm:$0x1] %v2633
        %3094 = vst [vmem:[%s179 + $0x17a] sm:$0x1] %v2634
        %3095 = vst [vmem:[%s179 + $0x17e] sm:$0x1] %v2635
        %3096 = vst [vmem:[%s179 + $0x182] sm:$0x1] %v2500
        %3097 = vst [vmem:[%s179 + $0x186] sm:$0x1] %v2636
        %3098 = vst [vmem:[%s179 + $0x18a] sm:$0x1] %v2637
        %3099 = vst [vmem:[%s179 + $0x18e] sm:$0x1] %v2638
        %3100 = vst [vmem:[%s179 + $0x192] sm:$0x1] %v2639
        %3101 = vst [vmem:[%s179 + $0x196] sm:$0x1] %v2640
        %3102 = vst [vmem:[%s179 + $0x19a] sm:$0x1] %v2641
        %3103 = vst [vmem:[%s179 + $0x19e] sm:$0x1] %v2642
        %3104 = vst [vmem:[%s179 + $0x1a2] sm:$0x1] %v2501
        %3105 = vst [vmem:[%s179 + $0x1a6] sm:$0x1] %v2643
        %3106 = vst [vmem:[%s179 + $0x1aa] sm:$0x1] %v2644
        %3107 = vst [vmem:[%s179 + $0x1ae] sm:$0x1] %v2645
        %3108 = vst [vmem:[%s179 + $0x1b2] sm:$0x1] %v2646
        %3109 = vst [vmem:[%s179 + $0x1b6] sm:$0x1] %v2647
        %3110 = vst [vmem:[%s179 + $0x1ba] sm:$0x1] %v2648
        %3111 = vst [vmem:[%s179 + $0x1be] sm:$0x1] %v2649
        %3112 = vst [vmem:[%s179 + $0x1c2] sm:$0x1] %v2502
        %3113 = vst [vmem:[%s179 + $0x1c6] sm:$0x1] %v2650
        %3114 = vst [vmem:[%s179 + $0x1ca] sm:$0x1] %v2651
        %3115 = vst [vmem:[%s179 + $0x1ce] sm:$0x1] %v2652
        %3116 = vst [vmem:[%s179 + $0x1d2] sm:$0x1] %v2653
        %3117 = vst [vmem:[%s179 + $0x1d6] sm:$0x1] %v2654
        %3118 = vst [vmem:[%s179 + $0x1da] sm:$0x1] %v2655
        %3119 = vst [vmem:[%s179 + $0x1de] sm:$0x1] %v2656
        %3120 = vst [vmem:[%s179 + $0x1e2] sm:$0x1] %v2503
        %3121 = vst [vmem:[%s179 + $0x1e6] sm:$0x1] %v2657
        %3122 = vst [vmem:[%s179 + $0x1ea] sm:$0x1] %v2658
        %3123 = vst [vmem:[%s179 + $0x1ee] sm:$0x1] %v2659
        %3124 = vst [vmem:[%s179 + $0x1f2] sm:$0x1] %v2660
        %3125 = vst [vmem:[%s179 + $0x1f6] sm:$0x1] %v2661
        %3126 = vst [vmem:[%s179 + $0x1fa] sm:$0x1] %v2662
        %3127 = vst [vmem:[%s179 + $0x1fe] sm:$0x1] %v2663
        %3128 = vst [vmem:[%s179 + $0x202] sm:$0x1] %v2504
        %3129 = vst [vmem:[%s179 + $0x206] sm:$0x1] %v2664
        %3130 = vst [vmem:[%s179 + $0x20a] sm:$0x1] %v2665
        %3131 = vst [vmem:[%s179 + $0x20e] sm:$0x1] %v2666
        %3132 = vst [vmem:[%s179 + $0x212] sm:$0x1] %v2667
        %3133 = vst [vmem:[%s179 + $0x216] sm:$0x1] %v2668
        %3134 = vst [vmem:[%s179 + $0x21a] sm:$0x1] %v2669
        %3135 = vst [vmem:[%s179 + $0x21e] sm:$0x1] %v2670
        %3136 = vst [vmem:[%s179 + $0x222] sm:$0x1] %v2505
        %3137 = vst [vmem:[%s179 + $0x226] sm:$0x1] %v2671
        %3138 = vst [vmem:[%s179 + $0x22a] sm:$0x1] %v2672
        %3139 = vst [vmem:[%s179 + $0x22e] sm:$0x1] %v2673
        %3140 = vst [vmem:[%s179 + $0x232] sm:$0x1] %v2674
        %3141 = vst [vmem:[%s179 + $0x236] sm:$0x1] %v2675
        %3142 = vst [vmem:[%s179 + $0x23a] sm:$0x1] %v2676
        %3143 = vst [vmem:[%s179 + $0x23e] sm:$0x1] %v2677
        %3144 = vst [vmem:[%s179 + $0x242] sm:$0x1] %v2506
        %3145 = vst [vmem:[%s179 + $0x246] sm:$0x1] %v2678
        %3146 = vst [vmem:[%s179 + $0x24a] sm:$0x1] %v2679
        %3147 = vst [vmem:[%s179 + $0x24e] sm:$0x1] %v2680
        %3148 = vst [vmem:[%s179 + $0x252] sm:$0x1] %v2681
        %3149 = vst [vmem:[%s179 + $0x256] sm:$0x1] %v2682
        %3150 = vst [vmem:[%s179 + $0x25a] sm:$0x1] %v2683
        %3151 = vst [vmem:[%s179 + $0x25e] sm:$0x1] %v2684
        %3152 = vst [vmem:[%s179 + $0x262] sm:$0x1] %v2507
        %3153 = vst [vmem:[%s179 + $0x266] sm:$0x1] %v2685
        %3154 = vst [vmem:[%s179 + $0x26a] sm:$0x1] %v2686
        %3155 = vst [vmem:[%s179 + $0x26e] sm:$0x1] %v2687
        %3156 = vst [vmem:[%s179 + $0x272] sm:$0x1] %v2688
        %3157 = vst [vmem:[%s179 + $0x276] sm:$0x1] %v2689
        %3158 = vst [vmem:[%s179 + $0x27a] sm:$0x1] %v2690
        %3159 = vst [vmem:[%s179 + $0x27e] sm:$0x1] %v2691
        %3160 = vst [vmem:[%s179 + $0x282] sm:$0x1] %v2508
        %3161 = vst [vmem:[%s179 + $0x286] sm:$0x1] %v2692
        %3162 = vst [vmem:[%s179 + $0x28a] sm:$0x1] %v2693
        %3163 = vst [vmem:[%s179 + $0x28e] sm:$0x1] %v2694
        %3164 = vst [vmem:[%s179 + $0x292] sm:$0x1] %v2695
        %3165 = vst [vmem:[%s179 + $0x296] sm:$0x1] %v2696
        %3166 = vst [vmem:[%s179 + $0x29a] sm:$0x1] %v2697
        %3167 = vst [vmem:[%s179 + $0x29e] sm:$0x1] %v2698
        %3168 = vst [vmem:[%s179 + $0x2a2] sm:$0x1] %v2509
        %3169 = vst [vmem:[%s179 + $0x2a6] sm:$0x1] %v2699
        %3170 = vst [vmem:[%s179 + $0x2aa] sm:$0x1] %v2700
        %3171 = vst [vmem:[%s179 + $0x2ae] sm:$0x1] %v2701
        %3172 = vst [vmem:[%s179 + $0x2b2] sm:$0x1] %v2702
        %3173 = vst [vmem:[%s179 + $0x2b6] sm:$0x1] %v2703
        %3174 = vst [vmem:[%s179 + $0x2ba] sm:$0x1] %v2704
        %3175 = vst [vmem:[%s179 + $0x2be] sm:$0x1] %v2705
        %3176 = vst [vmem:[%s179 + $0x2c2] sm:$0x1] %v2510
        %3177 = vst [vmem:[%s179 + $0x2c6] sm:$0x1] %v2706
        %3178 = vst [vmem:[%s179 + $0x2ca] sm:$0x1] %v2707
        %3179 = vst [vmem:[%s179 + $0x2ce] sm:$0x1] %v2708
        %3180 = vst [vmem:[%s179 + $0x2d2] sm:$0x1] %v2709
        %3181 = vst [vmem:[%s179 + $0x2d6] sm:$0x1] %v2710
        %3182 = vst [vmem:[%s179 + $0x2da] sm:$0x1] %v2711
        %3183 = vst [vmem:[%s179 + $0x2de] sm:$0x1] %v2712
        %3184 = vst [vmem:[%s179 + $0x2e2] sm:$0x1] %v2511
        %3185 = vst [vmem:[%s179 + $0x2e6] sm:$0x1] %v2713
        %3186 = vst [vmem:[%s179 + $0x2ea] sm:$0x1] %v2714
        %3187 = vst [vmem:[%s179 + $0x2ee] sm:$0x1] %v2715
        %3188 = vst [vmem:[%s179 + $0x2f2] sm:$0x1] %v2716
        %3189 = vst [vmem:[%s179 + $0x2f6] sm:$0x1] %v2717
        %3190 = vst [vmem:[%s179 + $0x2fa] sm:$0x1] %v2718
        %3191 = vst [vmem:[%s179 + $0x2fe] sm:$0x1] %v2719
        %3192 = vst [vmem:[%s179 + $0x302] sm:$0x1] %v2512
        %3193 = vst [vmem:[%s179 + $0x306] sm:$0x1] %v2720
        %3194 = vst [vmem:[%s179 + $0x30a] sm:$0x1] %v2721
        %3195 = vst [vmem:[%s179 + $0x30e] sm:$0x1] %v2722
        %3196 = vst [vmem:[%s179 + $0x312] sm:$0x1] %v2723
        %3197 = vst [vmem:[%s179 + $0x316] sm:$0x1] %v2724
        %3198 = vst [vmem:[%s179 + $0x31a] sm:$0x1] %v2725
        %3199 = vst [vmem:[%s179 + $0x31e] sm:$0x1] %v2726
        %3200 = vst [vmem:[%s179 + $0x322] sm:$0x1] %v2513
        %3201 = vst [vmem:[%s179 + $0x326] sm:$0x1] %v2727
        %3202 = vst [vmem:[%s179 + $0x32a] sm:$0x1] %v2728
        %3203 = vst [vmem:[%s179 + $0x32e] sm:$0x1] %v2729
        %3204 = vst [vmem:[%s179 + $0x332] sm:$0x1] %v2730
        %3205 = vst [vmem:[%s179 + $0x336] sm:$0x1] %v2731
        %3206 = vst [vmem:[%s179 + $0x33a] sm:$0x1] %v2732
        %3207 = vst [vmem:[%s179 + $0x33e] sm:$0x1] %v2733
        %3208 = vst [vmem:[%s179 + $0x342] sm:$0x1] %v2514
        %3209 = vst [vmem:[%s179 + $0x346] sm:$0x1] %v2734
        %3210 = vst [vmem:[%s179 + $0x34a] sm:$0x1] %v2735
        %3211 = vst [vmem:[%s179 + $0x34e] sm:$0x1] %v2736
        %3212 = vst [vmem:[%s179 + $0x352] sm:$0x1] %v2737
        %3213 = vst [vmem:[%s179 + $0x356] sm:$0x1] %v2738
        %3214 = vst [vmem:[%s179 + $0x35a] sm:$0x1] %v2739
        %3215 = vst [vmem:[%s179 + $0x35e] sm:$0x1] %v2740
        %3216 = vst [vmem:[%s179 + $0x362] sm:$0x1] %v2515
        %3217 = vst [vmem:[%s179 + $0x366] sm:$0x1] %v2741
        %3218 = vst [vmem:[%s179 + $0x36a] sm:$0x1] %v2742
        %3219 = vst [vmem:[%s179 + $0x36e] sm:$0x1] %v2743
        %3220 = vst [vmem:[%s179 + $0x372] sm:$0x1] %v2744
        %3221 = vst [vmem:[%s179 + $0x376] sm:$0x1] %v2745
        %3222 = vst [vmem:[%s179 + $0x37a] sm:$0x1] %v2746
        %3223 = vst [vmem:[%s179 + $0x37e] sm:$0x1] %v2747
        %3224 = vst [vmem:[%s179 + $0x382] sm:$0x1] %v2516
        %3225 = vst [vmem:[%s179 + $0x386] sm:$0x1] %v2748
        %3226 = vst [vmem:[%s179 + $0x38a] sm:$0x1] %v2749
        %3227 = vst [vmem:[%s179 + $0x38e] sm:$0x1] %v2750
        %3228 = vst [vmem:[%s179 + $0x392] sm:$0x1] %v2751
        %3229 = vst [vmem:[%s179 + $0x396] sm:$0x1] %v2752
        %3230 = vst [vmem:[%s179 + $0x39a] sm:$0x1] %v2753
        %3231 = vst [vmem:[%s179 + $0x39e] sm:$0x1] %v2754
        %3232 = vst [vmem:[%s179 + $0x3a2] sm:$0x1] %v2517
        %3233 = vst [vmem:[%s179 + $0x3a6] sm:$0x1] %v2755
        %3234 = vst [vmem:[%s179 + $0x3aa] sm:$0x1] %v2756
        %3235 = vst [vmem:[%s179 + $0x3ae] sm:$0x1] %v2757
        %3236 = vst [vmem:[%s179 + $0x3b2] sm:$0x1] %v2758
        %3237 = vst [vmem:[%s179 + $0x3b6] sm:$0x1] %v2759
        %3238 = vst [vmem:[%s179 + $0x3ba] sm:$0x1] %v2760
        %3239 = vst [vmem:[%s179 + $0x3be] sm:$0x1] %v2761
        %3240 = vst [vmem:[%s179 + $0x3c2] sm:$0x1] %v2518
        %3241 = vst [vmem:[%s179 + $0x3c6] sm:$0x1] %v2762
        %3242 = vst [vmem:[%s179 + $0x3ca] sm:$0x1] %v2763
        %3243 = vst [vmem:[%s179 + $0x3ce] sm:$0x1] %v2764
        %3244 = vst [vmem:[%s179 + $0x3d2] sm:$0x1] %v2765
        %3245 = vst [vmem:[%s179 + $0x3d6] sm:$0x1] %v2766
        %3246 = vst [vmem:[%s179 + $0x3da] sm:$0x1] %v2767
        %3247 = vst [vmem:[%s179 + $0x3de] sm:$0x1] %v2768
        %3248 = vst [vmem:[%s179 + $0x3e2] sm:$0x1] %v2519
        %3249 = vst [vmem:[%s179 + $0x3e6] sm:$0x1] %v2769
        %3250 = vst [vmem:[%s179 + $0x3ea] sm:$0x1] %v2770
        %3251 = vst [vmem:[%s179 + $0x3ee] sm:$0x1] %v2771
        %3252 = vst [vmem:[%s179 + $0x3f2] sm:$0x1] %v2772
        %3253 = vst [vmem:[%s179 + $0x3f6] sm:$0x1] %v2773
        %3254 = vst [vmem:[%s179 + $0x3fa] sm:$0x1] %v2774
        %3255 = vst [vmem:[%s179 + $0x3fe] sm:$0x1] %v2775
        %v3256 = vld [vmem:[#allocation2] sm:$0xff]
        %v3257 = vld [vmem:[#allocation2 + $0x8] sm:$0xff]
        %v3258 = vld [vmem:[#allocation2 + $0x10] sm:$0xff]
        %v3259 = vld [vmem:[#allocation2 + $0x18] sm:$0xff]
        %v3260 = vld [vmem:[#allocation2 + $0x20] sm:$0xff]
        %v3261 = vld [vmem:[#allocation2 + $0x28] sm:$0xff]
        %v3262 = vld [vmem:[#allocation2 + $0x30] sm:$0xff]
        %v3263 = vld [vmem:[#allocation2 + $0x38] sm:$0xff]
        %v3264 = vld [vmem:[#allocation2 + $0x40] sm:$0xff]
        %v3265 = vld [vmem:[#allocation2 + $0x48] sm:$0xff]
        %v3266 = vld [vmem:[#allocation2 + $0x50] sm:$0xff]
        %v3267 = vld [vmem:[#allocation2 + $0x58] sm:$0xff]
        %v3268 = vld [vmem:[#allocation2 + $0x60] sm:$0xff]
        %v3269 = vld [vmem:[#allocation2 + $0x68] sm:$0xff]
        %v3270 = vld [vmem:[#allocation2 + $0x70] sm:$0xff]
        %v3271 = vld [vmem:[#allocation2 + $0x78] sm:$0xff]
        %v3272 = vld [vmem:[#allocation2 + $0x80] sm:$0xff]
        %v3273 = vld [vmem:[#allocation2 + $0x88] sm:$0xff]
        %v3274 = vld [vmem:[#allocation2 + $0x90] sm:$0xff]
        %v3275 = vld [vmem:[#allocation2 + $0x98] sm:$0xff]
        %v3276 = vld [vmem:[#allocation2 + $0xa0] sm:$0xff]
        %v3277 = vld [vmem:[#allocation2 + $0xa8] sm:$0xff]
        %v3278 = vld [vmem:[#allocation2 + $0xb0] sm:$0xff]
        %v3279 = vld [vmem:[#allocation2 + $0xb8] sm:$0xff]
        %v3280 = vld [vmem:[#allocation2 + $0xc0] sm:$0xff]
        %v3281 = vld [vmem:[#allocation2 + $0xc8] sm:$0xff]
        %v3282 = vld [vmem:[#allocation2 + $0xd0] sm:$0xff]
        %v3283 = vld [vmem:[#allocation2 + $0xd8] sm:$0xff]
        %v3284 = vld [vmem:[#allocation2 + $0xe0] sm:$0xff]
        %v3285 = vld [vmem:[#allocation2 + $0xe8] sm:$0xff]
        %v3286 = vld [vmem:[#allocation2 + $0xf0] sm:$0xff]
        %v3287 = vld [vmem:[#allocation2 + $0xf8] sm:$0xff]
        %v3288 = vld [vmem:[#allocation2 + $0x100] sm:$0xff]
        %v3289 = vld [vmem:[#allocation2 + $0x108] sm:$0xff]
        %v3290 = vld [vmem:[#allocation2 + $0x110] sm:$0xff]
        %v3291 = vld [vmem:[#allocation2 + $0x118] sm:$0xff]
        %v3292 = vld [vmem:[#allocation2 + $0x120] sm:$0xff]
        %v3293 = vld [vmem:[#allocation2 + $0x128] sm:$0xff]
        %v3294 = vld [vmem:[#allocation2 + $0x130] sm:$0xff]
        %v3295 = vld [vmem:[#allocation2 + $0x138] sm:$0xff]
        %v3296 = vld [vmem:[#allocation2 + $0x140] sm:$0xff]
        %v3297 = vld [vmem:[#allocation2 + $0x148] sm:$0xff]
        %v3298 = vld [vmem:[#allocation2 + $0x150] sm:$0xff]
        %v3299 = vld [vmem:[#allocation2 + $0x158] sm:$0xff]
        %v3300 = vld [vmem:[#allocation2 + $0x160] sm:$0xff]
        %v3301 = vld [vmem:[#allocation2 + $0x168] sm:$0xff]
        %v3302 = vld [vmem:[#allocation2 + $0x170] sm:$0xff]
        %v3303 = vld [vmem:[#allocation2 + $0x178] sm:$0xff]
        %v3304 = vld [vmem:[#allocation2 + $0x180] sm:$0xff]
        %v3305 = vld [vmem:[#allocation2 + $0x188] sm:$0xff]
        %v3306 = vld [vmem:[#allocation2 + $0x190] sm:$0xff]
        %v3307 = vld [vmem:[#allocation2 + $0x198] sm:$0xff]
        %v3308 = vld [vmem:[#allocation2 + $0x1a0] sm:$0xff]
        %v3309 = vld [vmem:[#allocation2 + $0x1a8] sm:$0xff]
        %v3310 = vld [vmem:[#allocation2 + $0x1b0] sm:$0xff]
        %v3311 = vld [vmem:[#allocation2 + $0x1b8] sm:$0xff]
        %v3312 = vld [vmem:[#allocation2 + $0x1c0] sm:$0xff]
        %v3313 = vld [vmem:[#allocation2 + $0x1c8] sm:$0xff]
        %v3314 = vld [vmem:[#allocation2 + $0x1d0] sm:$0xff]
        %v3315 = vld [vmem:[#allocation2 + $0x1d8] sm:$0xff]
        %v3316 = vld [vmem:[#allocation2 + $0x1e0] sm:$0xff]
        %v3317 = vld [vmem:[#allocation2 + $0x1e8] sm:$0xff]
        %v3318 = vld [vmem:[#allocation2 + $0x1f0] sm:$0xff]
        %v3319 = vld [vmem:[#allocation2 + $0x1f8] sm:$0xff]
        %3320 = vmatpush.msra.mxu0 %v2503
        %3321 = vmatpush.msra.mxu0 %v2502
        %3322 = vmatpush.msra.mxu0 %v2501
        %3323 = vmatpush.msra.mxu0 %v2500
        %3324 = vmatpush.msra.mxu0 %v2499
        %3325 = vmatpush.msra.mxu0 %v2498
        %3326 = vmatpush.msra.mxu0 %v2497
        %3327 = vmatpush.msra.mxu0 %v2496
        %3328 = vmatpush.msra.mxu0 %v2495
        %3329 = vmatpush.msra.mxu0 %v2494
        %3330 = vmatpush.msra.mxu0 %v2493
        %3331 = vmatpush.msra.mxu0 %v2492
        %3332 = vmatpush.msra.mxu0 %v2491
        %3333 = vmatpush.msra.mxu0 %v2490
        %3334 = vmatpush.msra.mxu0 %v2489
        %3335 = vmatpush.msra.mxu0 %v2488
        %3336 = vmatmul.f32.gmra.mxu0 %v3256
        %v3337 = vpop.f32.mrf.mxu0
        %v3338 = vadd.f32 0.0, %v3337
        %3339 = vmatmul.f32.gmra.mxu0 %v3258
        %v3340 = vpop.f32.mrf.mxu0
        %v3341 = vadd.f32 0.0, %v3340
        %3342 = vmatmul.f32.gmra.mxu0 %v3260
        %v3343 = vpop.f32.mrf.mxu0
        %v3344 = vadd.f32 0.0, %v3343
        %3345 = vmatmul.f32.gmra.mxu0 %v3262
        %v3346 = vpop.f32.mrf.mxu0
        %v3347 = vadd.f32 0.0, %v3346
        %3348 = vmatmul.f32.gmra.mxu0 %v3264
        %v3349 = vpop.f32.mrf.mxu0
        %v3350 = vadd.f32 0.0, %v3349
        %3351 = vmatmul.f32.gmra.mxu0 %v3266
        %v3352 = vpop.f32.mrf.mxu0
        %v3353 = vadd.f32 0.0, %v3352
        %3354 = vmatmul.f32.gmra.mxu0 %v3268
        %v3355 = vpop.f32.mrf.mxu0
        %v3356 = vadd.f32 0.0, %v3355
        %3357 = vmatmul.f32.gmra.mxu0 %v3270
        %v3358 = vpop.f32.mrf.mxu0
        %v3359 = vadd.f32 0.0, %v3358
        %3360 = vmatmul.f32.gmra.mxu0 %v3272
        %v3361 = vpop.f32.mrf.mxu0
        %v3362 = vadd.f32 0.0, %v3361
        %3363 = vmatmul.f32.gmra.mxu0 %v3274
        %v3364 = vpop.f32.mrf.mxu0
        %v3365 = vadd.f32 0.0, %v3364
        %3366 = vmatmul.f32.gmra.mxu0 %v3276
        %v3367 = vpop.f32.mrf.mxu0
        %v3368 = vadd.f32 0.0, %v3367
        %3369 = vmatmul.f32.gmra.mxu0 %v3278
        %v3370 = vpop.f32.mrf.mxu0
        %v3371 = vadd.f32 0.0, %v3370
        %3372 = vmatmul.f32.gmra.mxu0 %v3280
        %v3373 = vpop.f32.mrf.mxu0
        %v3374 = vadd.f32 0.0, %v3373
        %3375 = vmatmul.f32.gmra.mxu0 %v3282
        %v3376 = vpop.f32.mrf.mxu0
        %v3377 = vadd.f32 0.0, %v3376
        %3378 = vmatmul.f32.gmra.mxu0 %v3284
        %v3379 = vpop.f32.mrf.mxu0
        %v3380 = vadd.f32 0.0, %v3379
        %3381 = vmatmul.f32.gmra.mxu0 %v3286
        %v3382 = vpop.f32.mrf.mxu0
        %v3383 = vadd.f32 0.0, %v3382
        %3384 = vmatmul.f32.gmra.mxu0 %v3288
        %v3385 = vpop.f32.mrf.mxu0
        %v3386 = vadd.f32 0.0, %v3385
        %3387 = vmatmul.f32.gmra.mxu0 %v3290
        %v3388 = vpop.f32.mrf.mxu0
        %v3389 = vadd.f32 0.0, %v3388
        %3390 = vmatmul.f32.gmra.mxu0 %v3292
        %v3391 = vpop.f32.mrf.mxu0
        %v3392 = vadd.f32 0.0, %v3391
        %3393 = vmatmul.f32.gmra.mxu0 %v3294
        %v3394 = vpop.f32.mrf.mxu0
        %v3395 = vadd.f32 0.0, %v3394
        %3396 = vmatmul.f32.gmra.mxu0 %v3296
        %v3397 = vpop.f32.mrf.mxu0
        %v3398 = vadd.f32 0.0, %v3397
        %3399 = vmatmul.f32.gmra.mxu0 %v3298
        %v3400 = vpop.f32.mrf.mxu0
        %v3401 = vadd.f32 0.0, %v3400
        %3402 = vmatmul.f32.gmra.mxu0 %v3300
        %v3403 = vpop.f32.mrf.mxu0
        %v3404 = vadd.f32 0.0, %v3403
        %3405 = vmatmul.f32.gmra.mxu0 %v3302
        %v3406 = vpop.f32.mrf.mxu0
        %v3407 = vadd.f32 0.0, %v3406
        %3408 = vmatmul.f32.gmra.mxu0 %v3304
        %v3409 = vpop.f32.mrf.mxu0
        %v3410 = vadd.f32 0.0, %v3409
        %3411 = vmatmul.f32.gmra.mxu0 %v3306
        %v3412 = vpop.f32.mrf.mxu0
        %v3413 = vadd.f32 0.0, %v3412
        %3414 = vmatmul.f32.gmra.mxu0 %v3308
        %v3415 = vpop.f32.mrf.mxu0
        %v3416 = vadd.f32 0.0, %v3415
        %3417 = vmatmul.f32.gmra.mxu0 %v3310
        %v3418 = vpop.f32.mrf.mxu0
        %v3419 = vadd.f32 0.0, %v3418
        %3420 = vmatmul.f32.gmra.mxu0 %v3312
        %v3421 = vpop.f32.mrf.mxu0
        %v3422 = vadd.f32 0.0, %v3421
        %3423 = vmatmul.f32.gmra.mxu0 %v3314
        %v3424 = vpop.f32.mrf.mxu0
        %v3425 = vadd.f32 0.0, %v3424
        %3426 = vmatmul.f32.gmra.mxu0 %v3316
        %v3427 = vpop.f32.mrf.mxu0
        %v3428 = vadd.f32 0.0, %v3427
        %3429 = vmatmul.f32.gmra.mxu0 %v3318
        %v3430 = vpop.f32.mrf.mxu0
        %v3431 = vadd.f32 0.0, %v3430
        %3432 = vdwg.mxu0
        %3433 = vmatpush.msra.mxu0 %v2519
        %3434 = vmatpush.msra.mxu0 %v2518
        %3435 = vmatpush.msra.mxu0 %v2517
        %3436 = vmatpush.msra.mxu0 %v2516
        %3437 = vmatpush.msra.mxu0 %v2515
        %3438 = vmatpush.msra.mxu0 %v2514
        %3439 = vmatpush.msra.mxu0 %v2513
        %3440 = vmatpush.msra.mxu0 %v2512
        %3441 = vmatpush.msra.mxu0 %v2511
        %3442 = vmatpush.msra.mxu0 %v2510
        %3443 = vmatpush.msra.mxu0 %v2509
        %3444 = vmatpush.msra.mxu0 %v2508
        %3445 = vmatpush.msra.mxu0 %v2507
        %3446 = vmatpush.msra.mxu0 %v2506
        %3447 = vmatpush.msra.mxu0 %v2505
        %3448 = vmatpush.msra.mxu0 %v2504
        %3449 = vmatmul.f32.gmra.mxu0 %v3257
        %v3450 = vpop.f32.mrf.mxu0
        %v3451 = vadd.f32 %v3338, %v3450
        %3452 = vmatmul.f32.gmra.mxu0 %v3259
        %v3453 = vpop.f32.mrf.mxu0
        %v3454 = vadd.f32 %v3341, %v3453
        %3455 = vmatmul.f32.gmra.mxu0 %v3261
        %v3456 = vpop.f32.mrf.mxu0
        %v3457 = vadd.f32 %v3344, %v3456
        %3458 = vmatmul.f32.gmra.mxu0 %v3263
        %v3459 = vpop.f32.mrf.mxu0
        %v3460 = vadd.f32 %v3347, %v3459
        %3461 = vmatmul.f32.gmra.mxu0 %v3265
        %v3462 = vpop.f32.mrf.mxu0
        %v3463 = vadd.f32 %v3350, %v3462
        %3464 = vmatmul.f32.gmra.mxu0 %v3267
        %v3465 = vpop.f32.mrf.mxu0
        %v3466 = vadd.f32 %v3353, %v3465
        %3467 = vmatmul.f32.gmra.mxu0 %v3269
        %v3468 = vpop.f32.mrf.mxu0
        %v3469 = vadd.f32 %v3356, %v3468
        %3470 = vmatmul.f32.gmra.mxu0 %v3271
        %v3471 = vpop.f32.mrf.mxu0
        %v3472 = vadd.f32 %v3359, %v3471
        %3473 = vmatmul.f32.gmra.mxu0 %v3273
        %v3474 = vpop.f32.mrf.mxu0
        %v3475 = vadd.f32 %v3362, %v3474
        %3476 = vmatmul.f32.gmra.mxu0 %v3275
        %v3477 = vpop.f32.mrf.mxu0
        %v3478 = vadd.f32 %v3365, %v3477
        %3479 = vmatmul.f32.gmra.mxu0 %v3277
        %v3480 = vpop.f32.mrf.mxu0
        %v3481 = vadd.f32 %v3368, %v3480
        %3482 = vmatmul.f32.gmra.mxu0 %v3279
        %v3483 = vpop.f32.mrf.mxu0
        %v3484 = vadd.f32 %v3371, %v3483
        %3485 = vmatmul.f32.gmra.mxu0 %v3281
        %v3486 = vpop.f32.mrf.mxu0
        %v3487 = vadd.f32 %v3374, %v3486
        %3488 = vmatmul.f32.gmra.mxu0 %v3283
        %v3489 = vpop.f32.mrf.mxu0
        %v3490 = vadd.f32 %v3377, %v3489
        %3491 = vmatmul.f32.gmra.mxu0 %v3285
        %v3492 = vpop.f32.mrf.mxu0
        %v3493 = vadd.f32 %v3380, %v3492
        %3494 = vmatmul.f32.gmra.mxu0 %v3287
        %v3495 = vpop.f32.mrf.mxu0
        %v3496 = vadd.f32 %v3383, %v3495
        %3497 = vmatmul.f32.gmra.mxu0 %v3289
        %v3498 = vpop.f32.mrf.mxu0
        %v3499 = vadd.f32 %v3386, %v3498
        %3500 = vmatmul.f32.gmra.mxu0 %v3291
        %v3501 = vpop.f32.mrf.mxu0
        %v3502 = vadd.f32 %v3389, %v3501
        %3503 = vmatmul.f32.gmra.mxu0 %v3293
        %v3504 = vpop.f32.mrf.mxu0
        %v3505 = vadd.f32 %v3392, %v3504
        %3506 = vmatmul.f32.gmra.mxu0 %v3295
        %v3507 = vpop.f32.mrf.mxu0
        %v3508 = vadd.f32 %v3395, %v3507
        %3509 = vmatmul.f32.gmra.mxu0 %v3297
        %v3510 = vpop.f32.mrf.mxu0
        %v3511 = vadd.f32 %v3398, %v3510
        %3512 = vmatmul.f32.gmra.mxu0 %v3299
        %v3513 = vpop.f32.mrf.mxu0
        %v3514 = vadd.f32 %v3401, %v3513
        %3515 = vmatmul.f32.gmra.mxu0 %v3301
        %v3516 = vpop.f32.mrf.mxu0
        %v3517 = vadd.f32 %v3404, %v3516
        %3518 = vmatmul.f32.gmra.mxu0 %v3303
        %v3519 = vpop.f32.mrf.mxu0
        %v3520 = vadd.f32 %v3407, %v3519
        %3521 = vmatmul.f32.gmra.mxu0 %v3305
        %v3522 = vpop.f32.mrf.mxu0
        %v3523 = vadd.f32 %v3410, %v3522
        %3524 = vmatmul.f32.gmra.mxu0 %v3307
        %v3525 = vpop.f32.mrf.mxu0
        %v3526 = vadd.f32 %v3413, %v3525
        %3527 = vmatmul.f32.gmra.mxu0 %v3309
        %v3528 = vpop.f32.mrf.mxu0
        %v3529 = vadd.f32 %v3416, %v3528
        %3530 = vmatmul.f32.gmra.mxu0 %v3311
        %v3531 = vpop.f32.mrf.mxu0
        %v3532 = vadd.f32 %v3419, %v3531
        %3533 = vmatmul.f32.gmra.mxu0 %v3313
        %v3534 = vpop.f32.mrf.mxu0
        %v3535 = vadd.f32 %v3422, %v3534
        %3536 = vmatmul.f32.gmra.mxu0 %v3315
        %v3537 = vpop.f32.mrf.mxu0
        %v3538 = vadd.f32 %v3425, %v3537
        %3539 = vmatmul.f32.gmra.mxu0 %v3317
        %v3540 = vpop.f32.mrf.mxu0
        %v3541 = vadd.f32 %v3428, %v3540
        %3542 = vmatmul.f32.gmra.mxu0 %v3319
        %v3543 = vpop.f32.mrf.mxu0
        %v3544 = vadd.f32 %v3431, %v3543
        %3545 = vdwg.mxu0
        %v3546 = vmul.f32 %v3451, 1.4216424
        %v3547 = vmul.f32 %v3454, 1.4216424
        %v3548 = vmul.f32 %v3457, 1.4216424
        %v3549 = vmul.f32 %v3460, 1.4216424
        %v3550 = vmul.f32 %v3463, 1.4216424
        %v3551 = vmul.f32 %v3466, 1.4216424
        %v3552 = vmul.f32 %v3469, 1.4216424
        %v3553 = vmul.f32 %v3472, 1.4216424
        %v3554 = vmul.f32 %v3475, 1.4216424
        %v3555 = vmul.f32 %v3478, 1.4216424
        %v3556 = vmul.f32 %v3481, 1.4216424
        %v3557 = vmul.f32 %v3484, 1.4216424
        %v3558 = vmul.f32 %v3487, 1.4216424
        %v3559 = vmul.f32 %v3490, 1.4216424
        %v3560 = vmul.f32 %v3493, 1.4216424
        %v3561 = vmul.f32 %v3496, 1.4216424
        %v3562 = vmul.f32 %v3499, 1.4216424
        %v3563 = vmul.f32 %v3502, 1.4216424
        %v3564 = vmul.f32 %v3505, 1.4216424
        %v3565 = vmul.f32 %v3508, 1.4216424
        %v3566 = vmul.f32 %v3511, 1.4216424
        %v3567 = vmul.f32 %v3514, 1.4216424
        %v3568 = vmul.f32 %v3517, 1.4216424
        %v3569 = vmul.f32 %v3520, 1.4216424
        %v3570 = vmul.f32 %v3523, 1.4216424
        %v3571 = vmul.f32 %v3526, 1.4216424
        %v3572 = vmul.f32 %v3529, 1.4216424
        %v3573 = vmul.f32 %v3532, 1.4216424
        %v3574 = vmul.f32 %v3535, 1.4216424
        %v3575 = vmul.f32 %v3538, 1.4216424
        %v3576 = vmul.f32 %v3541, 1.4216424
        %v3577 = vmul.f32 %v3544, 1.4216424
        %v3578 = vmul.f32 %v2488, -0.0
        %v3579 = vmul.f32 %v2489, -0.0
        %v3580 = vmul.f32 %v2490, -0.0
        %v3581 = vmul.f32 %v2491, -0.0
        %v3582 = vmul.f32 %v2492, -0.0
        %v3583 = vmul.f32 %v2493, -0.0
        %v3584 = vmul.f32 %v2494, -0.0
        %v3585 = vmul.f32 %v2495, -0.0
        %v3586 = vmul.f32 %v2496, -0.0
        %v3587 = vmul.f32 %v2497, -0.0
        %v3588 = vmul.f32 %v2498, -0.0
        %v3589 = vmul.f32 %v2499, -0.0
        %v3590 = vmul.f32 %v2500, -0.0
        %v3591 = vmul.f32 %v2501, -0.0
        %v3592 = vmul.f32 %v2502, -0.0
        %v3593 = vmul.f32 %v2503, -0.0
        %v3594 = vmul.f32 %v2504, -0.0
        %v3595 = vmul.f32 %v2505, -0.0
        %v3596 = vmul.f32 %v2506, -0.0
        %v3597 = vmul.f32 %v2507, -0.0
        %v3598 = vmul.f32 %v2508, -0.0
        %v3599 = vmul.f32 %v2509, -0.0
        %v3600 = vmul.f32 %v2510, -0.0
        %v3601 = vmul.f32 %v2511, -0.0
        %v3602 = vmul.f32 %v2512, -0.0
        %v3603 = vmul.f32 %v2513, -0.0
        %v3604 = vmul.f32 %v2514, -0.0
        %v3605 = vmul.f32 %v2515, -0.0
        %v3606 = vmul.f32 %v2516, -0.0
        %v3607 = vmul.f32 %v2517, -0.0
        %v3608 = vmul.f32 %v2518, -0.0
        %v3609 = vmul.f32 %v2519, -0.0
        %v3610 = vadd.f32 %v3546, %v3578
        %v3611 = vadd.f32 %v3547, %v3579
        %v3612 = vadd.f32 %v3548, %v3580
        %v3613 = vadd.f32 %v3549, %v3581
        %v3614 = vadd.f32 %v3550, %v3582
        %v3615 = vadd.f32 %v3551, %v3583
        %v3616 = vadd.f32 %v3552, %v3584
        %v3617 = vadd.f32 %v3553, %v3585
        %v3618 = vadd.f32 %v3554, %v3586
        %v3619 = vadd.f32 %v3555, %v3587
        %v3620 = vadd.f32 %v3556, %v3588
        %v3621 = vadd.f32 %v3557, %v3589
        %v3622 = vadd.f32 %v3558, %v3590
        %v3623 = vadd.f32 %v3559, %v3591
        %v3624 = vadd.f32 %v3560, %v3592
        %v3625 = vadd.f32 %v3561, %v3593
        %v3626 = vadd.f32 %v3562, %v3594
        %v3627 = vadd.f32 %v3563, %v3595
        %v3628 = vadd.f32 %v3564, %v3596
        %v3629 = vadd.f32 %v3565, %v3597
        %v3630 = vadd.f32 %v3566, %v3598
        %v3631 = vadd.f32 %v3567, %v3599
        %v3632 = vadd.f32 %v3568, %v3600
        %v3633 = vadd.f32 %v3569, %v3601
        %v3634 = vadd.f32 %v3570, %v3602
        %v3635 = vadd.f32 %v3571, %v3603
        %v3636 = vadd.f32 %v3572, %v3604
        %v3637 = vadd.f32 %v3573, %v3605
        %v3638 = vadd.f32 %v3574, %v3606
        %v3639 = vadd.f32 %v3575, %v3607
        %v3640 = vadd.f32 %v3576, %v3608
        %v3641 = vadd.f32 %v3577, %v3609
        %v3642 = vmul.f32 %v1302, -0.46402052
        %v3643 = vmul.f32 %v1303, -0.46402052
        %v3644 = vmul.f32 %v1304, -0.46402052
        %v3645 = vmul.f32 %v1305, -0.46402052
        %v3646 = vmul.f32 %v1306, -0.46402052
        %v3647 = vmul.f32 %v1307, -0.46402052
        %v3648 = vmul.f32 %v1308, -0.46402052
        %v3649 = vmul.f32 %v1309, -0.46402052
        %v3650 = vmul.f32 %v1310, -0.46402052
        %v3651 = vmul.f32 %v1311, -0.46402052
        %v3652 = vmul.f32 %v1312, -0.46402052
        %v3653 = vmul.f32 %v1313, -0.46402052
        %v3654 = vmul.f32 %v1314, -0.46402052
        %v3655 = vmul.f32 %v1315, -0.46402052
        %v3656 = vmul.f32 %v1316, -0.46402052
        %v3657 = vmul.f32 %v1317, -0.46402052
        %v3658 = vmul.f32 %v1318, -0.46402052
        %v3659 = vmul.f32 %v1319, -0.46402052
        %v3660 = vmul.f32 %v1320, -0.46402052
        %v3661 = vmul.f32 %v1321, -0.46402052
        %v3662 = vmul.f32 %v1322, -0.46402052
        %v3663 = vmul.f32 %v1323, -0.46402052
        %v3664 = vmul.f32 %v1324, -0.46402052
        %v3665 = vmul.f32 %v1325, -0.46402052
        %v3666 = vmul.f32 %v1326, -0.46402052
        %v3667 = vmul.f32 %v1327, -0.46402052
        %v3668 = vmul.f32 %v1328, -0.46402052
        %v3669 = vmul.f32 %v1329, -0.46402052
        %v3670 = vmul.f32 %v1330, -0.46402052
        %v3671 = vmul.f32 %v1331, -0.46402052
        %v3672 = vmul.f32 %v1332, -0.46402052
        %v3673 = vmul.f32 %v1333, -0.46402052
        %v3674 = vadd.f32 %v3610, %v3642
        %v3675 = vadd.f32 %v3611, %v3643
        %v3676 = vadd.f32 %v3612, %v3644
        %v3677 = vadd.f32 %v3613, %v3645
        %v3678 = vadd.f32 %v3614, %v3646
        %v3679 = vadd.f32 %v3615, %v3647
        %v3680 = vadd.f32 %v3616, %v3648
        %v3681 = vadd.f32 %v3617, %v3649
        %v3682 = vadd.f32 %v3618, %v3650
        %v3683 = vadd.f32 %v3619, %v3651
        %v3684 = vadd.f32 %v3620, %v3652
        %v3685 = vadd.f32 %v3621, %v3653
        %v3686 = vadd.f32 %v3622, %v3654
        %v3687 = vadd.f32 %v3623, %v3655
        %v3688 = vadd.f32 %v3624, %v3656
        %v3689 = vadd.f32 %v3625, %v3657
        %v3690 = vadd.f32 %v3626, %v3658
        %v3691 = vadd.f32 %v3627, %v3659
        %v3692 = vadd.f32 %v3628, %v3660
        %v3693 = vadd.f32 %v3629, %v3661
        %v3694 = vadd.f32 %v3630, %v3662
        %v3695 = vadd.f32 %v3631, %v3663
        %v3696 = vadd.f32 %v3632, %v3664
        %v3697 = vadd.f32 %v3633, %v3665
        %v3698 = vadd.f32 %v3634, %v3666
        %v3699 = vadd.f32 %v3635, %v3667
        %v3700 = vadd.f32 %v3636, %v3668
        %v3701 = vadd.f32 %v3637, %v3669
        %v3702 = vadd.f32 %v3638, %v3670
        %v3703 = vadd.f32 %v3639, %v3671
        %v3704 = vadd.f32 %v3640, %v3672
        %v3705 = vadd.f32 %v3641, %v3673
        %v3738 = vrot.slane %v3674, 1
        %v3739 = vrot.slane %v3674, 2
        %v3740 = vrot.slane %v3674, 3
        %v3741 = vrot.slane %v3674, 4
        %v3742 = vrot.slane %v3674, 5
        %v3743 = vrot.slane %v3674, 6
        %v3744 = vrot.slane %v3674, 7
        %v3745 = vrot.slane %v3675, 1
        %v3746 = vrot.slane %v3675, 2
        %v3747 = vrot.slane %v3675, 3
        %v3748 = vrot.slane %v3675, 4
        %v3749 = vrot.slane %v3675, 5
        %v3750 = vrot.slane %v3675, 6
        %v3751 = vrot.slane %v3675, 7
        %v3752 = vrot.slane %v3676, 1
        %v3753 = vrot.slane %v3676, 2
        %v3754 = vrot.slane %v3676, 3
        %v3755 = vrot.slane %v3676, 4
        %v3756 = vrot.slane %v3676, 5
        %v3757 = vrot.slane %v3676, 6
        %v3758 = vrot.slane %v3676, 7
        %v3759 = vrot.slane %v3677, 1
        %v3760 = vrot.slane %v3677, 2
        %v3761 = vrot.slane %v3677, 3
        %v3762 = vrot.slane %v3677, 4
        %v3763 = vrot.slane %v3677, 5
        %v3764 = vrot.slane %v3677, 6
        %v3765 = vrot.slane %v3677, 7
        %v3766 = vrot.slane %v3678, 1
        %v3767 = vrot.slane %v3678, 2
        %v3768 = vrot.slane %v3678, 3
        %v3769 = vrot.slane %v3678, 4
        %v3770 = vrot.slane %v3678, 5
        %v3771 = vrot.slane %v3678, 6
        %v3772 = vrot.slane %v3678, 7
        %v3773 = vrot.slane %v3679, 1
        %v3774 = vrot.slane %v3679, 2
        %v3775 = vrot.slane %v3679, 3
        %v3776 = vrot.slane %v3679, 4
        %v3777 = vrot.slane %v3679, 5
        %v3778 = vrot.slane %v3679, 6
        %v3779 = vrot.slane %v3679, 7
        %v3780 = vrot.slane %v3680, 1
        %v3781 = vrot.slane %v3680, 2
        %v3782 = vrot.slane %v3680, 3
        %v3783 = vrot.slane %v3680, 4
        %v3784 = vrot.slane %v3680, 5
        %v3785 = vrot.slane %v3680, 6
        %v3786 = vrot.slane %v3680, 7
        %v3787 = vrot.slane %v3681, 1
        %v3788 = vrot.slane %v3681, 2
        %v3789 = vrot.slane %v3681, 3
        %v3790 = vrot.slane %v3681, 4
        %v3791 = vrot.slane %v3681, 5
        %v3792 = vrot.slane %v3681, 6
        %v3793 = vrot.slane %v3681, 7
        %v3794 = vrot.slane %v3682, 1
        %v3795 = vrot.slane %v3682, 2
        %v3796 = vrot.slane %v3682, 3
        %v3797 = vrot.slane %v3682, 4
        %v3798 = vrot.slane %v3682, 5
        %v3799 = vrot.slane %v3682, 6
        %v3800 = vrot.slane %v3682, 7
        %v3801 = vrot.slane %v3683, 1
        %v3802 = vrot.slane %v3683, 2
        %v3803 = vrot.slane %v3683, 3
        %v3804 = vrot.slane %v3683, 4
        %v3805 = vrot.slane %v3683, 5
        %v3806 = vrot.slane %v3683, 6
        %v3807 = vrot.slane %v3683, 7
        %v3808 = vrot.slane %v3684, 1
        %v3809 = vrot.slane %v3684, 2
        %v3810 = vrot.slane %v3684, 3
        %v3811 = vrot.slane %v3684, 4
        %v3812 = vrot.slane %v3684, 5
        %v3813 = vrot.slane %v3684, 6
        %v3814 = vrot.slane %v3684, 7
        %v3815 = vrot.slane %v3685, 1
        %v3816 = vrot.slane %v3685, 2
        %v3817 = vrot.slane %v3685, 3
        %v3818 = vrot.slane %v3685, 4
        %v3819 = vrot.slane %v3685, 5
        %v3820 = vrot.slane %v3685, 6
        %v3821 = vrot.slane %v3685, 7
        %v3822 = vrot.slane %v3686, 1
        %v3823 = vrot.slane %v3686, 2
        %v3824 = vrot.slane %v3686, 3
        %v3825 = vrot.slane %v3686, 4
        %v3826 = vrot.slane %v3686, 5
        %v3827 = vrot.slane %v3686, 6
        %v3828 = vrot.slane %v3686, 7
        %v3829 = vrot.slane %v3687, 1
        %v3830 = vrot.slane %v3687, 2
        %v3831 = vrot.slane %v3687, 3
        %v3832 = vrot.slane %v3687, 4
        %v3833 = vrot.slane %v3687, 5
        %v3834 = vrot.slane %v3687, 6
        %v3835 = vrot.slane %v3687, 7
        %v3836 = vrot.slane %v3688, 1
        %v3837 = vrot.slane %v3688, 2
        %v3838 = vrot.slane %v3688, 3
        %v3839 = vrot.slane %v3688, 4
        %v3840 = vrot.slane %v3688, 5
        %v3841 = vrot.slane %v3688, 6
        %v3842 = vrot.slane %v3688, 7
        %v3843 = vrot.slane %v3689, 1
        %v3844 = vrot.slane %v3689, 2
        %v3845 = vrot.slane %v3689, 3
        %v3846 = vrot.slane %v3689, 4
        %v3847 = vrot.slane %v3689, 5
        %v3848 = vrot.slane %v3689, 6
        %v3849 = vrot.slane %v3689, 7
        %v3850 = vrot.slane %v3690, 1
        %v3851 = vrot.slane %v3690, 2
        %v3852 = vrot.slane %v3690, 3
        %v3853 = vrot.slane %v3690, 4
        %v3854 = vrot.slane %v3690, 5
        %v3855 = vrot.slane %v3690, 6
        %v3856 = vrot.slane %v3690, 7
        %v3857 = vrot.slane %v3691, 1
        %v3858 = vrot.slane %v3691, 2
        %v3859 = vrot.slane %v3691, 3
        %v3860 = vrot.slane %v3691, 4
        %v3861 = vrot.slane %v3691, 5
        %v3862 = vrot.slane %v3691, 6
        %v3863 = vrot.slane %v3691, 7
        %v3864 = vrot.slane %v3692, 1
        %v3865 = vrot.slane %v3692, 2
        %v3866 = vrot.slane %v3692, 3
        %v3867 = vrot.slane %v3692, 4
        %v3868 = vrot.slane %v3692, 5
        %v3869 = vrot.slane %v3692, 6
        %v3870 = vrot.slane %v3692, 7
        %v3871 = vrot.slane %v3693, 1
        %v3872 = vrot.slane %v3693, 2
        %v3873 = vrot.slane %v3693, 3
        %v3874 = vrot.slane %v3693, 4
        %v3875 = vrot.slane %v3693, 5
        %v3876 = vrot.slane %v3693, 6
        %v3877 = vrot.slane %v3693, 7
        %v3878 = vrot.slane %v3694, 1
        %v3879 = vrot.slane %v3694, 2
        %v3880 = vrot.slane %v3694, 3
        %v3881 = vrot.slane %v3694, 4
        %v3882 = vrot.slane %v3694, 5
        %v3883 = vrot.slane %v3694, 6
        %v3884 = vrot.slane %v3694, 7
        %v3885 = vrot.slane %v3695, 1
        %v3886 = vrot.slane %v3695, 2
        %v3887 = vrot.slane %v3695, 3
        %v3888 = vrot.slane %v3695, 4
        %v3889 = vrot.slane %v3695, 5
        %v3890 = vrot.slane %v3695, 6
        %v3891 = vrot.slane %v3695, 7
        %v3892 = vrot.slane %v3696, 1
        %v3893 = vrot.slane %v3696, 2
        %v3894 = vrot.slane %v3696, 3
        %v3895 = vrot.slane %v3696, 4
        %v3896 = vrot.slane %v3696, 5
        %v3897 = vrot.slane %v3696, 6
        %v3898 = vrot.slane %v3696, 7
        %v3899 = vrot.slane %v3697, 1
        %v3900 = vrot.slane %v3697, 2
        %v3901 = vrot.slane %v3697, 3
        %v3902 = vrot.slane %v3697, 4
        %v3903 = vrot.slane %v3697, 5
        %v3904 = vrot.slane %v3697, 6
        %v3905 = vrot.slane %v3697, 7
        %v3906 = vrot.slane %v3698, 1
        %v3907 = vrot.slane %v3698, 2
        %v3908 = vrot.slane %v3698, 3
        %v3909 = vrot.slane %v3698, 4
        %v3910 = vrot.slane %v3698, 5
        %v3911 = vrot.slane %v3698, 6
        %v3912 = vrot.slane %v3698, 7
        %v3913 = vrot.slane %v3699, 1
        %v3914 = vrot.slane %v3699, 2
        %v3915 = vrot.slane %v3699, 3
        %v3916 = vrot.slane %v3699, 4
        %v3917 = vrot.slane %v3699, 5
        %v3918 = vrot.slane %v3699, 6
        %v3919 = vrot.slane %v3699, 7
        %v3920 = vrot.slane %v3700, 1
        %v3921 = vrot.slane %v3700, 2
        %v3922 = vrot.slane %v3700, 3
        %v3923 = vrot.slane %v3700, 4
        %v3924 = vrot.slane %v3700, 5
        %v3925 = vrot.slane %v3700, 6
        %v3926 = vrot.slane %v3700, 7
        %v3927 = vrot.slane %v3701, 1
        %v3928 = vrot.slane %v3701, 2
        %v3929 = vrot.slane %v3701, 3
        %v3930 = vrot.slane %v3701, 4
        %v3931 = vrot.slane %v3701, 5
        %v3932 = vrot.slane %v3701, 6
        %v3933 = vrot.slane %v3701, 7
        %v3934 = vrot.slane %v3702, 1
        %v3935 = vrot.slane %v3702, 2
        %v3936 = vrot.slane %v3702, 3
        %v3937 = vrot.slane %v3702, 4
        %v3938 = vrot.slane %v3702, 5
        %v3939 = vrot.slane %v3702, 6
        %v3940 = vrot.slane %v3702, 7
        %v3941 = vrot.slane %v3703, 1
        %v3942 = vrot.slane %v3703, 2
        %v3943 = vrot.slane %v3703, 3
        %v3944 = vrot.slane %v3703, 4
        %v3945 = vrot.slane %v3703, 5
        %v3946 = vrot.slane %v3703, 6
        %v3947 = vrot.slane %v3703, 7
        %v3948 = vrot.slane %v3704, 1
        %v3949 = vrot.slane %v3704, 2
        %v3950 = vrot.slane %v3704, 3
        %v3951 = vrot.slane %v3704, 4
        %v3952 = vrot.slane %v3704, 5
        %v3953 = vrot.slane %v3704, 6
        %v3954 = vrot.slane %v3704, 7
        %v3955 = vrot.slane %v3705, 1
        %v3956 = vrot.slane %v3705, 2
        %v3957 = vrot.slane %v3705, 3
        %v3958 = vrot.slane %v3705, 4
        %v3959 = vrot.slane %v3705, 5
        %v3960 = vrot.slane %v3705, 6
        %v3961 = vrot.slane %v3705, 7
        %4186 = vst [vmem:[%s179 + $0x3] sm:$0x1] %v3674
        %4187 = vst [vmem:[%s179 + $0x7] sm:$0x1] %v3738
        %4188 = vst [vmem:[%s179 + $0xb] sm:$0x1] %v3739
        %4189 = vst [vmem:[%s179 + $0xf] sm:$0x1] %v3740
        %4190 = vst [vmem:[%s179 + $0x13] sm:$0x1] %v3741
        %4191 = vst [vmem:[%s179 + $0x17] sm:$0x1] %v3742
        %4192 = vst [vmem:[%s179 + $0x1b] sm:$0x1] %v3743
        %4193 = vst [vmem:[%s179 + $0x1f] sm:$0x1] %v3744
        %4194 = vst [vmem:[%s179 + $0x23] sm:$0x1] %v3675
        %4195 = vst [vmem:[%s179 + $0x27] sm:$0x1] %v3745
        %4196 = vst [vmem:[%s179 + $0x2b] sm:$0x1] %v3746
        %4197 = vst [vmem:[%s179 + $0x2f] sm:$0x1] %v3747
        %4198 = vst [vmem:[%s179 + $0x33] sm:$0x1] %v3748
        %4199 = vst [vmem:[%s179 + $0x37] sm:$0x1] %v3749
        %4200 = vst [vmem:[%s179 + $0x3b] sm:$0x1] %v3750
        %4201 = vst [vmem:[%s179 + $0x3f] sm:$0x1] %v3751
        %4202 = vst [vmem:[%s179 + $0x43] sm:$0x1] %v3676
        %4203 = vst [vmem:[%s179 + $0x47] sm:$0x1] %v3752
        %4204 = vst [vmem:[%s179 + $0x4b] sm:$0x1] %v3753
        %4205 = vst [vmem:[%s179 + $0x4f] sm:$0x1] %v3754
        %4206 = vst [vmem:[%s179 + $0x53] sm:$0x1] %v3755
        %4207 = vst [vmem:[%s179 + $0x57] sm:$0x1] %v3756
        %4208 = vst [vmem:[%s179 + $0x5b] sm:$0x1] %v3757
        %4209 = vst [vmem:[%s179 + $0x5f] sm:$0x1] %v3758
        %4210 = vst [vmem:[%s179 + $0x63] sm:$0x1] %v3677
        %4211 = vst [vmem:[%s179 + $0x67] sm:$0x1] %v3759
        %4212 = vst [vmem:[%s179 + $0x6b] sm:$0x1] %v3760
        %4213 = vst [vmem:[%s179 + $0x6f] sm:$0x1] %v3761
        %4214 = vst [vmem:[%s179 + $0x73] sm:$0x1] %v3762
        %4215 = vst [vmem:[%s179 + $0x77] sm:$0x1] %v3763
        %4216 = vst [vmem:[%s179 + $0x7b] sm:$0x1] %v3764
        %4217 = vst [vmem:[%s179 + $0x7f] sm:$0x1] %v3765
        %4218 = vst [vmem:[%s179 + $0x83] sm:$0x1] %v3678
        %4219 = vst [vmem:[%s179 + $0x87] sm:$0x1] %v3766
        %4220 = vst [vmem:[%s179 + $0x8b] sm:$0x1] %v3767
        %4221 = vst [vmem:[%s179 + $0x8f] sm:$0x1] %v3768
        %4222 = vst [vmem:[%s179 + $0x93] sm:$0x1] %v3769
        %4223 = vst [vmem:[%s179 + $0x97] sm:$0x1] %v3770
        %4224 = vst [vmem:[%s179 + $0x9b] sm:$0x1] %v3771
        %4225 = vst [vmem:[%s179 + $0x9f] sm:$0x1] %v3772
        %4226 = vst [vmem:[%s179 + $0xa3] sm:$0x1] %v3679
        %4227 = vst [vmem:[%s179 + $0xa7] sm:$0x1] %v3773
        %4228 = vst [vmem:[%s179 + $0xab] sm:$0x1] %v3774
        %4229 = vst [vmem:[%s179 + $0xaf] sm:$0x1] %v3775
        %4230 = vst [vmem:[%s179 + $0xb3] sm:$0x1] %v3776
        %4231 = vst [vmem:[%s179 + $0xb7] sm:$0x1] %v3777
        %4232 = vst [vmem:[%s179 + $0xbb] sm:$0x1] %v3778
        %4233 = vst [vmem:[%s179 + $0xbf] sm:$0x1] %v3779
        %4234 = vst [vmem:[%s179 + $0xc3] sm:$0x1] %v3680
        %4235 = vst [vmem:[%s179 + $0xc7] sm:$0x1] %v3780
        %4236 = vst [vmem:[%s179 + $0xcb] sm:$0x1] %v3781
        %4237 = vst [vmem:[%s179 + $0xcf] sm:$0x1] %v3782
        %4238 = vst [vmem:[%s179 + $0xd3] sm:$0x1] %v3783
        %4239 = vst [vmem:[%s179 + $0xd7] sm:$0x1] %v3784
        %4240 = vst [vmem:[%s179 + $0xdb] sm:$0x1] %v3785
        %4241 = vst [vmem:[%s179 + $0xdf] sm:$0x1] %v3786
        %4242 = vst [vmem:[%s179 + $0xe3] sm:$0x1] %v3681
        %4243 = vst [vmem:[%s179 + $0xe7] sm:$0x1] %v3787
        %4244 = vst [vmem:[%s179 + $0xeb] sm:$0x1] %v3788
        %4245 = vst [vmem:[%s179 + $0xef] sm:$0x1] %v3789
        %4246 = vst [vmem:[%s179 + $0xf3] sm:$0x1] %v3790
        %4247 = vst [vmem:[%s179 + $0xf7] sm:$0x1] %v3791
        %4248 = vst [vmem:[%s179 + $0xfb] sm:$0x1] %v3792
        %4249 = vst [vmem:[%s179 + $0xff] sm:$0x1] %v3793
        %4250 = vst [vmem:[%s179 + $0x103] sm:$0x1] %v3682
        %4251 = vst [vmem:[%s179 + $0x107] sm:$0x1] %v3794
        %4252 = vst [vmem:[%s179 + $0x10b] sm:$0x1] %v3795
        %4253 = vst [vmem:[%s179 + $0x10f] sm:$0x1] %v3796
        %4254 = vst [vmem:[%s179 + $0x113] sm:$0x1] %v3797
        %4255 = vst [vmem:[%s179 + $0x117] sm:$0x1] %v3798
        %4256 = vst [vmem:[%s179 + $0x11b] sm:$0x1] %v3799
        %4257 = vst [vmem:[%s179 + $0x11f] sm:$0x1] %v3800
        %4258 = vst [vmem:[%s179 + $0x123] sm:$0x1] %v3683
        %4259 = vst [vmem:[%s179 + $0x127] sm:$0x1] %v3801
        %4260 = vst [vmem:[%s179 + $0x12b] sm:$0x1] %v3802
        %4261 = vst [vmem:[%s179 + $0x12f] sm:$0x1] %v3803
        %4262 = vst [vmem:[%s179 + $0x133] sm:$0x1] %v3804
        %4263 = vst [vmem:[%s179 + $0x137] sm:$0x1] %v3805
        %4264 = vst [vmem:[%s179 + $0x13b] sm:$0x1] %v3806
        %4265 = vst [vmem:[%s179 + $0x13f] sm:$0x1] %v3807
        %4266 = vst [vmem:[%s179 + $0x143] sm:$0x1] %v3684
        %4267 = vst [vmem:[%s179 + $0x147] sm:$0x1] %v3808
        %4268 = vst [vmem:[%s179 + $0x14b] sm:$0x1] %v3809
        %4269 = vst [vmem:[%s179 + $0x14f] sm:$0x1] %v3810
        %4270 = vst [vmem:[%s179 + $0x153] sm:$0x1] %v3811
        %4271 = vst [vmem:[%s179 + $0x157] sm:$0x1] %v3812
        %4272 = vst [vmem:[%s179 + $0x15b] sm:$0x1] %v3813
        %4273 = vst [vmem:[%s179 + $0x15f] sm:$0x1] %v3814
        %4274 = vst [vmem:[%s179 + $0x163] sm:$0x1] %v3685
        %4275 = vst [vmem:[%s179 + $0x167] sm:$0x1] %v3815
        %4276 = vst [vmem:[%s179 + $0x16b] sm:$0x1] %v3816
        %4277 = vst [vmem:[%s179 + $0x16f] sm:$0x1] %v3817
        %4278 = vst [vmem:[%s179 + $0x173] sm:$0x1] %v3818
        %4279 = vst [vmem:[%s179 + $0x177] sm:$0x1] %v3819
        %4280 = vst [vmem:[%s179 + $0x17b] sm:$0x1] %v3820
        %4281 = vst [vmem:[%s179 + $0x17f] sm:$0x1] %v3821
        %4282 = vst [vmem:[%s179 + $0x183] sm:$0x1] %v3686
        %4283 = vst [vmem:[%s179 + $0x187] sm:$0x1] %v3822
        %4284 = vst [vmem:[%s179 + $0x18b] sm:$0x1] %v3823
        %4285 = vst [vmem:[%s179 + $0x18f] sm:$0x1] %v3824
        %4286 = vst [vmem:[%s179 + $0x193] sm:$0x1] %v3825
        %4287 = vst [vmem:[%s179 + $0x197] sm:$0x1] %v3826
        %4288 = vst [vmem:[%s179 + $0x19b] sm:$0x1] %v3827
        %4289 = vst [vmem:[%s179 + $0x19f] sm:$0x1] %v3828
        %4290 = vst [vmem:[%s179 + $0x1a3] sm:$0x1] %v3687
        %4291 = vst [vmem:[%s179 + $0x1a7] sm:$0x1] %v3829
        %4292 = vst [vmem:[%s179 + $0x1ab] sm:$0x1] %v3830
        %4293 = vst [vmem:[%s179 + $0x1af] sm:$0x1] %v3831
        %4294 = vst [vmem:[%s179 + $0x1b3] sm:$0x1] %v3832
        %4295 = vst [vmem:[%s179 + $0x1b7] sm:$0x1] %v3833
        %4296 = vst [vmem:[%s179 + $0x1bb] sm:$0x1] %v3834
        %4297 = vst [vmem:[%s179 + $0x1bf] sm:$0x1] %v3835
        %4298 = vst [vmem:[%s179 + $0x1c3] sm:$0x1] %v3688
        %4299 = vst [vmem:[%s179 + $0x1c7] sm:$0x1] %v3836
        %4300 = vst [vmem:[%s179 + $0x1cb] sm:$0x1] %v3837
        %4301 = vst [vmem:[%s179 + $0x1cf] sm:$0x1] %v3838
        %4302 = vst [vmem:[%s179 + $0x1d3] sm:$0x1] %v3839
        %4303 = vst [vmem:[%s179 + $0x1d7] sm:$0x1] %v3840
        %4304 = vst [vmem:[%s179 + $0x1db] sm:$0x1] %v3841
        %4305 = vst [vmem:[%s179 + $0x1df] sm:$0x1] %v3842
        %4306 = vst [vmem:[%s179 + $0x1e3] sm:$0x1] %v3689
        %4307 = vst [vmem:[%s179 + $0x1e7] sm:$0x1] %v3843
        %4308 = vst [vmem:[%s179 + $0x1eb] sm:$0x1] %v3844
        %4309 = vst [vmem:[%s179 + $0x1ef] sm:$0x1] %v3845
        %4310 = vst [vmem:[%s179 + $0x1f3] sm:$0x1] %v3846
        %4311 = vst [vmem:[%s179 + $0x1f7] sm:$0x1] %v3847
        %4312 = vst [vmem:[%s179 + $0x1fb] sm:$0x1] %v3848
        %4313 = vst [vmem:[%s179 + $0x1ff] sm:$0x1] %v3849
        %4314 = vst [vmem:[%s179 + $0x203] sm:$0x1] %v3690
        %4315 = vst [vmem:[%s179 + $0x207] sm:$0x1] %v3850
        %4316 = vst [vmem:[%s179 + $0x20b] sm:$0x1] %v3851
        %4317 = vst [vmem:[%s179 + $0x20f] sm:$0x1] %v3852
        %4318 = vst [vmem:[%s179 + $0x213] sm:$0x1] %v3853
        %4319 = vst [vmem:[%s179 + $0x217] sm:$0x1] %v3854
        %4320 = vst [vmem:[%s179 + $0x21b] sm:$0x1] %v3855
        %4321 = vst [vmem:[%s179 + $0x21f] sm:$0x1] %v3856
        %4322 = vst [vmem:[%s179 + $0x223] sm:$0x1] %v3691
        %4323 = vst [vmem:[%s179 + $0x227] sm:$0x1] %v3857
        %4324 = vst [vmem:[%s179 + $0x22b] sm:$0x1] %v3858
        %4325 = vst [vmem:[%s179 + $0x22f] sm:$0x1] %v3859
        %4326 = vst [vmem:[%s179 + $0x233] sm:$0x1] %v3860
        %4327 = vst [vmem:[%s179 + $0x237] sm:$0x1] %v3861
        %4328 = vst [vmem:[%s179 + $0x23b] sm:$0x1] %v3862
        %4329 = vst [vmem:[%s179 + $0x23f] sm:$0x1] %v3863
        %4330 = vst [vmem:[%s179 + $0x243] sm:$0x1] %v3692
        %4331 = vst [vmem:[%s179 + $0x247] sm:$0x1] %v3864
        %4332 = vst [vmem:[%s179 + $0x24b] sm:$0x1] %v3865
        %4333 = vst [vmem:[%s179 + $0x24f] sm:$0x1] %v3866
        %4334 = vst [vmem:[%s179 + $0x253] sm:$0x1] %v3867
        %4335 = vst [vmem:[%s179 + $0x257] sm:$0x1] %v3868
        %4336 = vst [vmem:[%s179 + $0x25b] sm:$0x1] %v3869
        %4337 = vst [vmem:[%s179 + $0x25f] sm:$0x1] %v3870
        %4338 = vst [vmem:[%s179 + $0x263] sm:$0x1] %v3693
        %4339 = vst [vmem:[%s179 + $0x267] sm:$0x1] %v3871
        %4340 = vst [vmem:[%s179 + $0x26b] sm:$0x1] %v3872
        %4341 = vst [vmem:[%s179 + $0x26f] sm:$0x1] %v3873
        %4342 = vst [vmem:[%s179 + $0x273] sm:$0x1] %v3874
        %4343 = vst [vmem:[%s179 + $0x277] sm:$0x1] %v3875
        %4344 = vst [vmem:[%s179 + $0x27b] sm:$0x1] %v3876
        %4345 = vst [vmem:[%s179 + $0x27f] sm:$0x1] %v3877
        %4346 = vst [vmem:[%s179 + $0x283] sm:$0x1] %v3694
        %4347 = vst [vmem:[%s179 + $0x287] sm:$0x1] %v3878
        %4348 = vst [vmem:[%s179 + $0x28b] sm:$0x1] %v3879
        %4349 = vst [vmem:[%s179 + $0x28f] sm:$0x1] %v3880
        %4350 = vst [vmem:[%s179 + $0x293] sm:$0x1] %v3881
        %4351 = vst [vmem:[%s179 + $0x297] sm:$0x1] %v3882
        %4352 = vst [vmem:[%s179 + $0x29b] sm:$0x1] %v3883
        %4353 = vst [vmem:[%s179 + $0x29f] sm:$0x1] %v3884
        %4354 = vst [vmem:[%s179 + $0x2a3] sm:$0x1] %v3695
        %4355 = vst [vmem:[%s179 + $0x2a7] sm:$0x1] %v3885
        %4356 = vst [vmem:[%s179 + $0x2ab] sm:$0x1] %v3886
        %4357 = vst [vmem:[%s179 + $0x2af] sm:$0x1] %v3887
        %4358 = vst [vmem:[%s179 + $0x2b3] sm:$0x1] %v3888
        %4359 = vst [vmem:[%s179 + $0x2b7] sm:$0x1] %v3889
        %4360 = vst [vmem:[%s179 + $0x2bb] sm:$0x1] %v3890
        %4361 = vst [vmem:[%s179 + $0x2bf] sm:$0x1] %v3891
        %4362 = vst [vmem:[%s179 + $0x2c3] sm:$0x1] %v3696
        %4363 = vst [vmem:[%s179 + $0x2c7] sm:$0x1] %v3892
        %4364 = vst [vmem:[%s179 + $0x2cb] sm:$0x1] %v3893
        %4365 = vst [vmem:[%s179 + $0x2cf] sm:$0x1] %v3894
        %4366 = vst [vmem:[%s179 + $0x2d3] sm:$0x1] %v3895
        %4367 = vst [vmem:[%s179 + $0x2d7] sm:$0x1] %v3896
        %4368 = vst [vmem:[%s179 + $0x2db] sm:$0x1] %v3897
        %4369 = vst [vmem:[%s179 + $0x2df] sm:$0x1] %v3898
        %4370 = vst [vmem:[%s179 + $0x2e3] sm:$0x1] %v3697
        %4371 = vst [vmem:[%s179 + $0x2e7] sm:$0x1] %v3899
        %4372 = vst [vmem:[%s179 + $0x2eb] sm:$0x1] %v3900
        %4373 = vst [vmem:[%s179 + $0x2ef] sm:$0x1] %v3901
        %4374 = vst [vmem:[%s179 + $0x2f3] sm:$0x1] %v3902
        %4375 = vst [vmem:[%s179 + $0x2f7] sm:$0x1] %v3903
        %4376 = vst [vmem:[%s179 + $0x2fb] sm:$0x1] %v3904
        %4377 = vst [vmem:[%s179 + $0x2ff] sm:$0x1] %v3905
        %4378 = vst [vmem:[%s179 + $0x303] sm:$0x1] %v3698
        %4379 = vst [vmem:[%s179 + $0x307] sm:$0x1] %v3906
        %4380 = vst [vmem:[%s179 + $0x30b] sm:$0x1] %v3907
        %4381 = vst [vmem:[%s179 + $0x30f] sm:$0x1] %v3908
        %4382 = vst [vmem:[%s179 + $0x313] sm:$0x1] %v3909
        %4383 = vst [vmem:[%s179 + $0x317] sm:$0x1] %v3910
        %4384 = vst [vmem:[%s179 + $0x31b] sm:$0x1] %v3911
        %4385 = vst [vmem:[%s179 + $0x31f] sm:$0x1] %v3912
        %4386 = vst [vmem:[%s179 + $0x323] sm:$0x1] %v3699
        %4387 = vst [vmem:[%s179 + $0x327] sm:$0x1] %v3913
        %4388 = vst [vmem:[%s179 + $0x32b] sm:$0x1] %v3914
        %4389 = vst [vmem:[%s179 + $0x32f] sm:$0x1] %v3915
        %4390 = vst [vmem:[%s179 + $0x333] sm:$0x1] %v3916
        %4391 = vst [vmem:[%s179 + $0x337] sm:$0x1] %v3917
        %4392 = vst [vmem:[%s179 + $0x33b] sm:$0x1] %v3918
        %4393 = vst [vmem:[%s179 + $0x33f] sm:$0x1] %v3919
        %4394 = vst [vmem:[%s179 + $0x343] sm:$0x1] %v3700
        %4395 = vst [vmem:[%s179 + $0x347] sm:$0x1] %v3920
        %4396 = vst [vmem:[%s179 + $0x34b] sm:$0x1] %v3921
        %4397 = vst [vmem:[%s179 + $0x34f] sm:$0x1] %v3922
        %4398 = vst [vmem:[%s179 + $0x353] sm:$0x1] %v3923
        %4399 = vst [vmem:[%s179 + $0x357] sm:$0x1] %v3924
        %4400 = vst [vmem:[%s179 + $0x35b] sm:$0x1] %v3925
        %4401 = vst [vmem:[%s179 + $0x35f] sm:$0x1] %v3926
        %4402 = vst [vmem:[%s179 + $0x363] sm:$0x1] %v3701
        %4403 = vst [vmem:[%s179 + $0x367] sm:$0x1] %v3927
        %4404 = vst [vmem:[%s179 + $0x36b] sm:$0x1] %v3928
        %4405 = vst [vmem:[%s179 + $0x36f] sm:$0x1] %v3929
        %4406 = vst [vmem:[%s179 + $0x373] sm:$0x1] %v3930
        %4407 = vst [vmem:[%s179 + $0x377] sm:$0x1] %v3931
        %4408 = vst [vmem:[%s179 + $0x37b] sm:$0x1] %v3932
        %4409 = vst [vmem:[%s179 + $0x37f] sm:$0x1] %v3933
        %4410 = vst [vmem:[%s179 + $0x383] sm:$0x1] %v3702
        %4411 = vst [vmem:[%s179 + $0x387] sm:$0x1] %v3934
        %4412 = vst [vmem:[%s179 + $0x38b] sm:$0x1] %v3935
        %4413 = vst [vmem:[%s179 + $0x38f] sm:$0x1] %v3936
        %4414 = vst [vmem:[%s179 + $0x393] sm:$0x1] %v3937
        %4415 = vst [vmem:[%s179 + $0x397] sm:$0x1] %v3938
        %4416 = vst [vmem:[%s179 + $0x39b] sm:$0x1] %v3939
        %4417 = vst [vmem:[%s179 + $0x39f] sm:$0x1] %v3940
        %4418 = vst [vmem:[%s179 + $0x3a3] sm:$0x1] %v3703
        %4419 = vst [vmem:[%s179 + $0x3a7] sm:$0x1] %v3941
        %4420 = vst [vmem:[%s179 + $0x3ab] sm:$0x1] %v3942
        %4421 = vst [vmem:[%s179 + $0x3af] sm:$0x1] %v3943
        %4422 = vst [vmem:[%s179 + $0x3b3] sm:$0x1] %v3944
        %4423 = vst [vmem:[%s179 + $0x3b7] sm:$0x1] %v3945
        %4424 = vst [vmem:[%s179 + $0x3bb] sm:$0x1] %v3946
        %4425 = vst [vmem:[%s179 + $0x3bf] sm:$0x1] %v3947
        %4426 = vst [vmem:[%s179 + $0x3c3] sm:$0x1] %v3704
        %4427 = vst [vmem:[%s179 + $0x3c7] sm:$0x1] %v3948
        %4428 = vst [vmem:[%s179 + $0x3cb] sm:$0x1] %v3949
        %4429 = vst [vmem:[%s179 + $0x3cf] sm:$0x1] %v3950
        %4430 = vst [vmem:[%s179 + $0x3d3] sm:$0x1] %v3951
        %4431 = vst [vmem:[%s179 + $0x3d7] sm:$0x1] %v3952
        %4432 = vst [vmem:[%s179 + $0x3db] sm:$0x1] %v3953
        %4433 = vst [vmem:[%s179 + $0x3df] sm:$0x1] %v3954
        %4434 = vst [vmem:[%s179 + $0x3e3] sm:$0x1] %v3705
        %4435 = vst [vmem:[%s179 + $0x3e7] sm:$0x1] %v3955
        %4436 = vst [vmem:[%s179 + $0x3eb] sm:$0x1] %v3956
        %4437 = vst [vmem:[%s179 + $0x3ef] sm:$0x1] %v3957
        %4438 = vst [vmem:[%s179 + $0x3f3] sm:$0x1] %v3958
        %4439 = vst [vmem:[%s179 + $0x3f7] sm:$0x1] %v3959
        %4440 = vst [vmem:[%s179 + $0x3fb] sm:$0x1] %v3960
        %4441 = vst [vmem:[%s179 + $0x3ff] sm:$0x1] %v3961
        %s4442 = sand.u32 %s75, 1
        %s4443 = scalar_lea.sflag [#allocation4], %s4442
        %s4444 = sand.u32 %s75, 1
        %s4445 = smul.addr %s4444, 1024
        %s4446 = scalar_lea.vmem [#allocation7], %s4445
        // Predicated region
        $region37: #{tpu_custom_call.1} parent=27 // pred_check
          %p4447 = pneg %p85
        $region38: #{tpu_custom_call.1} parent=27 // pred_check_branch
          %4449 = sbr.rel (%p4447) target = $region40
        $region39: #{tpu_custom_call.1} parent=27 // pred_region
          %4451 = vsyncadd %s4443, 0
          %s4452 = smul.addr %s20, 4
          %s4453 = scalar_lea.hbm %s2, %s4452
          %s4454 = sshll.u32 %s4446, 4
          %s4455 = int_to_ptr.vmem [resolvable:$true] %s4454
          %s4456 = sshll.u32 %s4453, 4
          %s4457 = int_to_ptr.hbm [resolvable:$true] %s4456
          %4462 = dma.vmem_to_hbm [thread:$0]  %s4455, 16384, %s4457, %s4443, 64, 128, 4
        $region40: #{tpu_custom_call.1} parent=27 // pred_fallthru
          _
      $region28: #{tpu_custom_call.1} parent=5 // pred_fallthru
        _
      %p4463 = scmp.le.s32.totalorder 2, %s15
      // Predicated region
      $region41: #{tpu_custom_call.1} parent=5 // pred_check
        %p4464 = pneg %p4463
      $region42: #{tpu_custom_call.1} parent=5 // pred_check_branch
        %4466 = sbr.rel (%p4464) target = $region44
      $region43: #{tpu_custom_call.1} parent=5 // pred_region
        %s4467 = ssub.s32 %s15, 2
        // Predicated region
        $region45: #{tpu_custom_call.1} parent=43 // pred_check
          %p4468 = pneg %p91
        $region46: #{tpu_custom_call.1} parent=43 // pred_check_branch
          %4470 = sbr.rel (%p4468) target = $region48
        $region47: #{tpu_custom_call.1} parent=43 // pred_region
          %s4471 = sand.u32 %s76, 1
          %s4472 = scalar_lea.sflag [#allocation4], %s4471
          %s4473 = sand.u32 %s76, 1
          %s4474 = smul.addr %s4473, 1024
          %s4475 = scalar_lea.vmem [#allocation7], %s4474
          %4477 = dma.done %s4472, 16384
        $region48: #{tpu_custom_call.1} parent=43 // pred_fallthru
          _
      $region44: #{tpu_custom_call.1} parent=5 // pred_fallthru
        _
    $region6: #{tpu_custom_call.1} parent=1 // loop_footer
      %s19 = sadd.s32 1, %s15
    $region7: #{tpu_custom_call.1} parent=1 // loop_footer_branch
      %14 = sbr.rel target = $region3
    $region8: #{tpu_custom_call.1} parent=1 // loop_exit
      _
    %4478 = vsyncpa [#allocation3], 1
    %s4479 = scalar_lea.sflag [#allocation3], 1
    %4480 = vsyncpa %s4479, 1
    %4481 = vsyncpa [#allocation6], 1
    %s4482 = scalar_lea.sflag [#allocation6], 1
    %4483 = vsyncpa %s4482, 1
    %4484 = vsyncpa [#allocation4], 1
    %s4485 = scalar_lea.sflag [#allocation4], 1
    %4486 = vsyncpa %s4485, 1

</llo_original>
